<compile_context>
chip_gen: v7x
topology: tpu7x:2x2x1
jax: 0.10.0
libtpu: 0.0.40
codegen_flags: <defaults>
</compile_context>

<pallas_src>
import functools

import jax
import jax.numpy as jnp
from jax import lax
from jax.experimental import pallas as pl
from jax.experimental.pallas import tpu as pltpu


# ------------------------------ helpers ------------------------------------ #

def _round_up(x, m):
    return -(-x // m) * m


def _pick_row_tile(ho, wo, target_m=256):
    """Row tile so M = tr*wo is MXU-friendly; single block for small images."""
    if ho * wo <= 2 * target_m:
        return ho                       # one row block: no halo recompute at all
    want = max(1, target_m // wo)
    for t in range(min(want, ho), 0, -1):
        if ho % t == 0:
            return t
    return 1


def fold_bn(gamma, beta, mean, var, eps=1e-5):
    scale = gamma / jnp.sqrt(var + eps)
    bias = beta - mean * scale
    return scale.reshape(1, -1), bias.reshape(1, -1)


# ----------------------------- Pallas kernel ------------------------------- #

def _basic_block_kernel(*refs, stride, tr, n_rb, has_proj):
    """Fused BasicBlock: relu( bn2(conv2(relu(bn1(conv1(x))))) + shortcut(x) ).

    refs (in order):
      xp_refs[0..stride-1] : (1, Hq, Wq, stride*Cin_p) bf16 — row-phase-split,
                             spatially padded, channel-padded input image.
      w1, b1, w2, b2       : (9, C, C) bf16 conv taps (BN scale folded) and
                             (1, C) f32 folded BN biases.
      [wsc, bsc]           : projection-shortcut 1x1 weights / bias (if any).
      o_ref                : (1, tr, Wo, Cout_p) bf16 output block.
      hmid_ref             : VMEM scratch (tr+2, Wo+2, Cmid_p) bf16; its border
                             rows/cols are conv2's zero padding.
    """
    xp_refs = refs[:stride]
    w1_ref, b1_ref, w2_ref, b2_ref = refs[stride:stride + 4]
    if has_proj:
        wsc_ref, bsc_ref = refs[stride + 4:stride + 6]
    o_ref, hmid_ref = refs[-2:]

    _, _, wo, cout_p = o_ref.shape
    cin_p = xp_refs[0].shape[3] // stride
    cmid_p = w1_ref.shape[2]

    rb = pl.program_id(1)
    r0 = rb * tr                              # first output row of this block

    # Hoist bias loads / broadcasts out of the unrolled loops.
    b1 = b1_ref[...]
    b2 = b2_ref[...]

    def conv1_rows(hr0, nrows):
        """relu(bn1(conv1(x))) for output rows hr0..hr0+nrows-1 -> (nrows*wo, Cmid_p)."""
        acc = jnp.zeros((nrows * wo, cmid_p), jnp.float32)
        for kh in range(3):
            src = xp_refs[kh % stride]        # static row-phase select
            for kw in range(3):
                lhs = src[0,
                          pl.ds(hr0 + kh // stride, nrows),
                          pl.ds(kw // stride, wo),
                          pl.ds((kw % stride) * cin_p, cin_p)]
                acc = acc + jnp.dot(lhs.reshape(nrows * wo, cin_p),
                                    w1_ref[kh * 3 + kw],
                                    preferred_element_type=jnp.float32)
        return jnp.maximum(acc + b1, 0.0).astype(hmid_ref.dtype)

    # --- zero only the scratch border (conv2's zero padding) -----------------
    zero_col = jnp.zeros((tr + 2, 1, cmid_p), hmid_ref.dtype)
    hmid_ref[:, 0:1, :] = zero_col
    hmid_ref[:, wo + 1:wo + 2, :] = zero_col
    zero_row = jnp.zeros((wo, cmid_p), hmid_ref.dtype)
    if n_rb == 1:
        hmid_ref[0, 1:1 + wo, :] = zero_row
        hmid_ref[tr + 1, 1:1 + wo, :] = zero_row
    else:
        @pl.when(rb == 0)
        def _():
            hmid_ref[0, 1:1 + wo, :] = zero_row

        @pl.when(rb > 0)
        def _():
            hmid_ref[0, 1:1 + wo, :] = conv1_rows(r0 - 1, 1).reshape(wo, cmid_p)

        @pl.when(rb == n_rb - 1)
        def _():
            hmid_ref[tr + 1, 1:1 + wo, :] = zero_row

        @pl.when(rb < n_rb - 1)
        def _():
            hmid_ref[tr + 1, 1:1 + wo, :] = conv1_rows(r0 + tr, 1).reshape(wo, cmid_p)

    # --- conv1 interior: one M = tr*wo batched matmul set --------------------
    hmid_ref[1:1 + tr, 1:1 + wo, :] = conv1_rows(r0, tr).reshape(tr, wo, cmid_p)

    # --- conv2 + shortcut + relu, batched over the whole row block -----------
    acc = jnp.zeros((tr * wo, cout_p), jnp.float32)
    for kh in range(3):
        for kw in range(3):
            lhs = hmid_ref[pl.ds(kh, tr), pl.ds(kw, wo), :]
            acc = acc + jnp.dot(lhs.reshape(tr * wo, cmid_p),
                                w2_ref[kh * 3 + kw],
                                preferred_element_type=jnp.float32)
    y = acc + b2

    # Shortcut read straight from the resident padded input (no extra HBM pass):
    # x[hr, j] lives at padded (hr*s+1, j*s+1)  ->  phase (1 % s), offsets below.
    xs = xp_refs[1 % stride][0,
                             pl.ds(r0 + 1 // stride, tr),
                             pl.ds(1 // stride, wo),
                             pl.ds((1 % stride) * cin_p, cin_p)]
    xs = xs.reshape(tr * wo, cin_p)
    if has_proj:
        y = y + jnp.dot(xs, wsc_ref[...],
                        preferred_element_type=jnp.float32) + bsc_ref[...]
    else:
        y = y + xs.astype(jnp.float32)        # identity shortcut: no matmul

    o_ref[...] = jnp.maximum(y, 0.0).reshape(1, tr, wo, cout_p).astype(o_ref.dtype)


def _fused_block_call(xps, w1, b1, w2, b2, wsc, bsc, *,
                      stride, tr, ho, wo, has_proj):
    n, hq, wq, lane_in = xps[0].shape
    cin_p = lane_in // stride
    cmid_p = w1.shape[2]
    cout_p = w2.shape[2]
    n_rb = ho // tr

    kern = functools.partial(_basic_block_kernel, stride=stride, tr=tr,
                             n_rb=n_rb, has_proj=has_proj)

    in_specs = [pl.BlockSpec((1, hq, wq, lane_in), lambda b, r: (b, 0, 0, 0))
                for _ in range(stride)]
    inputs = list(xps)
    in_specs += [
        pl.BlockSpec((9, cin_p, cmid_p), lambda b, r: (0, 0, 0)),
        pl.BlockSpec((1, cmid_p), lambda b, r: (0, 0)),
        pl.BlockSpec((9, cmid_p, cout_p), lambda b, r: (0, 0, 0)),
        pl.BlockSpec((1, cout_p), lambda b, r: (0, 0)),
    ]
    inputs += [w1, b1, w2, b2]
    if has_proj:
        in_specs += [pl.BlockSpec((cin_p, cout_p), lambda b, r: (0, 0)),
                     pl.BlockSpec((1, cout_p), lambda b, r: (0, 0))]
        inputs += [wsc, bsc]

    # Advisory cost estimate so XLA schedules surrounding ops sensibly.
    flops_per_pos = 2 * 9 * cin_p * cmid_p + 2 * 9 * cmid_p * cout_p
    if has_proj:
        flops_per_pos += 2 * cin_p * cout_p
    flops = n * ho * wo * flops_per_pos
    bytes_accessed = sum(int(a.size) * a.dtype.itemsize for a in inputs)
    bytes_accessed += n * ho * wo * cout_p * 2

    # Per-step VMEM footprint estimate; raise the scoped limit only if needed.
    block_bytes = 2 * stride * hq * wq * lane_in * 2          # inputs (dbl-buffered)
    block_bytes += 2 * (w1.size + w2.size) * 2                # weights
    block_bytes += 2 * tr * wo * cout_p * 2                   # output block
    block_bytes += (tr + 2) * (wo + 2) * cmid_p * 2           # scratch
    ckw = dict(dimension_semantics=("parallel", "parallel"))
    if block_bytes > 12 * 1024 * 1024:
        ckw["vmem_limit_bytes"] = min(int(block_bytes * 2), 64 * 1024 * 1024)

    return pl.pallas_call(
        kern,
        out_shape=jax.ShapeDtypeStruct((n, ho, wo, cout_p), jnp.bfloat16),
        grid=(n, n_rb),
        in_specs=in_specs,
        out_specs=pl.BlockSpec((1, tr, wo, cout_p), lambda b, r: (b, r, 0, 0)),
        scratch_shapes=[pltpu.VMEM((tr + 2, wo + 2, cmid_p), jnp.bfloat16)],
        compiler_params=pltpu.CompilerParams(**ckw),
        cost_estimate=pl.CostEstimate(flops=flops, transcendentals=0,
                                      bytes_accessed=bytes_accessed),
    )(*inputs)


# ------------------------------ JAX wrapper --------------------------------- #

def basic_block_forward(x_nchw, params, stride):
    """Pallas-backed BasicBlock forward. Input/output NCHW (PyTorch convention)."""
    n, cin, h, w = x_nchw.shape
    cout = params["w1"].shape[-1]
    cin_p = _round_up(cin, 128)
    cout_p = _round_up(cout, 128)
    has_proj = params.get("wsc") is not None

    ho = (h - 1) // stride + 1
    wo = (w - 1) // stride + 1

    x = jnp.transpose(x_nchw, (0, 2, 3, 1)).astype(jnp.float32)      # NHWC

    # Spatial pad (+1), channel pad, polyphase split of cols (into lanes) and
    # rows (into `stride` separate inputs).  bf16 for MXU operands.
    hp, wp = h + 2, w + 2
    hq = -(-hp // stride)
    wq = -(-wp // stride)
    xpad = jnp.pad(x, ((0, 0), (1, 1 + hq * stride - hp),
                       (1, 1 + wq * stride - wp), (0, cin_p - cin)))
    xpad = xpad.reshape(n, hq * stride, wq, stride * cin_p).astype(jnp.bfloat16)
    xps = [xpad[:, p::stride, :, :] for p in range(stride)]          # row phases

    # Fold eval-mode BN into weights (scale) + f32 bias; pad channels; bf16.
    s1, b1v = fold_bn(*params["bn1"])
    s2, b2v = fold_bn(*params["bn2"])
    w1 = params["w1"] * s1.reshape(1, 1, 1, cout)
    w1 = jnp.pad(w1, ((0, 0), (0, 0), (0, cin_p - cin), (0, cout_p - cout)))
    w1 = w1.reshape(9, cin_p, cout_p).astype(jnp.bfloat16)
    w2 = params["w2"] * s2.reshape(1, 1, 1, cout)
    w2 = jnp.pad(w2, ((0, 0), (0, 0), (0, cout_p - cout), (0, cout_p - cout)))
    w2 = w2.reshape(9, cout_p, cout_p).astype(jnp.bfloat16)
    b1v = jnp.pad(b1v, ((0, 0), (0, cout_p - cout)))
    b2v = jnp.pad(b2v, ((0, 0), (0, cout_p - cout)))

    if has_proj:
        ssc, bscv = fold_bn(*params["bnsc"])
        wsc = params["wsc"] * ssc
        wsc = jnp.pad(wsc, ((0, cin_p - cin), (0, cout_p - cout)))
        wsc = wsc.astype(jnp.bfloat16)
        bscv = jnp.pad(bscv, ((0, 0), (0, cout_p - cout)))
    else:
        wsc = bscv = None

    tr = _pick_row_tile(ho, wo)
    out = _fused_block_call(xps, w1, b1v, w2, b2v, wsc, bscv,
                            stride=stride, tr=tr, ho=ho, wo=wo,
                            has_proj=has_proj)
    out = out[:, :, :, :cout].astype(jnp.float32)
    return jnp.transpose(out, (0, 3, 1, 2))                          # back to NCHW


# --------------------------- pure-JAX reference ----------------------------- #

def _conv_ref(x_nchw, w_hwio, stride, padding):
    return lax.conv_general_dilated(
        x_nchw, w_hwio, (stride, stride), [(padding, padding)] * 2,
        dimension_numbers=("NCHW", "HWIO", "NCHW"))


def _bn_ref(x, gamma, beta, mean, var, eps=1e-5):
    g = gamma[None, :, None, None]
    b = beta[None, :, None, None]
    m = mean[None, :, None, None]
    v = var[None, :, None, None]
    return (x - m) / jnp.sqrt(v + eps) * g + b


def reference_forward(x_nchw, params, stride):
    cin = params["w1"].shape[2]
    cout = params["w1"].shape[3]
    h = _conv_ref(x_nchw, params["w1"], stride, 1)
    h = jnp.maximum(_bn_ref(h, *params["bn1"]), 0.0)
    h = _conv_ref(h, params["w2"], 1, 1)
    h = _bn_ref(h, *params["bn2"])
    if params.get("wsc") is not None:
        sc = _conv_ref(x_nchw, params["wsc"].reshape(1, 1, cin, cout), stride, 0)
        sc = _bn_ref(sc, *params["bnsc"])
    else:
        sc = x_nchw
    return jnp.maximum(h + sc, 0.0)


# ------------------------------- main --------------------------------------- #

def init_params(key, in_ch, out_ch, stride):
    ks = jax.random.split(key, 16)

    def bn(k0, k1, k2, k3, c):
        return (jax.random.normal(k0, (c,), jnp.float32) * 0.1 + 1.0,   # gamma
                jax.random.normal(k1, (c,), jnp.float32) * 0.1,          # beta
                jax.random.normal(k2, (c,), jnp.float32) * 0.1,          # running_mean
                jax.random.uniform(k3, (c,), jnp.float32, 0.5, 1.5))     # running_var

    params = {
        "w1": jax.random.normal(ks[0], (3, 3, in_ch, out_ch), jnp.float32) * 0.1,
        "bn1": bn(ks[1], ks[2], ks[3], ks[4], out_ch),
        "w2": jax.random.normal(ks[5], (3, 3, out_ch, out_ch), jnp.float32) * 0.1,
        "bn2": bn(ks[6], ks[7], ks[8], ks[9], out_ch),
    }
    if stride != 1 or in_ch != out_ch:
        params["wsc"] = jax.random.normal(ks[10], (in_ch, out_ch), jnp.float32) * 0.1
        params["bnsc"] = bn(ks[11], ks[12], ks[13], ks[14], out_ch)
    else:
        params["wsc"] = None
    return params


def _run_case(key, n, in_ch, out_ch, h, w, stride):
    kx, kp = jax.random.split(key)
    x = jax.random.normal(kx, (n, in_ch, h, w), jnp.float32)
    params = init_params(kp, in_ch, out_ch, stride)

    out = jax.block_until_ready(basic_block_forward(x, params, stride))
    ref = reference_forward(x, params, stride)
    err = jnp.max(jnp.abs(out - ref))
    # bf16 matmul operands + bf16 output => compare against f32 reference loosely.
    if not jnp.allclose(out, ref, rtol=5e-2, atol=5e-2):
        raise AssertionError(
            f"mismatch vs reference (stride={stride}): max abs err {err}")
    return float(err)


if __name__ == "__main__":
    key = jax.random.PRNGKey(0)
    k1, k2 = jax.random.split(key)

    # projection shortcut (stride 2, channel change) — the canonical down-block
    _run_case(k1, n=2, in_ch=4, out_ch=8, h=16, w=16, stride=2)
    # identity shortcut (stride 1, same channels)
    _run_case(k2, n=2, in_ch=8, out_ch=8, h=8, w=8, stride=1)

    print("KERNEL_OK")
</pallas_src>

<mosaic_0001>
module attributes {stable_mosaic.version = 11 : i64} {
  func.func @_basic_block_kernel(%arg0: i32, %arg1: i32, %arg2: memref<1x9x9x256xbf16, #tpu.memory_space<vmem>>, %arg3: memref<1x9x9x256xbf16, #tpu.memory_space<vmem>>, %arg4: memref<9x128x128xbf16, #tpu.memory_space<vmem>>, %arg5: memref<1x128xf32, #tpu.memory_space<vmem>>, %arg6: memref<9x128x128xbf16, #tpu.memory_space<vmem>>, %arg7: memref<1x128xf32, #tpu.memory_space<vmem>>, %arg8: memref<128x128xbf16, #tpu.memory_space<vmem>>, %arg9: memref<1x128xf32, #tpu.memory_space<vmem>>, %arg10: memref<1x8x8x128xbf16, #tpu.memory_space<vmem>>, %arg11: memref<10x10x128xbf16, #tpu.memory_space<vmem>>) attributes {dimension_semantics = [#tpu.dimension_semantics<parallel>, #tpu.dimension_semantics<parallel>], iteration_bounds = array<i64: 2, 1>, scalar_prefetch = 0 : i64, scratch_operands = 1 : i64, tpu.core_type = #tpu.core_type<tc>, window_params = [{transform_indices = @transform_0, window_bounds = array<i64: 1, 9, 9, 256>}, {transform_indices = @transform_1, window_bounds = array<i64: 1, 9, 9, 256>}, {pipeline_mode = #tpu.pipeline_mode<synchronous>, transform_indices = @transform_2, window_bounds = array<i64: 9, 128, 128>}, {pipeline_mode = #tpu.pipeline_mode<synchronous>, transform_indices = @transform_3, window_bounds = array<i64: 1, 128>}, {pipeline_mode = #tpu.pipeline_mode<synchronous>, transform_indices = @transform_4, window_bounds = array<i64: 9, 128, 128>}, {pipeline_mode = #tpu.pipeline_mode<synchronous>, transform_indices = @transform_5, window_bounds = array<i64: 1, 128>}, {pipeline_mode = #tpu.pipeline_mode<synchronous>, transform_indices = @transform_6, window_bounds = array<i64: 128, 128>}, {pipeline_mode = #tpu.pipeline_mode<synchronous>, transform_indices = @transform_7, window_bounds = array<i64: 1, 128>}, {transform_indices = @transform_8, window_bounds = array<i64: 1, 8, 8, 128>}]} {
    %c8_i32 = arith.constant 8 : i32
    %0 = arith.muli %arg1, %c8_i32 : i32
    %c0 = arith.constant 0 : index
    %c0_0 = arith.constant 0 : index
    %1 = vector.load %arg5[%c0, %c0_0] : memref<1x128xf32, #tpu.memory_space<vmem>>, vector<1x128xf32>
    %c0_1 = arith.constant 0 : index
    %c0_2 = arith.constant 0 : index
    %2 = vector.load %arg7[%c0_1, %c0_2] : memref<1x128xf32, #tpu.memory_space<vmem>>, vector<1x128xf32>
    %cst = arith.constant 0.000000e+00 : bf16
    %3 = vector.broadcast %cst : bf16 to vector<10x1x128xbf16>
    %c0_3 = arith.constant 0 : index
    %c0_4 = arith.constant 0 : index
    %c0_5 = arith.constant 0 : index
    %4 = vector.load %arg11[%c0_3, %c0_4, %c0_5] : memref<10x10x128xbf16, #tpu.memory_space<vmem>>, vector<10x1x128xbf16>
    tpu.vector_store %arg11[%c0_3, %c0_4, %c0_5], %3 {strides = array<i32>} : memref<10x10x128xbf16, #tpu.memory_space<vmem>>, vector<10x1x128xbf16>,
    %c0_6 = arith.constant 0 : index
    %c9 = arith.constant 9 : index
    %c0_7 = arith.constant 0 : index
    %5 = vector.load %arg11[%c0_6, %c9, %c0_7] : memref<10x10x128xbf16, #tpu.memory_space<vmem>>, vector<10x1x128xbf16>
    tpu.vector_store %arg11[%c0_6, %c9, %c0_7], %3 {strides = array<i32>} : memref<10x10x128xbf16, #tpu.memory_space<vmem>>, vector<10x1x128xbf16>,
    %cst_8 = arith.constant 0.000000e+00 : bf16
    %6 = vector.broadcast %cst_8 : bf16 to vector<8x128xbf16>
    %c0_9 = arith.constant 0 : index
    %c1 = arith.constant 1 : index
    %c0_10 = arith.constant 0 : index
    %7 = vector.load %arg11[%c0_9, %c1, %c0_10] : memref<10x10x128xbf16, #tpu.memory_space<vmem>>, vector<1x8x128xbf16>
    %8 = vector.shape_cast %7 : vector<1x8x128xbf16> to vector<8x128xbf16>
    %9 = vector.shape_cast %6 : vector<8x128xbf16> to vector<1x8x128xbf16>
    tpu.vector_store %arg11[%c0_9, %c1, %c0_10], %9 {strides = array<i32>} : memref<10x10x128xbf16, #tpu.memory_space<vmem>>, vector<1x8x128xbf16>,
    %c9_11 = arith.constant 9 : index
    %c1_12 = arith.constant 1 : index
    %c0_13 = arith.constant 0 : index
    %10 = vector.load %arg11[%c9_11, %c1_12, %c0_13] : memref<10x10x128xbf16, #tpu.memory_space<vmem>>, vector<1x8x128xbf16>
    %11 = vector.shape_cast %10 : vector<1x8x128xbf16> to vector<8x128xbf16>
    %12 = vector.shape_cast %6 : vector<8x128xbf16> to vector<1x8x128xbf16>
    tpu.vector_store %arg11[%c9_11, %c1_12, %c0_13], %12 {strides = array<i32>} : memref<10x10x128xbf16, #tpu.memory_space<vmem>>, vector<1x8x128xbf16>,
    %cst_14 = arith.constant 0.000000e+00 : f32
    %13 = vector.broadcast %cst_14 : f32 to vector<64x128xf32>
    %c0_i32 = arith.constant 0 : i32
    %14 = arith.addi %0, %c0_i32 : i32
    %c0_15 = arith.constant 0 : index
    %15 = arith.index_cast %14 : i32 to index
    %c0_16 = arith.constant 0 : index
    %c0_17 = arith.constant 0 : index
    %16 = vector.load %arg2[%c0_15, %15, %c0_16, %c0_17] : memref<1x9x9x256xbf16, #tpu.memory_space<vmem>>, vector<1x8x8x128xbf16>
    %17 = vector.shape_cast %16 : vector<1x8x8x128xbf16> to vector<8x8x128xbf16>
    %18 = vector.shape_cast %17 : vector<8x8x128xbf16> to vector<64x128xbf16>
    %c0_18 = arith.constant 0 : index
    %c0_19 = arith.constant 0 : index
    %c0_20 = arith.constant 0 : index
    %19 = vector.load %arg4[%c0_18, %c0_19, %c0_20] : memref<9x128x128xbf16, #tpu.memory_space<vmem>>, vector<1x128x128xbf16>
    %20 = vector.shape_cast %19 : vector<1x128x128xbf16> to vector<128x128xbf16>
    %cst_21 = arith.constant dense<0.000000e+00> : vector<64x128xf32>
    %21 = tpu.matmul %18, %20, %cst_21 {dimension_numbers = #tpu.dot_dimension_numbers<[1], [0], [0], [1], [0, 0, 1, 1], [], []>} : vector<64x128xbf16>, vector<128x128xbf16>, vector<64x128xf32> -> vector<64x128xf32>
    %22 = arith.addf %13, %21 : vector<64x128xf32>
    %c0_i32_22 = arith.constant 0 : i32
    %23 = arith.addi %0, %c0_i32_22 : i32
    %c0_23 = arith.constant 0 : index
    %24 = arith.index_cast %23 : i32 to index
    %c0_24 = arith.constant 0 : index
    %c128 = arith.constant 128 : index
    %25 = vector.load %arg2[%c0_23, %24, %c0_24, %c128] : memref<1x9x9x256xbf16, #tpu.memory_space<vmem>>, vector<1x8x8x128xbf16>
    %26 = vector.shape_cast %25 : vector<1x8x8x128xbf16> to vector<8x8x128xbf16>
    %27 = vector.shape_cast %26 : vector<8x8x128xbf16> to vector<64x128xbf16>
    %c1_25 = arith.constant 1 : index
    %c0_26 = arith.constant 0 : index
    %c0_27 = arith.constant 0 : index
    %28 = vector.load %arg4[%c1_25, %c0_26, %c0_27] : memref<9x128x128xbf16, #tpu.memory_space<vmem>>, vector<1x128x128xbf16>
    %29 = vector.shape_cast %28 : vector<1x128x128xbf16> to vector<128x128xbf16>
    %cst_28 = arith.constant dense<0.000000e+00> : vector<64x128xf32>
    %30 = tpu.matmul %27, %29, %cst_28 {dimension_numbers = #tpu.dot_dimension_numbers<[1], [0], [0], [1], [0, 0, 1, 1], [], []>} : vector<64x128xbf16>, vector<128x128xbf16>, vector<64x128xf32> -> vector<64x128xf32>
    %31 = arith.addf %22, %30 : vector<64x128xf32>
    %c0_i32_29 = arith.constant 0 : i32
    %32 = arith.addi %0, %c0_i32_29 : i32
    %c0_30 = arith.constant 0 : index
    %33 = arith.index_cast %32 : i32 to index
    %c1_31 = arith.constant 1 : index
    %c0_32 = arith.constant 0 : index
    %34 = vector.load %arg2[%c0_30, %33, %c1_31, %c0_32] : memref<1x9x9x256xbf16, #tpu.memory_space<vmem>>, vector<1x8x8x128xbf16>
    %35 = vector.shape_cast %34 : vector<1x8x8x128xbf16> to vector<8x8x128xbf16>
    %36 = vector.shape_cast %35 : vector<8x8x128xbf16> to vector<64x128xbf16>
    %c2 = arith.constant 2 : index
    %c0_33 = arith.constant 0 : index
    %c0_34 = arith.constant 0 : index
    %37 = vector.load %arg4[%c2, %c0_33, %c0_34] : memref<9x128x128xbf16, #tpu.memory_space<vmem>>, vector<1x128x128xbf16>
    %38 = vector.shape_cast %37 : vector<1x128x128xbf16> to vector<128x128xbf16>
    %cst_35 = arith.constant dense<0.000000e+00> : vector<64x128xf32>
    %39 = tpu.matmul %36, %38, %cst_35 {dimension_numbers = #tpu.dot_dimension_numbers<[1], [0], [0], [1], [0, 0, 1, 1], [], []>} : vector<64x128xbf16>, vector<128x128xbf16>, vector<64x128xf32> -> vector<64x128xf32>
    %40 = arith.addf %31, %39 : vector<64x128xf32>
    %c0_i32_36 = arith.constant 0 : i32
    %41 = arith.addi %0, %c0_i32_36 : i32
    %c0_37 = arith.constant 0 : index
    %42 = arith.index_cast %41 : i32 to index
    %c0_38 = arith.constant 0 : index
    %c0_39 = arith.constant 0 : index
    %43 = vector.load %arg3[%c0_37, %42, %c0_38, %c0_39] : memref<1x9x9x256xbf16, #tpu.memory_space<vmem>>, vector<1x8x8x128xbf16>
    %44 = vector.shape_cast %43 : vector<1x8x8x128xbf16> to vector<8x8x128xbf16>
    %45 = vector.shape_cast %44 : vector<8x8x128xbf16> to vector<64x128xbf16>
    %c3 = arith.constant 3 : index
    %c0_40 = arith.constant 0 : index
    %c0_41 = arith.constant 0 : index
    %46 = vector.load %arg4[%c3, %c0_40, %c0_41] : memref<9x128x128xbf16, #tpu.memory_space<vmem>>, vector<1x128x128xbf16>
    %47 = vector.shape_cast %46 : vector<1x128x128xbf16> to vector<128x128xbf16>
    %cst_42 = arith.constant dense<0.000000e+00> : vector<64x128xf32>
    %48 = tpu.matmul %45, %47, %cst_42 {dimension_numbers = #tpu.dot_dimension_numbers<[1], [0], [0], [1], [0, 0, 1, 1], [], []>} : vector<64x128xbf16>, vector<128x128xbf16>, vector<64x128xf32> -> vector<64x128xf32>
    %49 = arith.addf %40, %48 : vector<64x128xf32>
    %c0_i32_43 = arith.constant 0 : i32
    %50 = arith.addi %0, %c0_i32_43 : i32
    %c0_44 = arith.constant 0 : index
    %51 = arith.index_cast %50 : i32 to index
    %c0_45 = arith.constant 0 : index
    %c128_46 = arith.constant 128 : index
    %52 = vector.load %arg3[%c0_44, %51, %c0_45, %c128_46] : memref<1x9x9x256xbf16, #tpu.memory_space<vmem>>, vector<1x8x8x128xbf16>
    %53 = vector.shape_cast %52 : vector<1x8x8x128xbf16> to vector<8x8x128xbf16>
    %54 = vector.shape_cast %53 : vector<8x8x128xbf16> to vector<64x128xbf16>
    %c4 = arith.constant 4 : index
    %c0_47 = arith.constant 0 : index
    %c0_48 = arith.constant 0 : index
    %55 = vector.load %arg4[%c4, %c0_47, %c0_48] : memref<9x128x128xbf16, #tpu.memory_space<vmem>>, vector<1x128x128xbf16>
    %56 = vector.shape_cast %55 : vector<1x128x128xbf16> to vector<128x128xbf16>
    %cst_49 = arith.constant dense<0.000000e+00> : vector<64x128xf32>
    %57 = tpu.matmul %54, %56, %cst_49 {dimension_numbers = #tpu.dot_dimension_numbers<[1], [0], [0], [1], [0, 0, 1, 1], [], []>} : vector<64x128xbf16>, vector<128x128xbf16>, vector<64x128xf32> -> vector<64x128xf32>
    %58 = arith.addf %49, %57 : vector<64x128xf32>
    %c0_i32_50 = arith.constant 0 : i32
    %59 = arith.addi %0, %c0_i32_50 : i32
    %c0_51 = arith.constant 0 : index
    %60 = arith.index_cast %59 : i32 to index
    %c1_52 = arith.constant 1 : index
    %c0_53 = arith.constant 0 : index
    %61 = vector.load %arg3[%c0_51, %60, %c1_52, %c0_53] : memref<1x9x9x256xbf16, #tpu.memory_space<vmem>>, vector<1x8x8x128xbf16>
    %62 = vector.shape_cast %61 : vector<1x8x8x128xbf16> to vector<8x8x128xbf16>
    %63 = vector.shape_cast %62 : vector<8x8x128xbf16> to vector<64x128xbf16>
    %c5 = arith.constant 5 : index
    %c0_54 = arith.constant 0 : index
    %c0_55 = arith.constant 0 : index
    %64 = vector.load %arg4[%c5, %c0_54, %c0_55] : memref<9x128x128xbf16, #tpu.memory_space<vmem>>, vector<1x128x128xbf16>
    %65 = vector.shape_cast %64 : vector<1x128x128xbf16> to vector<128x128xbf16>
    %cst_56 = arith.constant dense<0.000000e+00> : vector<64x128xf32>
    %66 = tpu.matmul %63, %65, %cst_56 {dimension_numbers = #tpu.dot_dimension_numbers<[1], [0], [0], [1], [0, 0, 1, 1], [], []>} : vector<64x128xbf16>, vector<128x128xbf16>, vector<64x128xf32> -> vector<64x128xf32>
    %67 = arith.addf %58, %66 : vector<64x128xf32>
    %c1_i32 = arith.constant 1 : i32
    %68 = arith.addi %0, %c1_i32 : i32
    %c0_57 = arith.constant 0 : index
    %69 = arith.index_cast %68 : i32 to index
    %c0_58 = arith.constant 0 : index
    %c0_59 = arith.constant 0 : index
    %70 = vector.load %arg2[%c0_57, %69, %c0_58, %c0_59] : memref<1x9x9x256xbf16, #tpu.memory_space<vmem>>, vector<1x8x8x128xbf16>
    %71 = vector.shape_cast %70 : vector<1x8x8x128xbf16> to vector<8x8x128xbf16>
    %72 = vector.shape_cast %71 : vector<8x8x128xbf16> to vector<64x128xbf16>
    %c6 = arith.constant 6 : index
    %c0_60 = arith.constant 0 : index
    %c0_61 = arith.constant 0 : index
    %73 = vector.load %arg4[%c6, %c0_60, %c0_61] : memref<9x128x128xbf16, #tpu.memory_space<vmem>>, vector<1x128x128xbf16>
    %74 = vector.shape_cast %73 : vector<1x128x128xbf16> to vector<128x128xbf16>
    %cst_62 = arith.constant dense<0.000000e+00> : vector<64x128xf32>
    %75 = tpu.matmul %72, %74, %cst_62 {dimension_numbers = #tpu.dot_dimension_numbers<[1], [0], [0], [1], [0, 0, 1, 1], [], []>} : vector<64x128xbf16>, vector<128x128xbf16>, vector<64x128xf32> -> vector<64x128xf32>
    %76 = arith.addf %67, %75 : vector<64x128xf32>
    %c1_i32_63 = arith.constant 1 : i32
    %77 = arith.addi %0, %c1_i32_63 : i32
    %c0_64 = arith.constant 0 : index
    %78 = arith.index_cast %77 : i32 to index
    %c0_65 = arith.constant 0 : index
    %c128_66 = arith.constant 128 : index
    %79 = vector.load %arg2[%c0_64, %78, %c0_65, %c128_66] : memref<1x9x9x256xbf16, #tpu.memory_space<vmem>>, vector<1x8x8x128xbf16>
    %80 = vector.shape_cast %79 : vector<1x8x8x128xbf16> to vector<8x8x128xbf16>
    %81 = vector.shape_cast %80 : vector<8x8x128xbf16> to vector<64x128xbf16>
    %c7 = arith.constant 7 : index
    %c0_67 = arith.constant 0 : index
    %c0_68 = arith.constant 0 : index
    %82 = vector.load %arg4[%c7, %c0_67, %c0_68] : memref<9x128x128xbf16, #tpu.memory_space<vmem>>, vector<1x128x128xbf16>
    %83 = vector.shape_cast %82 : vector<1x128x128xbf16> to vector<128x128xbf16>
    %cst_69 = arith.constant dense<0.000000e+00> : vector<64x128xf32>
    %84 = tpu.matmul %81, %83, %cst_69 {dimension_numbers = #tpu.dot_dimension_numbers<[1], [0], [0], [1], [0, 0, 1, 1], [], []>} : vector<64x128xbf16>, vector<128x128xbf16>, vector<64x128xf32> -> vector<64x128xf32>
    %85 = arith.addf %76, %84 : vector<64x128xf32>
    %c1_i32_70 = arith.constant 1 : i32
    %86 = arith.addi %0, %c1_i32_70 : i32
    %c0_71 = arith.constant 0 : index
    %87 = arith.index_cast %86 : i32 to index
    %c1_72 = arith.constant 1 : index
    %c0_73 = arith.constant 0 : index
    %88 = vector.load %arg2[%c0_71, %87, %c1_72, %c0_73] : memref<1x9x9x256xbf16, #tpu.memory_space<vmem>>, vector<1x8x8x128xbf16>
    %89 = vector.shape_cast %88 : vector<1x8x8x128xbf16> to vector<8x8x128xbf16>
    %90 = vector.shape_cast %89 : vector<8x8x128xbf16> to vector<64x128xbf16>
    %c8 = arith.constant 8 : index
    %c0_74 = arith.constant 0 : index
    %c0_75 = arith.constant 0 : index
    %91 = vector.load %arg4[%c8, %c0_74, %c0_75] : memref<9x128x128xbf16, #tpu.memory_space<vmem>>, vector<1x128x128xbf16>
    %92 = vector.shape_cast %91 : vector<1x128x128xbf16> to vector<128x128xbf16>
    %cst_76 = arith.constant dense<0.000000e+00> : vector<64x128xf32>
    %93 = tpu.matmul %90, %92, %cst_76 {dimension_numbers = #tpu.dot_dimension_numbers<[1], [0], [0], [1], [0, 0, 1, 1], [], []>} : vector<64x128xbf16>, vector<128x128xbf16>, vector<64x128xf32> -> vector<64x128xf32>
    %94 = arith.addf %85, %93 : vector<64x128xf32>
    %95 = vector.broadcast %1 : vector<1x128xf32> to vector<64x128xf32>
    %96 = arith.addf %94, %95 : vector<64x128xf32>
    %cst_77 = arith.constant 0.000000e+00 : f32
    %97 = vector.broadcast %cst_77 : f32 to vector<64x128xf32>
    %98 = arith.maximumf %96, %97 : vector<64x128xf32>
    %99 = arith.truncf %98 : vector<64x128xf32> to vector<64x128xbf16>
    %100 = vector.shape_cast %99 : vector<64x128xbf16> to vector<8x8x128xbf16>
    %c1_78 = arith.constant 1 : index
    %c1_79 = arith.constant 1 : index
    %c0_80 = arith.constant 0 : index
    %101 = vector.load %arg11[%c1_78, %c1_79, %c0_80] : memref<10x10x128xbf16, #tpu.memory_space<vmem>>, vector<8x8x128xbf16>
    tpu.vector_store %arg11[%c1_78, %c1_79, %c0_80], %100 {strides = array<i32>} : memref<10x10x128xbf16, #tpu.memory_space<vmem>>, vector<8x8x128xbf16>,
    %cst_81 = arith.constant 0.000000e+00 : f32
    %102 = vector.broadcast %cst_81 : f32 to vector<64x128xf32>
    %c0_82 = arith.constant 0 : index
    %c0_83 = arith.constant 0 : index
    %c0_84 = arith.constant 0 : index
    %103 = vector.load %arg11[%c0_82, %c0_83, %c0_84] : memref<10x10x128xbf16, #tpu.memory_space<vmem>>, vector<8x8x128xbf16>
    %104 = vector.shape_cast %103 : vector<8x8x128xbf16> to vector<64x128xbf16>
    %c0_85 = arith.constant 0 : index
    %c0_86 = arith.constant 0 : index
    %c0_87 = arith.constant 0 : index
    %105 = vector.load %arg6[%c0_85, %c0_86, %c0_87] : memref<9x128x128xbf16, #tpu.memory_space<vmem>>, vector<1x128x128xbf16>
    %106 = vector.shape_cast %105 : vector<1x128x128xbf16> to vector<128x128xbf16>
    %cst_88 = arith.constant dense<0.000000e+00> : vector<64x128xf32>
    %107 = tpu.matmul %104, %106, %cst_88 {dimension_numbers = #tpu.dot_dimension_numbers<[1], [0], [0], [1], [0, 0, 1, 1], [], []>} : vector<64x128xbf16>, vector<128x128xbf16>, vector<64x128xf32> -> vector<64x128xf32>
    %108 = arith.addf %102, %107 : vector<64x128xf32>
    %c0_89 = arith.constant 0 : index
    %c1_90 = arith.constant 1 : index
    %c0_91 = arith.constant 0 : index
    %109 = vector.load %arg11[%c0_89, %c1_90, %c0_91] : memref<10x10x128xbf16, #tpu.memory_space<vmem>>, vector<8x8x128xbf16>
    %110 = vector.shape_cast %109 : vector<8x8x128xbf16> to vector<64x128xbf16>
    %c1_92 = arith.constant 1 : index
    %c0_93 = arith.constant 0 : index
    %c0_94 = arith.constant 0 : index
    %111 = vector.load %arg6[%c1_92, %c0_93, %c0_94] : memref<9x128x128xbf16, #tpu.memory_space<vmem>>, vector<1x128x128xbf16>
    %112 = vector.shape_cast %111 : vector<1x128x128xbf16> to vector<128x128xbf16>
    %cst_95 = arith.constant dense<0.000000e+00> : vector<64x128xf32>
    %113 = tpu.matmul %110, %112, %cst_95 {dimension_numbers = #tpu.dot_dimension_numbers<[1], [0], [0], [1], [0, 0, 1, 1], [], []>} : vector<64x128xbf16>, vector<128x128xbf16>, vector<64x128xf32> -> vector<64x128xf32>
    %114 = arith.addf %108, %113 : vector<64x128xf32>
    %c0_96 = arith.constant 0 : index
    %c2_97 = arith.constant 2 : index
    %c0_98 = arith.constant 0 : index
    %115 = vector.load %arg11[%c0_96, %c2_97, %c0_98] : memref<10x10x128xbf16, #tpu.memory_space<vmem>>, vector<8x8x128xbf16>
    %116 = vector.shape_cast %115 : vector<8x8x128xbf16> to vector<64x128xbf16>
    %c2_99 = arith.constant 2 : index
    %c0_100 = arith.constant 0 : index
    %c0_101 = arith.constant 0 : index
    %117 = vector.load %arg6[%c2_99, %c0_100, %c0_101] : memref<9x128x128xbf16, #tpu.memory_space<vmem>>, vector<1x128x128xbf16>
    %118 = vector.shape_cast %117 : vector<1x128x128xbf16> to vector<128x128xbf16>
    %cst_102 = arith.constant dense<0.000000e+00> : vector<64x128xf32>
    %119 = tpu.matmul %116, %118, %cst_102 {dimension_numbers = #tpu.dot_dimension_numbers<[1], [0], [0], [1], [0, 0, 1, 1], [], []>} : vector<64x128xbf16>, vector<128x128xbf16>, vector<64x128xf32> -> vector<64x128xf32>
    %120 = arith.addf %114, %119 : vector<64x128xf32>
    %c1_103 = arith.constant 1 : index
    %c0_104 = arith.constant 0 : index
    %c0_105 = arith.constant 0 : index
    %121 = vector.load %arg11[%c1_103, %c0_104, %c0_105] : memref<10x10x128xbf16, #tpu.memory_space<vmem>>, vector<8x8x128xbf16>
    %122 = vector.shape_cast %121 : vector<8x8x128xbf16> to vector<64x128xbf16>
    %c3_106 = arith.constant 3 : index
    %c0_107 = arith.constant 0 : index
    %c0_108 = arith.constant 0 : index
    %123 = vector.load %arg6[%c3_106, %c0_107, %c0_108] : memref<9x128x128xbf16, #tpu.memory_space<vmem>>, vector<1x128x128xbf16>
    %124 = vector.shape_cast %123 : vector<1x128x128xbf16> to vector<128x128xbf16>
    %cst_109 = arith.constant dense<0.000000e+00> : vector<64x128xf32>
    %125 = tpu.matmul %122, %124, %cst_109 {dimension_numbers = #tpu.dot_dimension_numbers<[1], [0], [0], [1], [0, 0, 1, 1], [], []>} : vector<64x128xbf16>, vector<128x128xbf16>, vector<64x128xf32> -> vector<64x128xf32>
    %126 = arith.addf %120, %125 : vector<64x128xf32>
    %c1_110 = arith.constant 1 : index
    %c1_111 = arith.constant 1 : index
    %c0_112 = arith.constant 0 : index
    %127 = vector.load %arg11[%c1_110, %c1_111, %c0_112] : memref<10x10x128xbf16, #tpu.memory_space<vmem>>, vector<8x8x128xbf16>
    %128 = vector.shape_cast %127 : vector<8x8x128xbf16> to vector<64x128xbf16>
    %c4_113 = arith.constant 4 : index
    %c0_114 = arith.constant 0 : index
    %c0_115 = arith.constant 0 : index
    %129 = vector.load %arg6[%c4_113, %c0_114, %c0_115] : memref<9x128x128xbf16, #tpu.memory_space<vmem>>, vector<1x128x128xbf16>
    %130 = vector.shape_cast %129 : vector<1x128x128xbf16> to vector<128x128xbf16>
    %cst_116 = arith.constant dense<0.000000e+00> : vector<64x128xf32>
    %131 = tpu.matmul %128, %130, %cst_116 {dimension_numbers = #tpu.dot_dimension_numbers<[1], [0], [0], [1], [0, 0, 1, 1], [], []>} : vector<64x128xbf16>, vector<128x128xbf16>, vector<64x128xf32> -> vector<64x128xf32>
    %132 = arith.addf %126, %131 : vector<64x128xf32>
    %c1_117 = arith.constant 1 : index
    %c2_118 = arith.constant 2 : index
    %c0_119 = arith.constant 0 : index
    %133 = vector.load %arg11[%c1_117, %c2_118, %c0_119] : memref<10x10x128xbf16, #tpu.memory_space<vmem>>, vector<8x8x128xbf16>
    %134 = vector.shape_cast %133 : vector<8x8x128xbf16> to vector<64x128xbf16>
    %c5_120 = arith.constant 5 : index
    %c0_121 = arith.constant 0 : index
    %c0_122 = arith.constant 0 : index
    %135 = vector.load %arg6[%c5_120, %c0_121, %c0_122] : memref<9x128x128xbf16, #tpu.memory_space<vmem>>, vector<1x128x128xbf16>
    %136 = vector.shape_cast %135 : vector<1x128x128xbf16> to vector<128x128xbf16>
    %cst_123 = arith.constant dense<0.000000e+00> : vector<64x128xf32>
    %137 = tpu.matmul %134, %136, %cst_123 {dimension_numbers = #tpu.dot_dimension_numbers<[1], [0], [0], [1], [0, 0, 1, 1], [], []>} : vector<64x128xbf16>, vector<128x128xbf16>, vector<64x128xf32> -> vector<64x128xf32>
    %138 = arith.addf %132, %137 : vector<64x128xf32>
    %c2_124 = arith.constant 2 : index
    %c0_125 = arith.constant 0 : index
    %c0_126 = arith.constant 0 : index
    %139 = vector.load %arg11[%c2_124, %c0_125, %c0_126] : memref<10x10x128xbf16, #tpu.memory_space<vmem>>, vector<8x8x128xbf16>
    %140 = vector.shape_cast %139 : vector<8x8x128xbf16> to vector<64x128xbf16>
    %c6_127 = arith.constant 6 : index
    %c0_128 = arith.constant 0 : index
    %c0_129 = arith.constant 0 : index
    %141 = vector.load %arg6[%c6_127, %c0_128, %c0_129] : memref<9x128x128xbf16, #tpu.memory_space<vmem>>, vector<1x128x128xbf16>
    %142 = vector.shape_cast %141 : vector<1x128x128xbf16> to vector<128x128xbf16>
    %cst_130 = arith.constant dense<0.000000e+00> : vector<64x128xf32>
    %143 = tpu.matmul %140, %142, %cst_130 {dimension_numbers = #tpu.dot_dimension_numbers<[1], [0], [0], [1], [0, 0, 1, 1], [], []>} : vector<64x128xbf16>, vector<128x128xbf16>, vector<64x128xf32> -> vector<64x128xf32>
    %144 = arith.addf %138, %143 : vector<64x128xf32>
    %c2_131 = arith.constant 2 : index
    %c1_132 = arith.constant 1 : index
    %c0_133 = arith.constant 0 : index
    %145 = vector.load %arg11[%c2_131, %c1_132, %c0_133] : memref<10x10x128xbf16, #tpu.memory_space<vmem>>, vector<8x8x128xbf16>
    %146 = vector.shape_cast %145 : vector<8x8x128xbf16> to vector<64x128xbf16>
    %c7_134 = arith.constant 7 : index
    %c0_135 = arith.constant 0 : index
    %c0_136 = arith.constant 0 : index
    %147 = vector.load %arg6[%c7_134, %c0_135, %c0_136] : memref<9x128x128xbf16, #tpu.memory_space<vmem>>, vector<1x128x128xbf16>
    %148 = vector.shape_cast %147 : vector<1x128x128xbf16> to vector<128x128xbf16>
    %cst_137 = arith.constant dense<0.000000e+00> : vector<64x128xf32>
    %149 = tpu.matmul %146, %148, %cst_137 {dimension_numbers = #tpu.dot_dimension_numbers<[1], [0], [0], [1], [0, 0, 1, 1], [], []>} : vector<64x128xbf16>, vector<128x128xbf16>, vector<64x128xf32> -> vector<64x128xf32>
    %150 = arith.addf %144, %149 : vector<64x128xf32>
    %c2_138 = arith.constant 2 : index
    %c2_139 = arith.constant 2 : index
    %c0_140 = arith.constant 0 : index
    %151 = vector.load %arg11[%c2_138, %c2_139, %c0_140] : memref<10x10x128xbf16, #tpu.memory_space<vmem>>, vector<8x8x128xbf16>
    %152 = vector.shape_cast %151 : vector<8x8x128xbf16> to vector<64x128xbf16>
    %c8_141 = arith.constant 8 : index
    %c0_142 = arith.constant 0 : index
    %c0_143 = arith.constant 0 : index
    %153 = vector.load %arg6[%c8_141, %c0_142, %c0_143] : memref<9x128x128xbf16, #tpu.memory_space<vmem>>, vector<1x128x128xbf16>
    %154 = vector.shape_cast %153 : vector<1x128x128xbf16> to vector<128x128xbf16>
    %cst_144 = arith.constant dense<0.000000e+00> : vector<64x128xf32>
    %155 = tpu.matmul %152, %154, %cst_144 {dimension_numbers = #tpu.dot_dimension_numbers<[1], [0], [0], [1], [0, 0, 1, 1], [], []>} : vector<64x128xbf16>, vector<128x128xbf16>, vector<64x128xf32> -> vector<64x128xf32>
    %156 = arith.addf %150, %155 : vector<64x128xf32>
    %157 = vector.broadcast %2 : vector<1x128xf32> to vector<64x128xf32>
    %158 = arith.addf %156, %157 : vector<64x128xf32>
    %c0_i32_145 = arith.constant 0 : i32
    %159 = arith.addi %0, %c0_i32_145 : i32
    %c0_146 = arith.constant 0 : index
    %160 = arith.index_cast %159 : i32 to index
    %c0_147 = arith.constant 0 : index
    %c128_148 = arith.constant 128 : index
    %161 = vector.load %arg3[%c0_146, %160, %c0_147, %c128_148] : memref<1x9x9x256xbf16, #tpu.memory_space<vmem>>, vector<1x8x8x128xbf16>
    %162 = vector.shape_cast %161 : vector<1x8x8x128xbf16> to vector<8x8x128xbf16>
    %163 = vector.shape_cast %162 : vector<8x8x128xbf16> to vector<64x128xbf16>
    %c0_149 = arith.constant 0 : index
    %c0_150 = arith.constant 0 : index
    %164 = vector.load %arg8[%c0_149, %c0_150] : memref<128x128xbf16, #tpu.memory_space<vmem>>, vector<128x128xbf16>
    %cst_151 = arith.constant dense<0.000000e+00> : vector<64x128xf32>
    %165 = tpu.matmul %163, %164, %cst_151 {dimension_numbers = #tpu.dot_dimension_numbers<[1], [0], [0], [1], [0, 0, 1, 1], [], []>} : vector<64x128xbf16>, vector<128x128xbf16>, vector<64x128xf32> -> vector<64x128xf32>
    %166 = arith.addf %158, %165 : vector<64x128xf32>
    %c0_152 = arith.constant 0 : index
    %c0_153 = arith.constant 0 : index
    %167 = vector.load %arg9[%c0_152, %c0_153] : memref<1x128xf32, #tpu.memory_space<vmem>>, vector<1x128xf32>
    %168 = vector.broadcast %167 : vector<1x128xf32> to vector<64x128xf32>
    %169 = arith.addf %166, %168 : vector<64x128xf32>
    %cst_154 = arith.constant 0.000000e+00 : f32
    %170 = vector.broadcast %cst_154 : f32 to vector<64x128xf32>
    %171 = arith.maximumf %169, %170 : vector<64x128xf32>
    %172 = vector.shape_cast %171 : vector<64x128xf32> to vector<1x8x8x128xf32>
    %173 = arith.truncf %172 : vector<1x8x8x128xf32> to vector<1x8x8x128xbf16>
    %c0_155 = arith.constant 0 : index
    %c0_156 = arith.constant 0 : index
    %c0_157 = arith.constant 0 : index
    %c0_158 = arith.constant 0 : index
    %174 = vector.load %arg10[%c0_155, %c0_156, %c0_157, %c0_158] : memref<1x8x8x128xbf16, #tpu.memory_space<vmem>>, vector<1x8x8x128xbf16>
    tpu.vector_store %arg10[%c0_155, %c0_156, %c0_157, %c0_158], %173 {strides = array<i32>} : memref<1x8x8x128xbf16, #tpu.memory_space<vmem>>, vector<1x8x8x128xbf16>,
    return
  }
  func.func @transform_0(%arg0: i32, %arg1: i32) -> (i32, i32, i32, i32) {
    %c0_i32 = arith.constant 0 : i32
    %c0_i32_0 = arith.constant 0 : i32
    %c0_i32_1 = arith.constant 0 : i32
    %c0_i32_2 = arith.constant 0 : i32
    return %arg0, %c0_i32, %c0_i32_0, %c0_i32_1 : i32, i32, i32, i32
  }
  func.func @transform_1(%arg0: i32, %arg1: i32) -> (i32, i32, i32, i32) {
    %c0_i32 = arith.constant 0 : i32
    %c0_i32_0 = arith.constant 0 : i32
    %c0_i32_1 = arith.constant 0 : i32
    %c0_i32_2 = arith.constant 0 : i32
    return %arg0, %c0_i32, %c0_i32_0, %c0_i32_1 : i32, i32, i32, i32
  }
  func.func @transform_2(%arg0: i32, %arg1: i32) -> (i32, i32, i32) {
    %c0_i32 = arith.constant 0 : i32
    %c0_i32_0 = arith.constant 0 : i32
    %c0_i32_1 = arith.constant 0 : i32
    %c0_i32_2 = arith.constant 0 : i32
    return %c0_i32, %c0_i32_0, %c0_i32_1 : i32, i32, i32
  }
  func.func @transform_3(%arg0: i32, %arg1: i32) -> (i32, i32) {
    %c0_i32 = arith.constant 0 : i32
    %c0_i32_0 = arith.constant 0 : i32
    %c0_i32_1 = arith.constant 0 : i32
    return %c0_i32, %c0_i32_0 : i32, i32
  }
  func.func @transform_4(%arg0: i32, %arg1: i32) -> (i32, i32, i32) {
    %c0_i32 = arith.constant 0 : i32
    %c0_i32_0 = arith.constant 0 : i32
    %c0_i32_1 = arith.constant 0 : i32
    %c0_i32_2 = arith.constant 0 : i32
    return %c0_i32, %c0_i32_0, %c0_i32_1 : i32, i32, i32
  }
  func.func @transform_5(%arg0: i32, %arg1: i32) -> (i32, i32) {
    %c0_i32 = arith.constant 0 : i32
    %c0_i32_0 = arith.constant 0 : i32
    %c0_i32_1 = arith.constant 0 : i32
    return %c0_i32, %c0_i32_0 : i32, i32
  }
  func.func @transform_6(%arg0: i32, %arg1: i32) -> (i32, i32) {
    %c0_i32 = arith.constant 0 : i32
    %c0_i32_0 = arith.constant 0 : i32
    %c0_i32_1 = arith.constant 0 : i32
    return %c0_i32, %c0_i32_0 : i32, i32
  }
  func.func @transform_7(%arg0: i32, %arg1: i32) -> (i32, i32) {
    %c0_i32 = arith.constant 0 : i32
    %c0_i32_0 = arith.constant 0 : i32
    %c0_i32_1 = arith.constant 0 : i32
    return %c0_i32, %c0_i32_0 : i32, i32
  }
  func.func @transform_8(%arg0: i32, %arg1: i32) -> (i32, i32, i32, i32) {
    %c0_i32 = arith.constant 0 : i32
    %c0_i32_0 = arith.constant 0 : i32
    %c0_i32_1 = arith.constant 0 : i32
    return %arg0, %arg1, %c0_i32, %c0_i32_0 : i32, i32, i32, i32
  }
}

</mosaic_0001>

<llo_original>
// kernel: tpu_custom_call.1
$region0: #{tpu_custom_call.1}
  #allocation0 [shape = 'u32[]', space=smem, size = 0x4, offset = 0x4, fixed_abs, tag = 'smem constant byte address 0x4 - core index']
  #allocation1 [shape = 'u32[144,128]{1,0:T(1,128)}', space=vmem, size = 0x12000, scoped, tag = 'internal scratch']
  #allocation2 [shape = 'bf16[10,10,128]{2,1,0:T(8,128)(2,1)}', space=vmem, size = 0xa000, scoped, tag = 'scratch operand']
  %s0 = inlined_call_operand.vmem [shape: bf16[2,9,9,256], index: 0, kind: input, shape index: {}]
  %s1 = inlined_call_operand.vmem [shape: bf16[2,9,9,256], index: 1, kind: input, shape index: {}]
  %s2 = inlined_call_operand.vmem [shape: bf16[9,128,128], index: 2, kind: input, shape index: {}]
  %s3 = inlined_call_operand.vmem [shape: f32[1,128], index: 3, kind: input, shape index: {}]
  %s4 = inlined_call_operand.hbm [shape: bf16[9,128,128], index: 4, kind: input, shape index: {}]
  %s5 = inlined_call_operand.vmem [shape: f32[1,128], index: 5, kind: input, shape index: {}]
  %s6 = inlined_call_operand.vmem [shape: bf16[128,128], index: 6, kind: input, shape index: {}]
  %s7 = inlined_call_operand.vmem [shape: f32[1,128], index: 7, kind: input, shape index: {}]
  %s8 = inlined_call_operand.hbm [shape: bf16[2,8,8,128], index: 8, kind: output, shape index: {}]
  %s9 = sld [smem:[#allocation0]]
  $region69: #{tpu_custom_call.1} parent=0
    _
  %s11 = ssub.s32 1, %s9
  %s12 = scalar_select 0, %s11, %s9
  $region1: #{tpu_custom_call.1} parent=0
    #allocation3 [shape = 'u8[294912]{0}', space=vmem, size = 0x48000, scoped, tag = 'input window, operand 4, single buffered']
    #allocation4 [shape = 's32[2]{0}', space=sflag, size = 0x8, scoped, tag = 'scoped memory for tpu_custom_call.1']
    #allocation5 [shape = 's32[2]{0}', space=sflag, size = 0x8, scoped, tag = 'scoped memory for tpu_custom_call.1']
    #allocation6 [shape = 'u8[32768]{0}', space=vmem, size = 0x8000, scoped, tag = 'output window, operand 0']
    %13 = vsyncpa [#allocation4], 0
    %14 = vsyncpa [#allocation5], 0
    %s15 = scalar_lea.sflag [#allocation5], 1
    %16 = vsyncpa %s15, 0
    loop: start=0, step=1, limit=4
    $region2: #{tpu_custom_call.1} parent=1 // loop_pre_header
      _
    $region3: #{tpu_custom_call.1} parent=1 // loop_header
      %s18 = sphi 0, %s22
      %p19 = scmp.ge.s32.totalorder %s18, 4
      %s25 = sphi 0, %s37
      %s26 = sphi 0, %s33
      %s27 = sphi 0, %s25
      %s28 = sphi 0, %s26
      %s29 = sphi 0, %s27
      %s30 = sphi 0, %s28
      %s40 = sphi 0, %s42
      %s43 = sphi 0, %s40
      %s44 = sphi 0, %s43
      %s60 = sphi 0, %s44
      %s66 = sphi 0, %s68
      %s69 = sphi 0, %s66
      %s70 = sphi 0, %s69
      %s86 = sphi 0, %s70
      %s90 = sphi 0, %s90
      %s92 = sphi 0, %s90
      %s93 = sphi 0, %s92
      %s107 = sphi 0, %s93
      %s111 = sphi 0, %s111
      %s113 = sphi 0, %s111
      %s114 = sphi 0, %s113
      %s128 = sphi 0, %s114
      %s132 = sphi 0, %s132
      %s134 = sphi 0, %s132
      %s135 = sphi 0, %s134
      %s149 = sphi 0, %s135
      %s153 = sphi 0, %s153
      %s155 = sphi 0, %s153
      %s156 = sphi 0, %s155
      %s170 = sphi 0, %s156
      %s174 = sphi 0, %s174
      %s176 = sphi 0, %s174
      %s177 = sphi 0, %s176
      %s191 = sphi 0, %s177
      %s195 = sphi 0, %s195
      %s197 = sphi 0, %s195
      %s198 = sphi 0, %s197
      %s212 = sphi 0, %s198
      %s220 = sphi 0, %s222
      %s223 = sphi 0, %s220
      %s224 = sphi 0, %s223
      %s240 = sphi 0, %s224
    $region4: #{tpu_custom_call.1} parent=1 // loop_header_branch
      %21 = sbr.rel (%p19) target = $region8
    $region5: #{tpu_custom_call.1} parent=1 // loop_body
      %s23 = ssub.s32 %s18, 1
      %s24 = ssub.s32 %s18, 2
      %s31 = sadd.s32 1, %s26
      %p32 = scmp.ge.s32.totalorder %s31, 1
      %s33 = scalar_select %p32, 0, %s31
      %s34 = sadd.s32 1, %s25
      %s35 = scalar_select %p32, %s34, %s25
      %p36 = scmp.ge.s32.totalorder %s35, 2
      %s37 = scalar_select %p36, 0, %s35
      %s38 = ssub.s32 %s25, %s37
      %p39 = scmp.eq.s32.totalorder %s38, 0
      %s41 = sadd.s32 %s40, 1
      %s42 = scalar_select %p39, %s40, %s41
      %p45 = pneg %p39
      %p46 = scmp.eq.s32.totalorder %s18, 1
      %p47 = por %p45, %p46
      %p48 = scmp.ne.s32.totalorder %s40, %s43
      %p49 = scmp.eq.s32.totalorder %s18, 0
      %p50 = por %p48, %p49
      %p51 = scmp.ne.s32.totalorder %s40, %s43
      %p52 = scmp.eq.s32.totalorder %s23, 1
      %p53 = por %p51, %p52
      %p54 = scmp.ne.s32.totalorder %s43, %s44
      %p55 = scmp.eq.s32.totalorder %s23, 0
      %p56 = por %p54, %p55
      %p57 = scmp.ne.s32.totalorder %s43, %s44
      %p58 = scmp.eq.s32.totalorder %s24, 1
      %p59 = por %p57, %p58
      %p61 = scmp.ne.s32.totalorder %s44, %s60
      %p62 = scmp.eq.s32.totalorder %s24, 0
      %p63 = por %p61, %p62
      %s64 = ssub.s32 %s25, %s37
      %p65 = scmp.eq.s32.totalorder %s64, 0
      %s67 = sadd.s32 %s66, 1
      %s68 = scalar_select %p65, %s66, %s67
      %p71 = pneg %p65
      %p72 = scmp.eq.s32.totalorder %s18, 1
      %p73 = por %p71, %p72
      %p74 = scmp.ne.s32.totalorder %s66, %s69
      %p75 = scmp.eq.s32.totalorder %s18, 0
      %p76 = por %p74, %p75
      %p77 = scmp.ne.s32.totalorder %s66, %s69
      %p78 = scmp.eq.s32.totalorder %s23, 1
      %p79 = por %p77, %p78
      %p80 = scmp.ne.s32.totalorder %s69, %s70
      %p81 = scmp.eq.s32.totalorder %s23, 0
      %p82 = por %p80, %p81
      %p83 = scmp.ne.s32.totalorder %s69, %s70
      %p84 = scmp.eq.s32.totalorder %s24, 1
      %p85 = por %p83, %p84
      %p87 = scmp.ne.s32.totalorder %s70, %s86
      %p88 = scmp.eq.s32.totalorder %s24, 0
      %p89 = por %p87, %p88
      %s91 = sadd.s32 %s90, 1
      %p94 = scmp.eq.s32.totalorder %s18, 1
      %p95 = scmp.ne.s32.totalorder %s90, %s92
      %p96 = scmp.eq.s32.totalorder %s18, 0
      %p97 = por %p95, %p96
      %p98 = scmp.ne.s32.totalorder %s90, %s92
      %p99 = scmp.eq.s32.totalorder %s23, 1
      %p100 = por %p98, %p99
      %p101 = scmp.ne.s32.totalorder %s92, %s93
      %p102 = scmp.eq.s32.totalorder %s23, 0
      %p103 = por %p101, %p102
      %p104 = scmp.ne.s32.totalorder %s92, %s93
      %p105 = scmp.eq.s32.totalorder %s24, 1
      %p106 = por %p104, %p105
      %p108 = scmp.ne.s32.totalorder %s93, %s107
      %p109 = scmp.eq.s32.totalorder %s24, 0
      %p110 = por %p108, %p109
      %s112 = sadd.s32 %s111, 1
      %p115 = scmp.eq.s32.totalorder %s18, 1
      %p116 = scmp.ne.s32.totalorder %s111, %s113
      %p117 = scmp.eq.s32.totalorder %s18, 0
      %p118 = por %p116, %p117
      %p119 = scmp.ne.s32.totalorder %s111, %s113
      %p120 = scmp.eq.s32.totalorder %s23, 1
      %p121 = por %p119, %p120
      %p122 = scmp.ne.s32.totalorder %s113, %s114
      %p123 = scmp.eq.s32.totalorder %s23, 0
      %p124 = por %p122, %p123
      %p125 = scmp.ne.s32.totalorder %s113, %s114
      %p126 = scmp.eq.s32.totalorder %s24, 1
      %p127 = por %p125, %p126
      %p129 = scmp.ne.s32.totalorder %s114, %s128
      %p130 = scmp.eq.s32.totalorder %s24, 0
      %p131 = por %p129, %p130
      %s133 = sadd.s32 %s132, 1
      %p136 = scmp.eq.s32.totalorder %s18, 1
      %p137 = scmp.ne.s32.totalorder %s132, %s134
      %p138 = scmp.eq.s32.totalorder %s18, 0
      %p139 = por %p137, %p138
      %p140 = scmp.ne.s32.totalorder %s132, %s134
      %p141 = scmp.eq.s32.totalorder %s23, 1
      %p142 = por %p140, %p141
      %p143 = scmp.ne.s32.totalorder %s134, %s135
      %p144 = scmp.eq.s32.totalorder %s23, 0
      %p145 = por %p143, %p144
      %p146 = scmp.ne.s32.totalorder %s134, %s135
      %p147 = scmp.eq.s32.totalorder %s24, 1
      %p148 = por %p146, %p147
      %p150 = scmp.ne.s32.totalorder %s135, %s149
      %p151 = scmp.eq.s32.totalorder %s24, 0
      %p152 = por %p150, %p151
      %s154 = sadd.s32 %s153, 1
      %p157 = scmp.eq.s32.totalorder %s18, 1
      %p158 = scmp.ne.s32.totalorder %s153, %s155
      %p159 = scmp.eq.s32.totalorder %s18, 0
      %p160 = por %p158, %p159
      %p161 = scmp.ne.s32.totalorder %s153, %s155
      %p162 = scmp.eq.s32.totalorder %s23, 1
      %p163 = por %p161, %p162
      %p164 = scmp.ne.s32.totalorder %s155, %s156
      %p165 = scmp.eq.s32.totalorder %s23, 0
      %p166 = por %p164, %p165
      %p167 = scmp.ne.s32.totalorder %s155, %s156
      %p168 = scmp.eq.s32.totalorder %s24, 1
      %p169 = por %p167, %p168
      %p171 = scmp.ne.s32.totalorder %s156, %s170
      %p172 = scmp.eq.s32.totalorder %s24, 0
      %p173 = por %p171, %p172
      %s175 = sadd.s32 %s174, 1
      %p178 = scmp.eq.s32.totalorder %s18, 1
      %p179 = scmp.ne.s32.totalorder %s174, %s176
      %p180 = scmp.eq.s32.totalorder %s18, 0
      %p181 = por %p179, %p180
      %p182 = scmp.ne.s32.totalorder %s174, %s176
      %p183 = scmp.eq.s32.totalorder %s23, 1
      %p184 = por %p182, %p183
      %p185 = scmp.ne.s32.totalorder %s176, %s177
      %p186 = scmp.eq.s32.totalorder %s23, 0
      %p187 = por %p185, %p186
      %p188 = scmp.ne.s32.totalorder %s176, %s177
      %p189 = scmp.eq.s32.totalorder %s24, 1
      %p190 = por %p188, %p189
      %p192 = scmp.ne.s32.totalorder %s177, %s191
      %p193 = scmp.eq.s32.totalorder %s24, 0
      %p194 = por %p192, %p193
      %s196 = sadd.s32 %s195, 1
      %p199 = scmp.eq.s32.totalorder %s18, 1
      %p200 = scmp.ne.s32.totalorder %s195, %s197
      %p201 = scmp.eq.s32.totalorder %s18, 0
      %p202 = por %p200, %p201
      %p203 = scmp.ne.s32.totalorder %s195, %s197
      %p204 = scmp.eq.s32.totalorder %s23, 1
      %p205 = por %p203, %p204
      %p206 = scmp.ne.s32.totalorder %s197, %s198
      %p207 = scmp.eq.s32.totalorder %s23, 0
      %p208 = por %p206, %p207
      %p209 = scmp.ne.s32.totalorder %s197, %s198
      %p210 = scmp.eq.s32.totalorder %s24, 1
      %p211 = por %p209, %p210
      %p213 = scmp.ne.s32.totalorder %s198, %s212
      %p214 = scmp.eq.s32.totalorder %s24, 0
      %p215 = por %p213, %p214
      %s216 = ssub.s32 %s25, %s37
      %s217 = ssub.s32 %s26, %s33
      %s218 = sor.u32 %s216, %s217
      %p219 = scmp.eq.s32.totalorder %s218, 0
      %s221 = sadd.s32 %s220, 1
      %s222 = scalar_select %p219, %s220, %s221
      %p225 = pneg %p219
      %p226 = scmp.eq.s32.totalorder %s18, 1
      %p227 = por %p225, %p226
      %p228 = scmp.ne.s32.totalorder %s220, %s223
      %p229 = scmp.eq.s32.totalorder %s18, 0
      %p230 = por %p228, %p229
      %p231 = scmp.ne.s32.totalorder %s220, %s223
      %p232 = scmp.eq.s32.totalorder %s23, 1
      %p233 = por %p231, %p232
      %p234 = scmp.ne.s32.totalorder %s223, %s224
      %p235 = scmp.eq.s32.totalorder %s23, 0
      %p236 = por %p234, %p235
      %p237 = scmp.ne.s32.totalorder %s223, %s224
      %p238 = scmp.eq.s32.totalorder %s24, 1
      %p239 = por %p237, %p238
      %p241 = scmp.ne.s32.totalorder %s224, %s240
      %p242 = scmp.eq.s32.totalorder %s24, 0
      %p243 = por %p241, %p242
      %p244 = scmp.le.s32.totalorder 1, %s18
      %p245 = scmp.lt.s32.totalorder %s18, 3
      %p246 = pnand %p244, %p245
      %p247 = pneg %p246
      // Predicated region
      $region9: #{tpu_custom_call.1} parent=5 // pred_check
        _
      $region10: #{tpu_custom_call.1} parent=5 // pred_check_branch
        %249 = sbr.rel (%p246) target = $region12
      $region11: #{tpu_custom_call.1} parent=5 // pred_region
        %s250 = ssub.s32 %s18, 1
        // Predicated region
        $region13: #{tpu_custom_call.1} parent=11 // pred_check
          %p251 = pneg %p103
        $region14: #{tpu_custom_call.1} parent=11 // pred_check_branch
          %253 = sbr.rel (%p251) target = $region16
        $region15: #{tpu_custom_call.1} parent=11 // pred_region
          _
        $region16: #{tpu_custom_call.1} parent=11 // pred_fallthru
          _
        // Predicated region
        $region17: #{tpu_custom_call.1} parent=11 // pred_check
          %p254 = pneg %p124
        $region18: #{tpu_custom_call.1} parent=11 // pred_check_branch
          %256 = sbr.rel (%p254) target = $region20
        $region19: #{tpu_custom_call.1} parent=11 // pred_region
          _
        $region20: #{tpu_custom_call.1} parent=11 // pred_fallthru
          _
        // Predicated region
        $region21: #{tpu_custom_call.1} parent=11 // pred_check
          %p257 = pneg %p145
        $region22: #{tpu_custom_call.1} parent=11 // pred_check_branch
          %259 = sbr.rel (%p257) target = $region24
        $region23: #{tpu_custom_call.1} parent=11 // pred_region
          %s261 = ssub.s32 9216, 9216
          %262 = vsyncadd [#allocation4], %s261
          %s263 = sshll.u32 [#allocation3], 4
          %s264 = int_to_ptr.vmem [resolvable:$true] %s263
          %269 = dma.hbm_to_vmem [thread:$0]  %s4, 9216, %s264, [#allocation4], 64, 64, 4
        $region24: #{tpu_custom_call.1} parent=11 // pred_fallthru
          _
        // Predicated region
        $region25: #{tpu_custom_call.1} parent=11 // pred_check
          %p270 = pneg %p166
        $region26: #{tpu_custom_call.1} parent=11 // pred_check_branch
          %272 = sbr.rel (%p270) target = $region28
        $region27: #{tpu_custom_call.1} parent=11 // pred_region
          _
        $region28: #{tpu_custom_call.1} parent=11 // pred_fallthru
          _
        // Predicated region
        $region29: #{tpu_custom_call.1} parent=11 // pred_check
          %p273 = pneg %p187
        $region30: #{tpu_custom_call.1} parent=11 // pred_check_branch
          %275 = sbr.rel (%p273) target = $region32
        $region31: #{tpu_custom_call.1} parent=11 // pred_region
          _
        $region32: #{tpu_custom_call.1} parent=11 // pred_fallthru
          _
        // Predicated region
        $region33: #{tpu_custom_call.1} parent=11 // pred_check
          %p276 = pneg %p208
        $region34: #{tpu_custom_call.1} parent=11 // pred_check_branch
          %278 = sbr.rel (%p276) target = $region36
        $region35: #{tpu_custom_call.1} parent=11 // pred_region
          _
        $region36: #{tpu_custom_call.1} parent=11 // pred_fallthru
          _
      $region12: #{tpu_custom_call.1} parent=5 // pred_fallthru
        _
      %p279 = scmp.lt.s32.totalorder %s18, 2
      // Predicated region
      $region37: #{tpu_custom_call.1} parent=5 // pred_check
        %p280 = pneg %p279
      $region38: #{tpu_custom_call.1} parent=5 // pred_check_branch
        %282 = sbr.rel (%p280) target = $region40
      $region39: #{tpu_custom_call.1} parent=5 // pred_region
        // Predicated region
        $region41: #{tpu_custom_call.1} parent=39 // pred_check
          %p283 = pneg %p50
        $region42: #{tpu_custom_call.1} parent=39 // pred_check_branch
          %285 = sbr.rel (%p283) target = $region44
        $region43: #{tpu_custom_call.1} parent=39 // pred_region
          %p286 = scmp.lt.s32.totalorder %s25, 1
          %s287 = scalar_select %p286, %s25, 1
          %s288 = smul.addr %s287, 36
          %s289 = smul.addr %s288, 4
          %s290 = scalar_lea.vmem %s0, %s289
        $region44: #{tpu_custom_call.1} parent=39 // pred_fallthru
          _
        // Predicated region
        $region45: #{tpu_custom_call.1} parent=39 // pred_check
          %p291 = pneg %p76
        $region46: #{tpu_custom_call.1} parent=39 // pred_check_branch
          %293 = sbr.rel (%p291) target = $region48
        $region47: #{tpu_custom_call.1} parent=39 // pred_region
          %p294 = scmp.lt.s32.totalorder %s25, 1
          %s295 = scalar_select %p294, %s25, 1
          %s296 = smul.addr %s295, 36
          %s297 = smul.addr %s296, 4
          %s298 = scalar_lea.vmem %s1, %s297
        $region48: #{tpu_custom_call.1} parent=39 // pred_fallthru
          _
      $region40: #{tpu_custom_call.1} parent=5 // pred_fallthru
        _
      %p299 = scmp.le.s32.totalorder 1, %s18
      %p300 = scmp.lt.s32.totalorder %s18, 3
      %p301 = pnand %p299, %p300
      %p302 = pneg %p301
      // Predicated region
      $region49: #{tpu_custom_call.1} parent=5 // pred_check
        _
      $region50: #{tpu_custom_call.1} parent=5 // pred_check_branch
        %304 = sbr.rel (%p301) target = $region52
      $region51: #{tpu_custom_call.1} parent=5 // pred_region
        %s305 = ssub.s32 %s18, 1
        // Predicated region
        $region53: #{tpu_custom_call.1} parent=51 // pred_check
          %p306 = pneg %p145
        $region54: #{tpu_custom_call.1} parent=51 // pred_check_branch
          %308 = sbr.rel (%p306) target = $region56
        $region55: #{tpu_custom_call.1} parent=51 // pred_region
          %309 = dma.done [#allocation4], 9216
        $region56: #{tpu_custom_call.1} parent=51 // pred_fallthru
          _
        %p310 = scmp.lt.s32.totalorder %s27, 1
        %s311 = scalar_select %p310, %s27, 1
        %s312 = smul.addr %s311, 36
        %s313 = smul.addr %s312, 4
        %s314 = scalar_lea.vmem %s0, %s313
        %p315 = pneg %p56
        %p316 = pneg %p53
        %p317 = scmp.lt.s32.totalorder %s27, 1
        %s318 = scalar_select %p317, %s27, 1
        %s319 = smul.addr %s318, 36
        %s320 = smul.addr %s319, 4
        %s321 = scalar_lea.vmem %s1, %s320
        %p322 = pneg %p82
        %p323 = pneg %p79
        %p324 = pneg %p103
        %p325 = pneg %p100
        %p326 = pneg %p124
        %p327 = pneg %p121
        %p328 = pneg %p145
        %p329 = pneg %p142
        %p330 = pneg %p166
        %p331 = pneg %p163
        %p332 = pneg %p187
        %p333 = pneg %p184
        %p334 = pneg %p208
        %p335 = pneg %p205
        %p336 = pneg %p236
        %p337 = pneg %p233
        %s338 = sand.u32 %s223, 1
        %s339 = scalar_lea.sflag [#allocation5], %s338
        %s340 = sand.u32 %s223, 1
        %s341 = smul.addr %s340, 32
        %s342 = scalar_lea.vmem [#allocation6], %s341
        %p343 = scmp.lt.s32.totalorder %s27, 1
        %s344 = scalar_select %p343, %s27, 1
        %s345 = smul.addr %s344, 36
        %s346 = smul.addr %s345, 4
        %s347 = scalar_lea.vmem %s0, %s346
        %p348 = scmp.lt.s32.totalorder %s27, 1
        %s349 = scalar_select %p348, %s27, 1
        %s350 = smul.addr %s349, 36
        %s351 = smul.addr %s350, 4
        %s352 = scalar_lea.vmem %s1, %s351
        %s353 = smul.u32 8, %s28
        %s355 = smul.u32 %s28, 8
        %v356 = vld [vmem:[%s3] sm:$0x1]
        %v357 = vld [vmem:[%s5] sm:$0x1]
        %vm358 = vcmask 1040384
        %vm359 = vsmask.f32 256
        %vm360 = vmand %vm358, %vm359
        %v361 = vld [vmem:[#allocation2] sm:$0x1]
        %v362 = vsel %vm360, 0, %v361
        %363 = vst [vmem:[#allocation2] sm:$0x1] %v362
        %v364 = vld [vmem:[#allocation2 + $0x8] sm:$0x1]
        %v365 = vsel %vm360, 0, %v364
        %366 = vst [vmem:[#allocation2 + $0x8] sm:$0x1] %v365
        %v367 = vld [vmem:[#allocation2 + $0x10] sm:$0x1]
        %v368 = vsel %vm360, 0, %v367
        %369 = vst [vmem:[#allocation2 + $0x10] sm:$0x1] %v368
        %v370 = vld [vmem:[#allocation2 + $0x18] sm:$0x1]
        %v371 = vsel %vm360, 0, %v370
        %372 = vst [vmem:[#allocation2 + $0x18] sm:$0x1] %v371
        %v373 = vld [vmem:[#allocation2 + $0x20] sm:$0x1]
        %v374 = vsel %vm360, 0, %v373
        %375 = vst [vmem:[#allocation2 + $0x20] sm:$0x1] %v374
        %v376 = vld [vmem:[#allocation2 + $0x28] sm:$0x1]
        %v377 = vsel %vm360, 0, %v376
        %378 = vst [vmem:[#allocation2 + $0x28] sm:$0x1] %v377
        %v379 = vld [vmem:[#allocation2 + $0x30] sm:$0x1]
        %v380 = vsel %vm360, 0, %v379
        %381 = vst [vmem:[#allocation2 + $0x30] sm:$0x1] %v380
        %v382 = vld [vmem:[#allocation2 + $0x38] sm:$0x1]
        %v383 = vsel %vm360, 0, %v382
        %384 = vst [vmem:[#allocation2 + $0x38] sm:$0x1] %v383
        %v385 = vld [vmem:[#allocation2 + $0x40] sm:$0x1]
        %v386 = vsel %vm360, 0, %v385
        %387 = vst [vmem:[#allocation2 + $0x40] sm:$0x1] %v386
        %v388 = vld [vmem:[#allocation2 + $0x48] sm:$0x1]
        %v389 = vsel %vm360, 0, %v388
        %390 = vst [vmem:[#allocation2 + $0x48] sm:$0x1] %v389
        %vm391 = vsmask.f32 7938
        %vm392 = vmand %vm358, %vm391
        %v393 = vld [vmem:[#allocation2 + $0x4] sm:$0x1]
        %v394 = vsel %vm392, 0, %v393
        %395 = vst [vmem:[#allocation2 + $0x4] sm:$0x1] %v394
        %v396 = vld [vmem:[#allocation2 + $0xc] sm:$0x1]
        %v397 = vsel %vm392, 0, %v396
        %398 = vst [vmem:[#allocation2 + $0xc] sm:$0x1] %v397
        %v399 = vld [vmem:[#allocation2 + $0x14] sm:$0x1]
        %v400 = vsel %vm392, 0, %v399
        %401 = vst [vmem:[#allocation2 + $0x14] sm:$0x1] %v400
        %v402 = vld [vmem:[#allocation2 + $0x1c] sm:$0x1]
        %v403 = vsel %vm392, 0, %v402
        %404 = vst [vmem:[#allocation2 + $0x1c] sm:$0x1] %v403
        %v405 = vld [vmem:[#allocation2 + $0x24] sm:$0x1]
        %v406 = vsel %vm392, 0, %v405
        %407 = vst [vmem:[#allocation2 + $0x24] sm:$0x1] %v406
        %v408 = vld [vmem:[#allocation2 + $0x2c] sm:$0x1]
        %v409 = vsel %vm392, 0, %v408
        %410 = vst [vmem:[#allocation2 + $0x2c] sm:$0x1] %v409
        %v411 = vld [vmem:[#allocation2 + $0x34] sm:$0x1]
        %v412 = vsel %vm392, 0, %v411
        %413 = vst [vmem:[#allocation2 + $0x34] sm:$0x1] %v412
        %v414 = vld [vmem:[#allocation2 + $0x3c] sm:$0x1]
        %v415 = vsel %vm392, 0, %v414
        %416 = vst [vmem:[#allocation2 + $0x3c] sm:$0x1] %v415
        %v417 = vld [vmem:[#allocation2 + $0x44] sm:$0x1]
        %v418 = vsel %vm392, 0, %v417
        %419 = vst [vmem:[#allocation2 + $0x44] sm:$0x1] %v418
        %v420 = vld [vmem:[#allocation2 + $0x4c] sm:$0x1]
        %v421 = vsel %vm392, 0, %v420
        %422 = vst [vmem:[#allocation2 + $0x4c] sm:$0x1] %v421
        %vm423 = vcmask 1043456
        %vm424 = vmand %vm423, %vm391
        %v425 = vld [vmem:[#allocation2] sm:$0xf]
        %v426 = vsel %vm424, 0, %v425
        %427 = vst [vmem:[#allocation2] sm:$0xf] %v426
        %v428 = vld [vmem:[#allocation2 + $0x4] sm:$0x1]
        %v429 = vsel %vm360, 0, %v428
        %430 = vst [vmem:[#allocation2 + $0x4] sm:$0x1] %v429
        %s431 = scalar_lea.vmem [#allocation2], 72
        %v432 = vld [vmem:[%s431] sm:$0xf]
        %v433 = vsel %vm424, 0, %v432
        %434 = vst [vmem:[%s431] sm:$0xf] %v433
        %v435 = vld [vmem:[%s431 + $0x4] sm:$0x1]
        %v436 = vsel %vm360, 0, %v435
        %437 = vst [vmem:[%s431 + $0x4] sm:$0x1] %v436
        %s438 = smul.u32 %s355, 4
        %s439 = smul.addr %s438, 4
        %s440 = scalar_lea.vmem %s347, %s439
        %v441 = vld [vmem:[%s440] sm:$0xf]
        %v442 = vld [vmem:[%s440 + $0x10] sm:$0xf]
        %v443 = vld [vmem:[%s440 + $0x20] sm:$0xf]
        %v444 = vld [vmem:[%s440 + $0x30] sm:$0xf]
        %v445 = vld [vmem:[%s440 + $0x40] sm:$0xf]
        %v446 = vld [vmem:[%s440 + $0x50] sm:$0xf]
        %v447 = vld [vmem:[%s440 + $0x60] sm:$0xf]
        %v448 = vld [vmem:[%s440 + $0x70] sm:$0xf]
        %v449 = vld [vmem:[%s2] sm:$0xf]
        %v450 = vld [vmem:[%s2 + $0x4] sm:$0xf]
        %v451 = vld [vmem:[%s2 + $0x8] sm:$0xf]
        %v452 = vld [vmem:[%s2 + $0xc] sm:$0xf]
        %v453 = vld [vmem:[%s2 + $0x10] sm:$0xf]
        %v454 = vld [vmem:[%s2 + $0x14] sm:$0xf]
        %v455 = vld [vmem:[%s2 + $0x18] sm:$0xf]
        %v456 = vld [vmem:[%s2 + $0x1c] sm:$0xf]
        %v457 = vld [vmem:[%s2 + $0x20] sm:$0xf]
        %v458 = vld [vmem:[%s2 + $0x24] sm:$0xf]
        %v459 = vld [vmem:[%s2 + $0x28] sm:$0xf]
        %v460 = vld [vmem:[%s2 + $0x2c] sm:$0xf]
        %v461 = vld [vmem:[%s2 + $0x30] sm:$0xf]
        %v462 = vld [vmem:[%s2 + $0x34] sm:$0xf]
        %v463 = vld [vmem:[%s2 + $0x38] sm:$0xf]
        %v464 = vld [vmem:[%s2 + $0x3c] sm:$0xf]
        %v465 = vld [vmem:[%s440 + $0x4] sm:$0xf]
        %v466 = vld [vmem:[%s440 + $0x14] sm:$0xf]
        %v467 = vld [vmem:[%s440 + $0x24] sm:$0xf]
        %v468 = vld [vmem:[%s440 + $0x34] sm:$0xf]
        %v469 = vld [vmem:[%s440 + $0x44] sm:$0xf]
        %v470 = vld [vmem:[%s440 + $0x54] sm:$0xf]
        %v471 = vld [vmem:[%s440 + $0x64] sm:$0xf]
        %v472 = vld [vmem:[%s440 + $0x74] sm:$0xf]
        %s473 = scalar_lea.vmem %s2, 64
        %v474 = vld [vmem:[%s473] sm:$0xf]
        %v475 = vld [vmem:[%s473 + $0x4] sm:$0xf]
        %v476 = vld [vmem:[%s473 + $0x8] sm:$0xf]
        %v477 = vld [vmem:[%s473 + $0xc] sm:$0xf]
        %v478 = vld [vmem:[%s473 + $0x10] sm:$0xf]
        %v479 = vld [vmem:[%s473 + $0x14] sm:$0xf]
        %v480 = vld [vmem:[%s473 + $0x18] sm:$0xf]
        %v481 = vld [vmem:[%s473 + $0x1c] sm:$0xf]
        %v482 = vld [vmem:[%s473 + $0x20] sm:$0xf]
        %v483 = vld [vmem:[%s473 + $0x24] sm:$0xf]
        %v484 = vld [vmem:[%s473 + $0x28] sm:$0xf]
        %v485 = vld [vmem:[%s473 + $0x2c] sm:$0xf]
        %v486 = vld [vmem:[%s473 + $0x30] sm:$0xf]
        %v487 = vld [vmem:[%s473 + $0x34] sm:$0xf]
        %v488 = vld [vmem:[%s473 + $0x38] sm:$0xf]
        %v489 = vld [vmem:[%s473 + $0x3c] sm:$0xf]
        %v498 = vunpack.c.l.b16 %v465
        %v499 = vunpack.c.l.b16 %v466
        %v500 = vunpack.c.l.b16 %v467
        %v501 = vunpack.c.l.b16 %v468
        %v502 = vunpack.c.l.b16 %v469
        %v503 = vunpack.c.l.b16 %v470
        %v504 = vunpack.c.l.b16 %v471
        %v505 = vunpack.c.l.b16 %v472
        %v506 = vpack.c.b16 %v499, %v498
        %v507 = vpack.c.b16 %v501, %v500
        %v508 = vpack.c.b16 %v503, %v502
        %v509 = vpack.c.b16 %v505, %v504
        %v530 = vunpack.c.l.b16 %v474
        %v531 = vunpack.c.l.b16 %v475
        %v532 = vunpack.c.l.b16 %v476
        %v533 = vunpack.c.l.b16 %v477
        %v534 = vunpack.c.l.b16 %v478
        %v535 = vunpack.c.l.b16 %v479
        %v536 = vunpack.c.l.b16 %v480
        %v537 = vunpack.c.l.b16 %v481
        %v538 = vunpack.c.l.b16 %v482
        %v539 = vunpack.c.l.b16 %v483
        %v540 = vunpack.c.l.b16 %v484
        %v541 = vunpack.c.l.b16 %v485
        %v542 = vunpack.c.l.b16 %v486
        %v543 = vunpack.c.l.b16 %v487
        %v544 = vunpack.c.l.b16 %v488
        %v545 = vunpack.c.l.b16 %v489
        %v546 = vpack.c.b16 %v531, %v530
        %v547 = vpack.c.b16 %v533, %v532
        %v548 = vpack.c.b16 %v535, %v534
        %v549 = vpack.c.b16 %v537, %v536
        %v550 = vpack.c.b16 %v539, %v538
        %v551 = vpack.c.b16 %v541, %v540
        %v552 = vpack.c.b16 %v543, %v542
        %v553 = vpack.c.b16 %v545, %v544
        %562 = vmatprep.subr.bf16.mxu0 0
        %563 = vmatpush1.bf16.msra.mxu0 %v546
        %564 = vmatprep.subr.bf16.mxu0 0
        %565 = vmatpush1.bf16.msra.mxu0 %v547
        %566 = vmatprep.subr.bf16.mxu0 0
        %567 = vmatpush1.bf16.msra.mxu0 %v548
        %568 = vmatprep.subr.bf16.mxu0 0
        %569 = vmatpush1.bf16.msra.mxu0 %v549
        %570 = vmatprep.subr.bf16.mxu0 0
        %571 = vmatpush1.bf16.msra.mxu0 %v550
        %572 = vmatprep.subr.bf16.mxu0 0
        %573 = vmatpush1.bf16.msra.mxu0 %v551
        %574 = vmatprep.subr.bf16.mxu0 0
        %575 = vmatpush1.bf16.msra.mxu0 %v552
        %576 = vmatprep.subr.bf16.mxu0 0
        %577 = vmatpush1.bf16.msra.mxu0 %v553
        %578 = vmatprep.subr.bf16.mxu0 0
        %579 = vmatpush1.bf16.msra.mxu0 0
        %580 = vmatprep.subr.bf16.mxu0 0
        %581 = vmatpush1.bf16.msra.mxu0 0
        %582 = vmatprep.subr.bf16.mxu0 0
        %583 = vmatpush1.bf16.msra.mxu0 0
        %584 = vmatprep.subr.bf16.mxu0 0
        %585 = vmatpush1.bf16.msra.mxu0 0
        %586 = vmatprep.subr.bf16.mxu0 0
        %587 = vmatpush1.bf16.msra.mxu0 0
        %588 = vmatprep.subr.bf16.mxu0 0
        %589 = vmatpush1.bf16.msra.mxu0 0
        %590 = vmatprep.subr.bf16.mxu0 0
        %591 = vmatpush1.bf16.msra.mxu0 0
        %592 = vmatprep.subr.bf16.mxu0 0
        %593 = vmatpush1.bf16.msra.mxu0 0
        %594 = vmatprep.mubr.bf16.mxu0 0
        %595 = vmatmul.mubr.bf16.gmra.mrb[0].mxu0 %v506
        %v596 = vpop.f32.mrb[0].mxu0
        %v597 = vadd.f32 0.0, %v596
        %v598 = vpop.f32.mrb[0].mxu0
        %v599 = vpop.f32.mrb[0].mxu0
        %v600 = vadd.f32 0.0, %v599
        %v601 = vpop.f32.mrb[0].mxu0
        %602 = vmatprep.mubr.bf16.mxu0 0
        %603 = vmatmul.mubr.bf16.gmra.mrb[0].mxu0 %v507
        %v604 = vpop.f32.mrb[0].mxu0
        %v605 = vadd.f32 0.0, %v604
        %v606 = vpop.f32.mrb[0].mxu0
        %v607 = vpop.f32.mrb[0].mxu0
        %v608 = vadd.f32 0.0, %v607
        %v609 = vpop.f32.mrb[0].mxu0
        %610 = vmatprep.mubr.bf16.mxu0 0
        %611 = vmatmul.mubr.bf16.gmra.mrb[0].mxu0 %v508
        %v612 = vpop.f32.mrb[0].mxu0
        %v613 = vadd.f32 0.0, %v612
        %v614 = vpop.f32.mrb[0].mxu0
        %v615 = vpop.f32.mrb[0].mxu0
        %v616 = vadd.f32 0.0, %v615
        %v617 = vpop.f32.mrb[0].mxu0
        %618 = vmatprep.mubr.bf16.mxu0 0
        %619 = vmatmul.mubr.bf16.gmra.mrb[0].mxu0 %v509
        %v620 = vpop.f32.mrb[0].mxu0
        %v621 = vadd.f32 0.0, %v620
        %v622 = vpop.f32.mrb[0].mxu0
        %v623 = vpop.f32.mrb[0].mxu0
        %v624 = vadd.f32 0.0, %v623
        %v625 = vpop.f32.mrb[0].mxu0
        %626 = vdwg.mxu0
        %v635 = vunpack.c.l.b16 %v441
        %v636 = vunpack.c.l.b16 %v442
        %v637 = vunpack.c.l.b16 %v443
        %v638 = vunpack.c.l.b16 %v444
        %v639 = vunpack.c.l.b16 %v445
        %v640 = vunpack.c.l.b16 %v446
        %v641 = vunpack.c.l.b16 %v447
        %v642 = vunpack.c.l.b16 %v448
        %v643 = vpack.c.b16 %v636, %v635
        %v644 = vpack.c.b16 %v638, %v637
        %v645 = vpack.c.b16 %v640, %v639
        %v646 = vpack.c.b16 %v642, %v641
        %v667 = vunpack.c.l.b16 %v449
        %v668 = vunpack.c.l.b16 %v450
        %v669 = vunpack.c.l.b16 %v451
        %v670 = vunpack.c.l.b16 %v452
        %v671 = vunpack.c.l.b16 %v453
        %v672 = vunpack.c.l.b16 %v454
        %v673 = vunpack.c.l.b16 %v455
        %v674 = vunpack.c.l.b16 %v456
        %v675 = vunpack.c.l.b16 %v457
        %v676 = vunpack.c.l.b16 %v458
        %v677 = vunpack.c.l.b16 %v459
        %v678 = vunpack.c.l.b16 %v460
        %v679 = vunpack.c.l.b16 %v461
        %v680 = vunpack.c.l.b16 %v462
        %v681 = vunpack.c.l.b16 %v463
        %v682 = vunpack.c.l.b16 %v464
        %v683 = vpack.c.b16 %v668, %v667
        %v684 = vpack.c.b16 %v670, %v669
        %v685 = vpack.c.b16 %v672, %v671
        %v686 = vpack.c.b16 %v674, %v673
        %v687 = vpack.c.b16 %v676, %v675
        %v688 = vpack.c.b16 %v678, %v677
        %v689 = vpack.c.b16 %v680, %v679
        %v690 = vpack.c.b16 %v682, %v681
        %699 = vmatprep.subr.bf16.mxu0 0
        %700 = vmatpush1.bf16.msra.mxu0 %v683
        %701 = vmatprep.subr.bf16.mxu0 0
        %702 = vmatpush1.bf16.msra.mxu0 %v684
        %703 = vmatprep.subr.bf16.mxu0 0
        %704 = vmatpush1.bf16.msra.mxu0 %v685
        %705 = vmatprep.subr.bf16.mxu0 0
        %706 = vmatpush1.bf16.msra.mxu0 %v686
        %707 = vmatprep.subr.bf16.mxu0 0
        %708 = vmatpush1.bf16.msra.mxu0 %v687
        %709 = vmatprep.subr.bf16.mxu0 0
        %710 = vmatpush1.bf16.msra.mxu0 %v688
        %711 = vmatprep.subr.bf16.mxu0 0
        %712 = vmatpush1.bf16.msra.mxu0 %v689
        %713 = vmatprep.subr.bf16.mxu0 0
        %714 = vmatpush1.bf16.msra.mxu0 %v690
        %715 = vmatprep.subr.bf16.mxu0 0
        %716 = vmatpush1.bf16.msra.mxu0 0
        %717 = vmatprep.subr.bf16.mxu0 0
        %718 = vmatpush1.bf16.msra.mxu0 0
        %719 = vmatprep.subr.bf16.mxu0 0
        %720 = vmatpush1.bf16.msra.mxu0 0
        %721 = vmatprep.subr.bf16.mxu0 0
        %722 = vmatpush1.bf16.msra.mxu0 0
        %723 = vmatprep.subr.bf16.mxu0 0
        %724 = vmatpush1.bf16.msra.mxu0 0
        %725 = vmatprep.subr.bf16.mxu0 0
        %726 = vmatpush1.bf16.msra.mxu0 0
        %727 = vmatprep.subr.bf16.mxu0 0
        %728 = vmatpush1.bf16.msra.mxu0 0
        %729 = vmatprep.subr.bf16.mxu0 0
        %730 = vmatpush1.bf16.msra.mxu0 0
        %731 = vmatprep.mubr.bf16.mxu0 0
        %732 = vmatmul.mubr.bf16.gmra.mrb[0].mxu0 %v643
        %v733 = vpop.f32.mrb[0].mxu0
        %v734 = vadd.f32 %v597, %v733
        %v735 = vpop.f32.mrb[0].mxu0
        %v736 = vpop.f32.mrb[0].mxu0
        %v737 = vadd.f32 %v600, %v736
        %v738 = vpop.f32.mrb[0].mxu0
        %739 = vmatprep.mubr.bf16.mxu0 0
        %740 = vmatmul.mubr.bf16.gmra.mrb[0].mxu0 %v644
        %v741 = vpop.f32.mrb[0].mxu0
        %v742 = vadd.f32 %v605, %v741
        %v743 = vpop.f32.mrb[0].mxu0
        %v744 = vpop.f32.mrb[0].mxu0
        %v745 = vadd.f32 %v608, %v744
        %v746 = vpop.f32.mrb[0].mxu0
        %747 = vmatprep.mubr.bf16.mxu0 0
        %748 = vmatmul.mubr.bf16.gmra.mrb[0].mxu0 %v645
        %v749 = vpop.f32.mrb[0].mxu0
        %v750 = vadd.f32 %v613, %v749
        %v751 = vpop.f32.mrb[0].mxu0
        %v752 = vpop.f32.mrb[0].mxu0
        %v753 = vadd.f32 %v616, %v752
        %v754 = vpop.f32.mrb[0].mxu0
        %755 = vmatprep.mubr.bf16.mxu0 0
        %756 = vmatmul.mubr.bf16.gmra.mrb[0].mxu0 %v646
        %v757 = vpop.f32.mrb[0].mxu0
        %v758 = vadd.f32 %v621, %v757
        %v759 = vpop.f32.mrb[0].mxu0
        %v760 = vpop.f32.mrb[0].mxu0
        %v761 = vadd.f32 %v624, %v760
        %v762 = vpop.f32.mrb[0].mxu0
        %763 = vdwg.mxu0
        %v764 = vld [vmem:[%s440] sm:$0xf]
        %v765 = vld [vmem:[%s440 + $0x8] sm:$0x1]
        %v766 = vld [vmem:[%s440 + $0x10] sm:$0xf]
        %v767 = vld [vmem:[%s440 + $0x18] sm:$0x1]
        %v768 = vld [vmem:[%s440 + $0x20] sm:$0xf]
        %v769 = vld [vmem:[%s440 + $0x28] sm:$0x1]
        %v770 = vld [vmem:[%s440 + $0x30] sm:$0xf]
        %v771 = vld [vmem:[%s440 + $0x38] sm:$0x1]
        %v772 = vld [vmem:[%s440 + $0x40] sm:$0xf]
        %v773 = vld [vmem:[%s440 + $0x48] sm:$0x1]
        %v774 = vld [vmem:[%s440 + $0x50] sm:$0xf]
        %v775 = vld [vmem:[%s440 + $0x58] sm:$0x1]
        %v776 = vld [vmem:[%s440 + $0x60] sm:$0xf]
        %v777 = vld [vmem:[%s440 + $0x68] sm:$0x1]
        %v778 = vld [vmem:[%s440 + $0x70] sm:$0xf]
        %v779 = vld [vmem:[%s440 + $0x78] sm:$0x1]
        %vm780 = vsmask.f32 3328
        %vm781 = vsmask.f32 7440
        %vm782 = vmor %vm780, %vm781
        %v784 = vshrl.u32 %v764, 16
        %v786 = vrot.slane %v784, 4
        %v787 = vshll.u32 %v764, 16
        %v789 = vrot.slane %v787, 5
        %v790 = vor.u32 %v786, %v789
        %v791 = vrot.slane %v790, 4
        %v793 = vshll.u32 %v765, 16
        %v795 = vrot.slane %v793, 5
        %v796 = vsel %vm782, %v791, %v795
        %v798 = vshrl.u32 %v766, 16
        %v800 = vrot.slane %v798, 4
        %v801 = vshll.u32 %v766, 16
        %v803 = vrot.slane %v801, 5
        %v804 = vor.u32 %v800, %v803
        %v805 = vrot.slane %v804, 4
        %v807 = vshll.u32 %v767, 16
        %v809 = vrot.slane %v807, 5
        %v810 = vsel %vm782, %v805, %v809
        %v812 = vshrl.u32 %v768, 16
        %v814 = vrot.slane %v812, 4
        %v815 = vshll.u32 %v768, 16
        %v817 = vrot.slane %v815, 5
        %v818 = vor.u32 %v814, %v817
        %v819 = vrot.slane %v818, 4
        %v821 = vshll.u32 %v769, 16
        %v823 = vrot.slane %v821, 5
        %v824 = vsel %vm782, %v819, %v823
        %v826 = vshrl.u32 %v770, 16
        %v828 = vrot.slane %v826, 4
        %v829 = vshll.u32 %v770, 16
        %v831 = vrot.slane %v829, 5
        %v832 = vor.u32 %v828, %v831
        %v833 = vrot.slane %v832, 4
        %v835 = vshll.u32 %v771, 16
        %v837 = vrot.slane %v835, 5
        %v838 = vsel %vm782, %v833, %v837
        %v840 = vshrl.u32 %v772, 16
        %v842 = vrot.slane %v840, 4
        %v843 = vshll.u32 %v772, 16
        %v845 = vrot.slane %v843, 5
        %v846 = vor.u32 %v842, %v845
        %v847 = vrot.slane %v846, 4
        %v849 = vshll.u32 %v773, 16
        %v851 = vrot.slane %v849, 5
        %v852 = vsel %vm782, %v847, %v851
        %v854 = vshrl.u32 %v774, 16
        %v856 = vrot.slane %v854, 4
        %v857 = vshll.u32 %v774, 16
        %v859 = vrot.slane %v857, 5
        %v860 = vor.u32 %v856, %v859
        %v861 = vrot.slane %v860, 4
        %v863 = vshll.u32 %v775, 16
        %v865 = vrot.slane %v863, 5
        %v866 = vsel %vm782, %v861, %v865
        %v868 = vshrl.u32 %v776, 16
        %v870 = vrot.slane %v868, 4
        %v871 = vshll.u32 %v776, 16
        %v873 = vrot.slane %v871, 5
        %v874 = vor.u32 %v870, %v873
        %v875 = vrot.slane %v874, 4
        %v877 = vshll.u32 %v777, 16
        %v879 = vrot.slane %v877, 5
        %v880 = vsel %vm782, %v875, %v879
        %v882 = vshrl.u32 %v778, 16
        %v884 = vrot.slane %v882, 4
        %v885 = vshll.u32 %v778, 16
        %v887 = vrot.slane %v885, 5
        %v888 = vor.u32 %v884, %v887
        %v889 = vrot.slane %v888, 4
        %v891 = vshll.u32 %v779, 16
        %v893 = vrot.slane %v891, 5
        %v894 = vsel %vm782, %v889, %v893
        %s895 = scalar_lea.vmem %s2, 128
        %v896 = vld [vmem:[%s895] sm:$0xf]
        %v897 = vld [vmem:[%s895 + $0x4] sm:$0xf]
        %v898 = vld [vmem:[%s895 + $0x8] sm:$0xf]
        %v899 = vld [vmem:[%s895 + $0xc] sm:$0xf]
        %v900 = vld [vmem:[%s895 + $0x10] sm:$0xf]
        %v901 = vld [vmem:[%s895 + $0x14] sm:$0xf]
        %v902 = vld [vmem:[%s895 + $0x18] sm:$0xf]
        %v903 = vld [vmem:[%s895 + $0x1c] sm:$0xf]
        %v904 = vld [vmem:[%s895 + $0x20] sm:$0xf]
        %v905 = vld [vmem:[%s895 + $0x24] sm:$0xf]
        %v906 = vld [vmem:[%s895 + $0x28] sm:$0xf]
        %v907 = vld [vmem:[%s895 + $0x2c] sm:$0xf]
        %v908 = vld [vmem:[%s895 + $0x30] sm:$0xf]
        %v909 = vld [vmem:[%s895 + $0x34] sm:$0xf]
        %v910 = vld [vmem:[%s895 + $0x38] sm:$0xf]
        %v911 = vld [vmem:[%s895 + $0x3c] sm:$0xf]
        %v912 = vunpack.c.l.b16 %v796
        %v913 = vunpack.c.l.b16 %v810
        %v914 = vunpack.c.l.b16 %v824
        %v915 = vunpack.c.l.b16 %v838
        %v916 = vunpack.c.l.b16 %v852
        %v917 = vunpack.c.l.b16 %v866
        %v918 = vunpack.c.l.b16 %v880
        %v919 = vunpack.c.l.b16 %v894
        %v920 = vpack.c.b16 %v913, %v912
        %v921 = vpack.c.b16 %v915, %v914
        %v922 = vpack.c.b16 %v917, %v916
        %v923 = vpack.c.b16 %v919, %v918
        %v944 = vunpack.c.l.b16 %v896
        %v945 = vunpack.c.l.b16 %v897
        %v946 = vunpack.c.l.b16 %v898
        %v947 = vunpack.c.l.b16 %v899
        %v948 = vunpack.c.l.b16 %v900
        %v949 = vunpack.c.l.b16 %v901
        %v950 = vunpack.c.l.b16 %v902
        %v951 = vunpack.c.l.b16 %v903
        %v952 = vunpack.c.l.b16 %v904
        %v953 = vunpack.c.l.b16 %v905
        %v954 = vunpack.c.l.b16 %v906
        %v955 = vunpack.c.l.b16 %v907
        %v956 = vunpack.c.l.b16 %v908
        %v957 = vunpack.c.l.b16 %v909
        %v958 = vunpack.c.l.b16 %v910
        %v959 = vunpack.c.l.b16 %v911
        %v960 = vpack.c.b16 %v945, %v944
        %v961 = vpack.c.b16 %v947, %v946
        %v962 = vpack.c.b16 %v949, %v948
        %v963 = vpack.c.b16 %v951, %v950
        %v964 = vpack.c.b16 %v953, %v952
        %v965 = vpack.c.b16 %v955, %v954
        %v966 = vpack.c.b16 %v957, %v956
        %v967 = vpack.c.b16 %v959, %v958
        %976 = vmatprep.subr.bf16.mxu0 0
        %977 = vmatpush1.bf16.msra.mxu0 %v960
        %978 = vmatprep.subr.bf16.mxu0 0
        %979 = vmatpush1.bf16.msra.mxu0 %v961
        %980 = vmatprep.subr.bf16.mxu0 0
        %981 = vmatpush1.bf16.msra.mxu0 %v962
        %982 = vmatprep.subr.bf16.mxu0 0
        %983 = vmatpush1.bf16.msra.mxu0 %v963
        %984 = vmatprep.subr.bf16.mxu0 0
        %985 = vmatpush1.bf16.msra.mxu0 %v964
        %986 = vmatprep.subr.bf16.mxu0 0
        %987 = vmatpush1.bf16.msra.mxu0 %v965
        %988 = vmatprep.subr.bf16.mxu0 0
        %989 = vmatpush1.bf16.msra.mxu0 %v966
        %990 = vmatprep.subr.bf16.mxu0 0
        %991 = vmatpush1.bf16.msra.mxu0 %v967
        %992 = vmatprep.subr.bf16.mxu0 0
        %993 = vmatpush1.bf16.msra.mxu0 0
        %994 = vmatprep.subr.bf16.mxu0 0
        %995 = vmatpush1.bf16.msra.mxu0 0
        %996 = vmatprep.subr.bf16.mxu0 0
        %997 = vmatpush1.bf16.msra.mxu0 0
        %998 = vmatprep.subr.bf16.mxu0 0
        %999 = vmatpush1.bf16.msra.mxu0 0
        %1000 = vmatprep.subr.bf16.mxu0 0
        %1001 = vmatpush1.bf16.msra.mxu0 0
        %1002 = vmatprep.subr.bf16.mxu0 0
        %1003 = vmatpush1.bf16.msra.mxu0 0
        %1004 = vmatprep.subr.bf16.mxu0 0
        %1005 = vmatpush1.bf16.msra.mxu0 0
        %1006 = vmatprep.subr.bf16.mxu0 0
        %1007 = vmatpush1.bf16.msra.mxu0 0
        %1008 = vmatprep.mubr.bf16.mxu0 0
        %1009 = vmatmul.mubr.bf16.gmra.mrb[0].mxu0 %v920
        %v1010 = vpop.f32.mrb[0].mxu0
        %v1011 = vadd.f32 0.0, %v1010
        %v1012 = vpop.f32.mrb[0].mxu0
        %v1013 = vpop.f32.mrb[0].mxu0
        %v1014 = vadd.f32 0.0, %v1013
        %v1015 = vpop.f32.mrb[0].mxu0
        %1016 = vmatprep.mubr.bf16.mxu0 0
        %1017 = vmatmul.mubr.bf16.gmra.mrb[0].mxu0 %v921
        %v1018 = vpop.f32.mrb[0].mxu0
        %v1019 = vadd.f32 0.0, %v1018
        %v1020 = vpop.f32.mrb[0].mxu0
        %v1021 = vpop.f32.mrb[0].mxu0
        %v1022 = vadd.f32 0.0, %v1021
        %v1023 = vpop.f32.mrb[0].mxu0
        %1024 = vmatprep.mubr.bf16.mxu0 0
        %1025 = vmatmul.mubr.bf16.gmra.mrb[0].mxu0 %v922
        %v1026 = vpop.f32.mrb[0].mxu0
        %v1027 = vadd.f32 0.0, %v1026
        %v1028 = vpop.f32.mrb[0].mxu0
        %v1029 = vpop.f32.mrb[0].mxu0
        %v1030 = vadd.f32 0.0, %v1029
        %v1031 = vpop.f32.mrb[0].mxu0
        %1032 = vmatprep.mubr.bf16.mxu0 0
        %1033 = vmatmul.mubr.bf16.gmra.mrb[0].mxu0 %v923
        %v1034 = vpop.f32.mrb[0].mxu0
        %v1035 = vadd.f32 0.0, %v1034
        %v1036 = vpop.f32.mrb[0].mxu0
        %v1037 = vpop.f32.mrb[0].mxu0
        %v1038 = vadd.f32 0.0, %v1037
        %v1039 = vpop.f32.mrb[0].mxu0
        %1040 = vdwg.mxu0
        %v1041 = vadd.f32 %v734, %v1011
        %v1042 = vadd.f32 %v737, %v1014
        %v1043 = vadd.f32 %v742, %v1019
        %v1044 = vadd.f32 %v745, %v1022
        %v1045 = vadd.f32 %v750, %v1027
        %v1046 = vadd.f32 %v753, %v1030
        %v1047 = vadd.f32 %v758, %v1035
        %v1048 = vadd.f32 %v761, %v1038
        %s1049 = smul.addr %s438, 4
        %s1050 = scalar_lea.vmem %s352, %s1049
        %v1051 = vld [vmem:[%s1050] sm:$0xf]
        %v1052 = vld [vmem:[%s1050 + $0x10] sm:$0xf]
        %v1053 = vld [vmem:[%s1050 + $0x20] sm:$0xf]
        %v1054 = vld [vmem:[%s1050 + $0x30] sm:$0xf]
        %v1055 = vld [vmem:[%s1050 + $0x40] sm:$0xf]
        %v1056 = vld [vmem:[%s1050 + $0x50] sm:$0xf]
        %v1057 = vld [vmem:[%s1050 + $0x60] sm:$0xf]
        %v1058 = vld [vmem:[%s1050 + $0x70] sm:$0xf]
        %s1059 = scalar_lea.vmem %s2, 192
        %v1060 = vld [vmem:[%s1059] sm:$0xf]
        %v1061 = vld [vmem:[%s1059 + $0x4] sm:$0xf]
        %v1062 = vld [vmem:[%s1059 + $0x8] sm:$0xf]
        %v1063 = vld [vmem:[%s1059 + $0xc] sm:$0xf]
        %v1064 = vld [vmem:[%s1059 + $0x10] sm:$0xf]
        %v1065 = vld [vmem:[%s1059 + $0x14] sm:$0xf]
        %v1066 = vld [vmem:[%s1059 + $0x18] sm:$0xf]
        %v1067 = vld [vmem:[%s1059 + $0x1c] sm:$0xf]
        %v1068 = vld [vmem:[%s1059 + $0x20] sm:$0xf]
        %v1069 = vld [vmem:[%s1059 + $0x24] sm:$0xf]
        %v1070 = vld [vmem:[%s1059 + $0x28] sm:$0xf]
        %v1071 = vld [vmem:[%s1059 + $0x2c] sm:$0xf]
        %v1072 = vld [vmem:[%s1059 + $0x30] sm:$0xf]
        %v1073 = vld [vmem:[%s1059 + $0x34] sm:$0xf]
        %v1074 = vld [vmem:[%s1059 + $0x38] sm:$0xf]
        %v1075 = vld [vmem:[%s1059 + $0x3c] sm:$0xf]
        %v1084 = vunpack.c.l.b16 %v1051
        %v1085 = vunpack.c.l.b16 %v1052
        %v1086 = vunpack.c.l.b16 %v1053
        %v1087 = vunpack.c.l.b16 %v1054
        %v1088 = vunpack.c.l.b16 %v1055
        %v1089 = vunpack.c.l.b16 %v1056
        %v1090 = vunpack.c.l.b16 %v1057
        %v1091 = vunpack.c.l.b16 %v1058
        %v1092 = vpack.c.b16 %v1085, %v1084
        %v1093 = vpack.c.b16 %v1087, %v1086
        %v1094 = vpack.c.b16 %v1089, %v1088
        %v1095 = vpack.c.b16 %v1091, %v1090
        %v1116 = vunpack.c.l.b16 %v1060
        %v1117 = vunpack.c.l.b16 %v1061
        %v1118 = vunpack.c.l.b16 %v1062
        %v1119 = vunpack.c.l.b16 %v1063
        %v1120 = vunpack.c.l.b16 %v1064
        %v1121 = vunpack.c.l.b16 %v1065
        %v1122 = vunpack.c.l.b16 %v1066
        %v1123 = vunpack.c.l.b16 %v1067
        %v1124 = vunpack.c.l.b16 %v1068
        %v1125 = vunpack.c.l.b16 %v1069
        %v1126 = vunpack.c.l.b16 %v1070
        %v1127 = vunpack.c.l.b16 %v1071
        %v1128 = vunpack.c.l.b16 %v1072
        %v1129 = vunpack.c.l.b16 %v1073
        %v1130 = vunpack.c.l.b16 %v1074
        %v1131 = vunpack.c.l.b16 %v1075
        %v1132 = vpack.c.b16 %v1117, %v1116
        %v1133 = vpack.c.b16 %v1119, %v1118
        %v1134 = vpack.c.b16 %v1121, %v1120
        %v1135 = vpack.c.b16 %v1123, %v1122
        %v1136 = vpack.c.b16 %v1125, %v1124
        %v1137 = vpack.c.b16 %v1127, %v1126
        %v1138 = vpack.c.b16 %v1129, %v1128
        %v1139 = vpack.c.b16 %v1131, %v1130
        %1148 = vmatprep.subr.bf16.mxu0 0
        %1149 = vmatpush1.bf16.msra.mxu0 %v1132
        %1150 = vmatprep.subr.bf16.mxu0 0
        %1151 = vmatpush1.bf16.msra.mxu0 %v1133
        %1152 = vmatprep.subr.bf16.mxu0 0
        %1153 = vmatpush1.bf16.msra.mxu0 %v1134
        %1154 = vmatprep.subr.bf16.mxu0 0
        %1155 = vmatpush1.bf16.msra.mxu0 %v1135
        %1156 = vmatprep.subr.bf16.mxu0 0
        %1157 = vmatpush1.bf16.msra.mxu0 %v1136
        %1158 = vmatprep.subr.bf16.mxu0 0
        %1159 = vmatpush1.bf16.msra.mxu0 %v1137
        %1160 = vmatprep.subr.bf16.mxu0 0
        %1161 = vmatpush1.bf16.msra.mxu0 %v1138
        %1162 = vmatprep.subr.bf16.mxu0 0
        %1163 = vmatpush1.bf16.msra.mxu0 %v1139
        %1164 = vmatprep.subr.bf16.mxu0 0
        %1165 = vmatpush1.bf16.msra.mxu0 0
        %1166 = vmatprep.subr.bf16.mxu0 0
        %1167 = vmatpush1.bf16.msra.mxu0 0
        %1168 = vmatprep.subr.bf16.mxu0 0
        %1169 = vmatpush1.bf16.msra.mxu0 0
        %1170 = vmatprep.subr.bf16.mxu0 0
        %1171 = vmatpush1.bf16.msra.mxu0 0
        %1172 = vmatprep.subr.bf16.mxu0 0
        %1173 = vmatpush1.bf16.msra.mxu0 0
        %1174 = vmatprep.subr.bf16.mxu0 0
        %1175 = vmatpush1.bf16.msra.mxu0 0
        %1176 = vmatprep.subr.bf16.mxu0 0
        %1177 = vmatpush1.bf16.msra.mxu0 0
        %1178 = vmatprep.subr.bf16.mxu0 0
        %1179 = vmatpush1.bf16.msra.mxu0 0
        %1180 = vmatprep.mubr.bf16.mxu0 0
        %1181 = vmatmul.mubr.bf16.gmra.mrb[0].mxu0 %v1092
        %v1182 = vpop.f32.mrb[0].mxu0
        %v1183 = vadd.f32 0.0, %v1182
        %v1184 = vpop.f32.mrb[0].mxu0
        %v1185 = vpop.f32.mrb[0].mxu0
        %v1186 = vadd.f32 0.0, %v1185
        %v1187 = vpop.f32.mrb[0].mxu0
        %1188 = vmatprep.mubr.bf16.mxu0 0
        %1189 = vmatmul.mubr.bf16.gmra.mrb[0].mxu0 %v1093
        %v1190 = vpop.f32.mrb[0].mxu0
        %v1191 = vadd.f32 0.0, %v1190
        %v1192 = vpop.f32.mrb[0].mxu0
        %v1193 = vpop.f32.mrb[0].mxu0
        %v1194 = vadd.f32 0.0, %v1193
        %v1195 = vpop.f32.mrb[0].mxu0
        %1196 = vmatprep.mubr.bf16.mxu0 0
        %1197 = vmatmul.mubr.bf16.gmra.mrb[0].mxu0 %v1094
        %v1198 = vpop.f32.mrb[0].mxu0
        %v1199 = vadd.f32 0.0, %v1198
        %v1200 = vpop.f32.mrb[0].mxu0
        %v1201 = vpop.f32.mrb[0].mxu0
        %v1202 = vadd.f32 0.0, %v1201
        %v1203 = vpop.f32.mrb[0].mxu0
        %1204 = vmatprep.mubr.bf16.mxu0 0
        %1205 = vmatmul.mubr.bf16.gmra.mrb[0].mxu0 %v1095
        %v1206 = vpop.f32.mrb[0].mxu0
        %v1207 = vadd.f32 0.0, %v1206
        %v1208 = vpop.f32.mrb[0].mxu0
        %v1209 = vpop.f32.mrb[0].mxu0
        %v1210 = vadd.f32 0.0, %v1209
        %v1211 = vpop.f32.mrb[0].mxu0
        %1212 = vdwg.mxu0
        %v1213 = vadd.f32 %v1041, %v1183
        %v1214 = vadd.f32 %v1042, %v1186
        %v1215 = vadd.f32 %v1043, %v1191
        %v1216 = vadd.f32 %v1044, %v1194
        %v1217 = vadd.f32 %v1045, %v1199
        %v1218 = vadd.f32 %v1046, %v1202
        %v1219 = vadd.f32 %v1047, %v1207
        %v1220 = vadd.f32 %v1048, %v1210
        %v1221 = vld [vmem:[%s1050 + $0x4] sm:$0xf]
        %v1222 = vld [vmem:[%s1050 + $0x14] sm:$0xf]
        %v1223 = vld [vmem:[%s1050 + $0x24] sm:$0xf]
        %v1224 = vld [vmem:[%s1050 + $0x34] sm:$0xf]
        %v1225 = vld [vmem:[%s1050 + $0x44] sm:$0xf]
        %v1226 = vld [vmem:[%s1050 + $0x54] sm:$0xf]
        %v1227 = vld [vmem:[%s1050 + $0x64] sm:$0xf]
        %v1228 = vld [vmem:[%s1050 + $0x74] sm:$0xf]
        %s1229 = scalar_lea.vmem %s2, 256
        %v1230 = vld [vmem:[%s1229] sm:$0xf]
        %v1231 = vld [vmem:[%s1229 + $0x4] sm:$0xf]
        %v1232 = vld [vmem:[%s1229 + $0x8] sm:$0xf]
        %v1233 = vld [vmem:[%s1229 + $0xc] sm:$0xf]
        %v1234 = vld [vmem:[%s1229 + $0x10] sm:$0xf]
        %v1235 = vld [vmem:[%s1229 + $0x14] sm:$0xf]
        %v1236 = vld [vmem:[%s1229 + $0x18] sm:$0xf]
        %v1237 = vld [vmem:[%s1229 + $0x1c] sm:$0xf]
        %v1238 = vld [vmem:[%s1229 + $0x20] sm:$0xf]
        %v1239 = vld [vmem:[%s1229 + $0x24] sm:$0xf]
        %v1240 = vld [vmem:[%s1229 + $0x28] sm:$0xf]
        %v1241 = vld [vmem:[%s1229 + $0x2c] sm:$0xf]
        %v1242 = vld [vmem:[%s1229 + $0x30] sm:$0xf]
        %v1243 = vld [vmem:[%s1229 + $0x34] sm:$0xf]
        %v1244 = vld [vmem:[%s1229 + $0x38] sm:$0xf]
        %v1245 = vld [vmem:[%s1229 + $0x3c] sm:$0xf]
        %v1254 = vunpack.c.l.b16 %v1221
        %v1255 = vunpack.c.l.b16 %v1222
        %v1256 = vunpack.c.l.b16 %v1223
        %v1257 = vunpack.c.l.b16 %v1224
        %v1258 = vunpack.c.l.b16 %v1225
        %v1259 = vunpack.c.l.b16 %v1226
        %v1260 = vunpack.c.l.b16 %v1227
        %v1261 = vunpack.c.l.b16 %v1228
        %v1262 = vpack.c.b16 %v1255, %v1254
        %v1263 = vpack.c.b16 %v1257, %v1256
        %v1264 = vpack.c.b16 %v1259, %v1258
        %v1265 = vpack.c.b16 %v1261, %v1260
        %v1286 = vunpack.c.l.b16 %v1230
        %v1287 = vunpack.c.l.b16 %v1231
        %v1288 = vunpack.c.l.b16 %v1232
        %v1289 = vunpack.c.l.b16 %v1233
        %v1290 = vunpack.c.l.b16 %v1234
        %v1291 = vunpack.c.l.b16 %v1235
        %v1292 = vunpack.c.l.b16 %v1236
        %v1293 = vunpack.c.l.b16 %v1237
        %v1294 = vunpack.c.l.b16 %v1238
        %v1295 = vunpack.c.l.b16 %v1239
        %v1296 = vunpack.c.l.b16 %v1240
        %v1297 = vunpack.c.l.b16 %v1241
        %v1298 = vunpack.c.l.b16 %v1242
        %v1299 = vunpack.c.l.b16 %v1243
        %v1300 = vunpack.c.l.b16 %v1244
        %v1301 = vunpack.c.l.b16 %v1245
        %v1302 = vpack.c.b16 %v1287, %v1286
        %v1303 = vpack.c.b16 %v1289, %v1288
        %v1304 = vpack.c.b16 %v1291, %v1290
        %v1305 = vpack.c.b16 %v1293, %v1292
        %v1306 = vpack.c.b16 %v1295, %v1294
        %v1307 = vpack.c.b16 %v1297, %v1296
        %v1308 = vpack.c.b16 %v1299, %v1298
        %v1309 = vpack.c.b16 %v1301, %v1300
        %1318 = vmatprep.subr.bf16.mxu0 0
        %1319 = vmatpush1.bf16.msra.mxu0 %v1302
        %1320 = vmatprep.subr.bf16.mxu0 0
        %1321 = vmatpush1.bf16.msra.mxu0 %v1303
        %1322 = vmatprep.subr.bf16.mxu0 0
        %1323 = vmatpush1.bf16.msra.mxu0 %v1304
        %1324 = vmatprep.subr.bf16.mxu0 0
        %1325 = vmatpush1.bf16.msra.mxu0 %v1305
        %1326 = vmatprep.subr.bf16.mxu0 0
        %1327 = vmatpush1.bf16.msra.mxu0 %v1306
        %1328 = vmatprep.subr.bf16.mxu0 0
        %1329 = vmatpush1.bf16.msra.mxu0 %v1307
        %1330 = vmatprep.subr.bf16.mxu0 0
        %1331 = vmatpush1.bf16.msra.mxu0 %v1308
        %1332 = vmatprep.subr.bf16.mxu0 0
        %1333 = vmatpush1.bf16.msra.mxu0 %v1309
        %1334 = vmatprep.subr.bf16.mxu0 0
        %1335 = vmatpush1.bf16.msra.mxu0 0
        %1336 = vmatprep.subr.bf16.mxu0 0
        %1337 = vmatpush1.bf16.msra.mxu0 0
        %1338 = vmatprep.subr.bf16.mxu0 0
        %1339 = vmatpush1.bf16.msra.mxu0 0
        %1340 = vmatprep.subr.bf16.mxu0 0
        %1341 = vmatpush1.bf16.msra.mxu0 0
        %1342 = vmatprep.subr.bf16.mxu0 0
        %1343 = vmatpush1.bf16.msra.mxu0 0
        %1344 = vmatprep.subr.bf16.mxu0 0
        %1345 = vmatpush1.bf16.msra.mxu0 0
        %1346 = vmatprep.subr.bf16.mxu0 0
        %1347 = vmatpush1.bf16.msra.mxu0 0
        %1348 = vmatprep.subr.bf16.mxu0 0
        %1349 = vmatpush1.bf16.msra.mxu0 0
        %1350 = vmatprep.mubr.bf16.mxu0 0
        %1351 = vmatmul.mubr.bf16.gmra.mrb[0].mxu0 %v1262
        %v1352 = vpop.f32.mrb[0].mxu0
        %v1353 = vadd.f32 0.0, %v1352
        %v1354 = vpop.f32.mrb[0].mxu0
        %v1355 = vpop.f32.mrb[0].mxu0
        %v1356 = vadd.f32 0.0, %v1355
        %v1357 = vpop.f32.mrb[0].mxu0
        %1358 = vmatprep.mubr.bf16.mxu0 0
        %1359 = vmatmul.mubr.bf16.gmra.mrb[0].mxu0 %v1263
        %v1360 = vpop.f32.mrb[0].mxu0
        %v1361 = vadd.f32 0.0, %v1360
        %v1362 = vpop.f32.mrb[0].mxu0
        %v1363 = vpop.f32.mrb[0].mxu0
        %v1364 = vadd.f32 0.0, %v1363
        %v1365 = vpop.f32.mrb[0].mxu0
        %1366 = vmatprep.mubr.bf16.mxu0 0
        %1367 = vmatmul.mubr.bf16.gmra.mrb[0].mxu0 %v1264
        %v1368 = vpop.f32.mrb[0].mxu0
        %v1369 = vadd.f32 0.0, %v1368
        %v1370 = vpop.f32.mrb[0].mxu0
        %v1371 = vpop.f32.mrb[0].mxu0
        %v1372 = vadd.f32 0.0, %v1371
        %v1373 = vpop.f32.mrb[0].mxu0
        %1374 = vmatprep.mubr.bf16.mxu0 0
        %1375 = vmatmul.mubr.bf16.gmra.mrb[0].mxu0 %v1265
        %v1376 = vpop.f32.mrb[0].mxu0
        %v1377 = vadd.f32 0.0, %v1376
        %v1378 = vpop.f32.mrb[0].mxu0
        %v1379 = vpop.f32.mrb[0].mxu0
        %v1380 = vadd.f32 0.0, %v1379
        %v1381 = vpop.f32.mrb[0].mxu0
        %1382 = vdwg.mxu0
        %v1383 = vadd.f32 %v1213, %v1353
        %v1384 = vadd.f32 %v1214, %v1356
        %v1385 = vadd.f32 %v1215, %v1361
        %v1386 = vadd.f32 %v1216, %v1364
        %v1387 = vadd.f32 %v1217, %v1369
        %v1388 = vadd.f32 %v1218, %v1372
        %v1389 = vadd.f32 %v1219, %v1377
        %v1390 = vadd.f32 %v1220, %v1380
        %v1391 = vld [vmem:[%s1050] sm:$0xf]
        %v1392 = vld [vmem:[%s1050 + $0x8] sm:$0x1]
        %v1393 = vld [vmem:[%s1050 + $0x10] sm:$0xf]
        %v1394 = vld [vmem:[%s1050 + $0x18] sm:$0x1]
        %v1395 = vld [vmem:[%s1050 + $0x20] sm:$0xf]
        %v1396 = vld [vmem:[%s1050 + $0x28] sm:$0x1]
        %v1397 = vld [vmem:[%s1050 + $0x30] sm:$0xf]
        %v1398 = vld [vmem:[%s1050 + $0x38] sm:$0x1]
        %v1399 = vld [vmem:[%s1050 + $0x40] sm:$0xf]
        %v1400 = vld [vmem:[%s1050 + $0x48] sm:$0x1]
        %v1401 = vld [vmem:[%s1050 + $0x50] sm:$0xf]
        %v1402 = vld [vmem:[%s1050 + $0x58] sm:$0x1]
        %v1403 = vld [vmem:[%s1050 + $0x60] sm:$0xf]
        %v1404 = vld [vmem:[%s1050 + $0x68] sm:$0x1]
        %v1405 = vld [vmem:[%s1050 + $0x70] sm:$0xf]
        %v1406 = vld [vmem:[%s1050 + $0x78] sm:$0x1]
        %v1408 = vshrl.u32 %v1391, 16
        %v1410 = vrot.slane %v1408, 4
        %v1411 = vshll.u32 %v1391, 16
        %v1413 = vrot.slane %v1411, 5
        %v1414 = vor.u32 %v1410, %v1413
        %v1415 = vrot.slane %v1414, 4
        %v1417 = vshll.u32 %v1392, 16
        %v1419 = vrot.slane %v1417, 5
        %v1420 = vsel %vm782, %v1415, %v1419
        %v1422 = vshrl.u32 %v1393, 16
        %v1424 = vrot.slane %v1422, 4
        %v1425 = vshll.u32 %v1393, 16
        %v1427 = vrot.slane %v1425, 5
        %v1428 = vor.u32 %v1424, %v1427
        %v1429 = vrot.slane %v1428, 4
        %v1431 = vshll.u32 %v1394, 16
        %v1433 = vrot.slane %v1431, 5
        %v1434 = vsel %vm782, %v1429, %v1433
        %v1436 = vshrl.u32 %v1395, 16
        %v1438 = vrot.slane %v1436, 4
        %v1439 = vshll.u32 %v1395, 16
        %v1441 = vrot.slane %v1439, 5
        %v1442 = vor.u32 %v1438, %v1441
        %v1443 = vrot.slane %v1442, 4
        %v1445 = vshll.u32 %v1396, 16
        %v1447 = vrot.slane %v1445, 5
        %v1448 = vsel %vm782, %v1443, %v1447
        %v1450 = vshrl.u32 %v1397, 16
        %v1452 = vrot.slane %v1450, 4
        %v1453 = vshll.u32 %v1397, 16
        %v1455 = vrot.slane %v1453, 5
        %v1456 = vor.u32 %v1452, %v1455
        %v1457 = vrot.slane %v1456, 4
        %v1459 = vshll.u32 %v1398, 16
        %v1461 = vrot.slane %v1459, 5
        %v1462 = vsel %vm782, %v1457, %v1461
        %v1464 = vshrl.u32 %v1399, 16
        %v1466 = vrot.slane %v1464, 4
        %v1467 = vshll.u32 %v1399, 16
        %v1469 = vrot.slane %v1467, 5
        %v1470 = vor.u32 %v1466, %v1469
        %v1471 = vrot.slane %v1470, 4
        %v1473 = vshll.u32 %v1400, 16
        %v1475 = vrot.slane %v1473, 5
        %v1476 = vsel %vm782, %v1471, %v1475
        %v1478 = vshrl.u32 %v1401, 16
        %v1480 = vrot.slane %v1478, 4
        %v1481 = vshll.u32 %v1401, 16
        %v1483 = vrot.slane %v1481, 5
        %v1484 = vor.u32 %v1480, %v1483
        %v1485 = vrot.slane %v1484, 4
        %v1487 = vshll.u32 %v1402, 16
        %v1489 = vrot.slane %v1487, 5
        %v1490 = vsel %vm782, %v1485, %v1489
        %v1492 = vshrl.u32 %v1403, 16
        %v1494 = vrot.slane %v1492, 4
        %v1495 = vshll.u32 %v1403, 16
        %v1497 = vrot.slane %v1495, 5
        %v1498 = vor.u32 %v1494, %v1497
        %v1499 = vrot.slane %v1498, 4
        %v1501 = vshll.u32 %v1404, 16
        %v1503 = vrot.slane %v1501, 5
        %v1504 = vsel %vm782, %v1499, %v1503
        %v1506 = vshrl.u32 %v1405, 16
        %v1508 = vrot.slane %v1506, 4
        %v1509 = vshll.u32 %v1405, 16
        %v1511 = vrot.slane %v1509, 5
        %v1512 = vor.u32 %v1508, %v1511
        %v1513 = vrot.slane %v1512, 4
        %v1515 = vshll.u32 %v1406, 16
        %v1517 = vrot.slane %v1515, 5
        %v1518 = vsel %vm782, %v1513, %v1517
        %s1519 = scalar_lea.vmem %s2, 320
        %v1520 = vld [vmem:[%s1519] sm:$0xf]
        %v1521 = vld [vmem:[%s1519 + $0x4] sm:$0xf]
        %v1522 = vld [vmem:[%s1519 + $0x8] sm:$0xf]
        %v1523 = vld [vmem:[%s1519 + $0xc] sm:$0xf]
        %v1524 = vld [vmem:[%s1519 + $0x10] sm:$0xf]
        %v1525 = vld [vmem:[%s1519 + $0x14] sm:$0xf]
        %v1526 = vld [vmem:[%s1519 + $0x18] sm:$0xf]
        %v1527 = vld [vmem:[%s1519 + $0x1c] sm:$0xf]
        %v1528 = vld [vmem:[%s1519 + $0x20] sm:$0xf]
        %v1529 = vld [vmem:[%s1519 + $0x24] sm:$0xf]
        %v1530 = vld [vmem:[%s1519 + $0x28] sm:$0xf]
        %v1531 = vld [vmem:[%s1519 + $0x2c] sm:$0xf]
        %v1532 = vld [vmem:[%s1519 + $0x30] sm:$0xf]
        %v1533 = vld [vmem:[%s1519 + $0x34] sm:$0xf]
        %v1534 = vld [vmem:[%s1519 + $0x38] sm:$0xf]
        %v1535 = vld [vmem:[%s1519 + $0x3c] sm:$0xf]
        %v1536 = vunpack.c.l.b16 %v1420
        %v1537 = vunpack.c.l.b16 %v1434
        %v1538 = vunpack.c.l.b16 %v1448
        %v1539 = vunpack.c.l.b16 %v1462
        %v1540 = vunpack.c.l.b16 %v1476
        %v1541 = vunpack.c.l.b16 %v1490
        %v1542 = vunpack.c.l.b16 %v1504
        %v1543 = vunpack.c.l.b16 %v1518
        %v1544 = vpack.c.b16 %v1537, %v1536
        %v1545 = vpack.c.b16 %v1539, %v1538
        %v1546 = vpack.c.b16 %v1541, %v1540
        %v1547 = vpack.c.b16 %v1543, %v1542
        %v1568 = vunpack.c.l.b16 %v1520
        %v1569 = vunpack.c.l.b16 %v1521
        %v1570 = vunpack.c.l.b16 %v1522
        %v1571 = vunpack.c.l.b16 %v1523
        %v1572 = vunpack.c.l.b16 %v1524
        %v1573 = vunpack.c.l.b16 %v1525
        %v1574 = vunpack.c.l.b16 %v1526
        %v1575 = vunpack.c.l.b16 %v1527
        %v1576 = vunpack.c.l.b16 %v1528
        %v1577 = vunpack.c.l.b16 %v1529
        %v1578 = vunpack.c.l.b16 %v1530
        %v1579 = vunpack.c.l.b16 %v1531
        %v1580 = vunpack.c.l.b16 %v1532
        %v1581 = vunpack.c.l.b16 %v1533
        %v1582 = vunpack.c.l.b16 %v1534
        %v1583 = vunpack.c.l.b16 %v1535
        %v1584 = vpack.c.b16 %v1569, %v1568
        %v1585 = vpack.c.b16 %v1571, %v1570
        %v1586 = vpack.c.b16 %v1573, %v1572
        %v1587 = vpack.c.b16 %v1575, %v1574
        %v1588 = vpack.c.b16 %v1577, %v1576
        %v1589 = vpack.c.b16 %v1579, %v1578
        %v1590 = vpack.c.b16 %v1581, %v1580
        %v1591 = vpack.c.b16 %v1583, %v1582
        %1600 = vmatprep.subr.bf16.mxu0 0
        %1601 = vmatpush1.bf16.msra.mxu0 %v1584
        %1602 = vmatprep.subr.bf16.mxu0 0
        %1603 = vmatpush1.bf16.msra.mxu0 %v1585
        %1604 = vmatprep.subr.bf16.mxu0 0
        %1605 = vmatpush1.bf16.msra.mxu0 %v1586
        %1606 = vmatprep.subr.bf16.mxu0 0
        %1607 = vmatpush1.bf16.msra.mxu0 %v1587
        %1608 = vmatprep.subr.bf16.mxu0 0
        %1609 = vmatpush1.bf16.msra.mxu0 %v1588
        %1610 = vmatprep.subr.bf16.mxu0 0
        %1611 = vmatpush1.bf16.msra.mxu0 %v1589
        %1612 = vmatprep.subr.bf16.mxu0 0
        %1613 = vmatpush1.bf16.msra.mxu0 %v1590
        %1614 = vmatprep.subr.bf16.mxu0 0
        %1615 = vmatpush1.bf16.msra.mxu0 %v1591
        %1616 = vmatprep.subr.bf16.mxu0 0
        %1617 = vmatpush1.bf16.msra.mxu0 0
        %1618 = vmatprep.subr.bf16.mxu0 0
        %1619 = vmatpush1.bf16.msra.mxu0 0
        %1620 = vmatprep.subr.bf16.mxu0 0
        %1621 = vmatpush1.bf16.msra.mxu0 0
        %1622 = vmatprep.subr.bf16.mxu0 0
        %1623 = vmatpush1.bf16.msra.mxu0 0
        %1624 = vmatprep.subr.bf16.mxu0 0
        %1625 = vmatpush1.bf16.msra.mxu0 0
        %1626 = vmatprep.subr.bf16.mxu0 0
        %1627 = vmatpush1.bf16.msra.mxu0 0
        %1628 = vmatprep.subr.bf16.mxu0 0
        %1629 = vmatpush1.bf16.msra.mxu0 0
        %1630 = vmatprep.subr.bf16.mxu0 0
        %1631 = vmatpush1.bf16.msra.mxu0 0
        %1632 = vmatprep.mubr.bf16.mxu0 0
        %1633 = vmatmul.mubr.bf16.gmra.mrb[0].mxu0 %v1544
        %v1634 = vpop.f32.mrb[0].mxu0
        %v1635 = vadd.f32 0.0, %v1634
        %v1636 = vpop.f32.mrb[0].mxu0
        %v1637 = vpop.f32.mrb[0].mxu0
        %v1638 = vadd.f32 0.0, %v1637
        %v1639 = vpop.f32.mrb[0].mxu0
        %1640 = vmatprep.mubr.bf16.mxu0 0
        %1641 = vmatmul.mubr.bf16.gmra.mrb[0].mxu0 %v1545
        %v1642 = vpop.f32.mrb[0].mxu0
        %v1643 = vadd.f32 0.0, %v1642
        %v1644 = vpop.f32.mrb[0].mxu0
        %v1645 = vpop.f32.mrb[0].mxu0
        %v1646 = vadd.f32 0.0, %v1645
        %v1647 = vpop.f32.mrb[0].mxu0
        %1648 = vmatprep.mubr.bf16.mxu0 0
        %1649 = vmatmul.mubr.bf16.gmra.mrb[0].mxu0 %v1546
        %v1650 = vpop.f32.mrb[0].mxu0
        %v1651 = vadd.f32 0.0, %v1650
        %v1652 = vpop.f32.mrb[0].mxu0
        %v1653 = vpop.f32.mrb[0].mxu0
        %v1654 = vadd.f32 0.0, %v1653
        %v1655 = vpop.f32.mrb[0].mxu0
        %1656 = vmatprep.mubr.bf16.mxu0 0
        %1657 = vmatmul.mubr.bf16.gmra.mrb[0].mxu0 %v1547
        %v1658 = vpop.f32.mrb[0].mxu0
        %v1659 = vadd.f32 0.0, %v1658
        %v1660 = vpop.f32.mrb[0].mxu0
        %v1661 = vpop.f32.mrb[0].mxu0
        %v1662 = vadd.f32 0.0, %v1661
        %v1663 = vpop.f32.mrb[0].mxu0
        %1664 = vdwg.mxu0
        %v1665 = vadd.f32 %v1383, %v1635
        %v1666 = vadd.f32 %v1384, %v1638
        %v1667 = vadd.f32 %v1385, %v1643
        %v1668 = vadd.f32 %v1386, %v1646
        %v1669 = vadd.f32 %v1387, %v1651
        %v1670 = vadd.f32 %v1388, %v1654
        %v1671 = vadd.f32 %v1389, %v1659
        %v1672 = vadd.f32 %v1390, %v1662
        %s1673 = sadd.s32 %s355, 1
        %s1674 = smul.u32 %s1673, 4
        %s1675 = smul.addr %s1674, 4
        %s1676 = scalar_lea.vmem %s347, %s1675
        %v1677 = vld [vmem:[%s1676] sm:$0xf]
        %v1678 = vld [vmem:[%s1676 + $0x10] sm:$0xf]
        %v1679 = vld [vmem:[%s1676 + $0x20] sm:$0xf]
        %v1680 = vld [vmem:[%s1676 + $0x30] sm:$0xf]
        %v1681 = vld [vmem:[%s1676 + $0x40] sm:$0xf]
        %v1682 = vld [vmem:[%s1676 + $0x50] sm:$0xf]
        %v1683 = vld [vmem:[%s1676 + $0x60] sm:$0xf]
        %v1684 = vld [vmem:[%s1676 + $0x70] sm:$0xf]
        %s1685 = scalar_lea.vmem %s2, 384
        %v1686 = vld [vmem:[%s1685] sm:$0xf]
        %v1687 = vld [vmem:[%s1685 + $0x4] sm:$0xf]
        %v1688 = vld [vmem:[%s1685 + $0x8] sm:$0xf]
        %v1689 = vld [vmem:[%s1685 + $0xc] sm:$0xf]
        %v1690 = vld [vmem:[%s1685 + $0x10] sm:$0xf]
        %v1691 = vld [vmem:[%s1685 + $0x14] sm:$0xf]
        %v1692 = vld [vmem:[%s1685 + $0x18] sm:$0xf]
        %v1693 = vld [vmem:[%s1685 + $0x1c] sm:$0xf]
        %v1694 = vld [vmem:[%s1685 + $0x20] sm:$0xf]
        %v1695 = vld [vmem:[%s1685 + $0x24] sm:$0xf]
        %v1696 = vld [vmem:[%s1685 + $0x28] sm:$0xf]
        %v1697 = vld [vmem:[%s1685 + $0x2c] sm:$0xf]
        %v1698 = vld [vmem:[%s1685 + $0x30] sm:$0xf]
        %v1699 = vld [vmem:[%s1685 + $0x34] sm:$0xf]
        %v1700 = vld [vmem:[%s1685 + $0x38] sm:$0xf]
        %v1701 = vld [vmem:[%s1685 + $0x3c] sm:$0xf]
        %v1710 = vunpack.c.l.b16 %v1677
        %v1711 = vunpack.c.l.b16 %v1678
        %v1712 = vunpack.c.l.b16 %v1679
        %v1713 = vunpack.c.l.b16 %v1680
        %v1714 = vunpack.c.l.b16 %v1681
        %v1715 = vunpack.c.l.b16 %v1682
        %v1716 = vunpack.c.l.b16 %v1683
        %v1717 = vunpack.c.l.b16 %v1684
        %v1718 = vpack.c.b16 %v1711, %v1710
        %v1719 = vpack.c.b16 %v1713, %v1712
        %v1720 = vpack.c.b16 %v1715, %v1714
        %v1721 = vpack.c.b16 %v1717, %v1716
        %v1742 = vunpack.c.l.b16 %v1686
        %v1743 = vunpack.c.l.b16 %v1687
        %v1744 = vunpack.c.l.b16 %v1688
        %v1745 = vunpack.c.l.b16 %v1689
        %v1746 = vunpack.c.l.b16 %v1690
        %v1747 = vunpack.c.l.b16 %v1691
        %v1748 = vunpack.c.l.b16 %v1692
        %v1749 = vunpack.c.l.b16 %v1693
        %v1750 = vunpack.c.l.b16 %v1694
        %v1751 = vunpack.c.l.b16 %v1695
        %v1752 = vunpack.c.l.b16 %v1696
        %v1753 = vunpack.c.l.b16 %v1697
        %v1754 = vunpack.c.l.b16 %v1698
        %v1755 = vunpack.c.l.b16 %v1699
        %v1756 = vunpack.c.l.b16 %v1700
        %v1757 = vunpack.c.l.b16 %v1701
        %v1758 = vpack.c.b16 %v1743, %v1742
        %v1759 = vpack.c.b16 %v1745, %v1744
        %v1760 = vpack.c.b16 %v1747, %v1746
        %v1761 = vpack.c.b16 %v1749, %v1748
        %v1762 = vpack.c.b16 %v1751, %v1750
        %v1763 = vpack.c.b16 %v1753, %v1752
        %v1764 = vpack.c.b16 %v1755, %v1754
        %v1765 = vpack.c.b16 %v1757, %v1756
        %1774 = vmatprep.subr.bf16.mxu0 0
        %1775 = vmatpush1.bf16.msra.mxu0 %v1758
        %1776 = vmatprep.subr.bf16.mxu0 0
        %1777 = vmatpush1.bf16.msra.mxu0 %v1759
        %1778 = vmatprep.subr.bf16.mxu0 0
        %1779 = vmatpush1.bf16.msra.mxu0 %v1760
        %1780 = vmatprep.subr.bf16.mxu0 0
        %1781 = vmatpush1.bf16.msra.mxu0 %v1761
        %1782 = vmatprep.subr.bf16.mxu0 0
        %1783 = vmatpush1.bf16.msra.mxu0 %v1762
        %1784 = vmatprep.subr.bf16.mxu0 0
        %1785 = vmatpush1.bf16.msra.mxu0 %v1763
        %1786 = vmatprep.subr.bf16.mxu0 0
        %1787 = vmatpush1.bf16.msra.mxu0 %v1764
        %1788 = vmatprep.subr.bf16.mxu0 0
        %1789 = vmatpush1.bf16.msra.mxu0 %v1765
        %1790 = vmatprep.subr.bf16.mxu0 0
        %1791 = vmatpush1.bf16.msra.mxu0 0
        %1792 = vmatprep.subr.bf16.mxu0 0
        %1793 = vmatpush1.bf16.msra.mxu0 0
        %1794 = vmatprep.subr.bf16.mxu0 0
        %1795 = vmatpush1.bf16.msra.mxu0 0
        %1796 = vmatprep.subr.bf16.mxu0 0
        %1797 = vmatpush1.bf16.msra.mxu0 0
        %1798 = vmatprep.subr.bf16.mxu0 0
        %1799 = vmatpush1.bf16.msra.mxu0 0
        %1800 = vmatprep.subr.bf16.mxu0 0
        %1801 = vmatpush1.bf16.msra.mxu0 0
        %1802 = vmatprep.subr.bf16.mxu0 0
        %1803 = vmatpush1.bf16.msra.mxu0 0
        %1804 = vmatprep.subr.bf16.mxu0 0
        %1805 = vmatpush1.bf16.msra.mxu0 0
        %1806 = vmatprep.mubr.bf16.mxu0 0
        %1807 = vmatmul.mubr.bf16.gmra.mrb[0].mxu0 %v1718
        %v1808 = vpop.f32.mrb[0].mxu0
        %v1809 = vadd.f32 0.0, %v1808
        %v1810 = vpop.f32.mrb[0].mxu0
        %v1811 = vpop.f32.mrb[0].mxu0
        %v1812 = vadd.f32 0.0, %v1811
        %v1813 = vpop.f32.mrb[0].mxu0
        %1814 = vmatprep.mubr.bf16.mxu0 0
        %1815 = vmatmul.mubr.bf16.gmra.mrb[0].mxu0 %v1719
        %v1816 = vpop.f32.mrb[0].mxu0
        %v1817 = vadd.f32 0.0, %v1816
        %v1818 = vpop.f32.mrb[0].mxu0
        %v1819 = vpop.f32.mrb[0].mxu0
        %v1820 = vadd.f32 0.0, %v1819
        %v1821 = vpop.f32.mrb[0].mxu0
        %1822 = vmatprep.mubr.bf16.mxu0 0
        %1823 = vmatmul.mubr.bf16.gmra.mrb[0].mxu0 %v1720
        %v1824 = vpop.f32.mrb[0].mxu0
        %v1825 = vadd.f32 0.0, %v1824
        %v1826 = vpop.f32.mrb[0].mxu0
        %v1827 = vpop.f32.mrb[0].mxu0
        %v1828 = vadd.f32 0.0, %v1827
        %v1829 = vpop.f32.mrb[0].mxu0
        %1830 = vmatprep.mubr.bf16.mxu0 0
        %1831 = vmatmul.mubr.bf16.gmra.mrb[0].mxu0 %v1721
        %v1832 = vpop.f32.mrb[0].mxu0
        %v1833 = vadd.f32 0.0, %v1832
        %v1834 = vpop.f32.mrb[0].mxu0
        %v1835 = vpop.f32.mrb[0].mxu0
        %v1836 = vadd.f32 0.0, %v1835
        %v1837 = vpop.f32.mrb[0].mxu0
        %1838 = vdwg.mxu0
        %v1839 = vadd.f32 %v1665, %v1809
        %v1840 = vadd.f32 %v1666, %v1812
        %v1841 = vadd.f32 %v1667, %v1817
        %v1842 = vadd.f32 %v1668, %v1820
        %v1843 = vadd.f32 %v1669, %v1825
        %v1844 = vadd.f32 %v1670, %v1828
        %v1845 = vadd.f32 %v1671, %v1833
        %v1846 = vadd.f32 %v1672, %v1836
        %v1847 = vld [vmem:[%s1676 + $0x4] sm:$0xf]
        %v1848 = vld [vmem:[%s1676 + $0x14] sm:$0xf]
        %v1849 = vld [vmem:[%s1676 + $0x24] sm:$0xf]
        %v1850 = vld [vmem:[%s1676 + $0x34] sm:$0xf]
        %v1851 = vld [vmem:[%s1676 + $0x44] sm:$0xf]
        %v1852 = vld [vmem:[%s1676 + $0x54] sm:$0xf]
        %v1853 = vld [vmem:[%s1676 + $0x64] sm:$0xf]
        %v1854 = vld [vmem:[%s1676 + $0x74] sm:$0xf]
        %s1855 = scalar_lea.vmem %s2, 448
        %v1856 = vld [vmem:[%s1855] sm:$0xf]
        %v1857 = vld [vmem:[%s1855 + $0x4] sm:$0xf]
        %v1858 = vld [vmem:[%s1855 + $0x8] sm:$0xf]
        %v1859 = vld [vmem:[%s1855 + $0xc] sm:$0xf]
        %v1860 = vld [vmem:[%s1855 + $0x10] sm:$0xf]
        %v1861 = vld [vmem:[%s1855 + $0x14] sm:$0xf]
        %v1862 = vld [vmem:[%s1855 + $0x18] sm:$0xf]
        %v1863 = vld [vmem:[%s1855 + $0x1c] sm:$0xf]
        %v1864 = vld [vmem:[%s1855 + $0x20] sm:$0xf]
        %v1865 = vld [vmem:[%s1855 + $0x24] sm:$0xf]
        %v1866 = vld [vmem:[%s1855 + $0x28] sm:$0xf]
        %v1867 = vld [vmem:[%s1855 + $0x2c] sm:$0xf]
        %v1868 = vld [vmem:[%s1855 + $0x30] sm:$0xf]
        %v1869 = vld [vmem:[%s1855 + $0x34] sm:$0xf]
        %v1870 = vld [vmem:[%s1855 + $0x38] sm:$0xf]
        %v1871 = vld [vmem:[%s1855 + $0x3c] sm:$0xf]
        %v1880 = vunpack.c.l.b16 %v1847
        %v1881 = vunpack.c.l.b16 %v1848
        %v1882 = vunpack.c.l.b16 %v1849
        %v1883 = vunpack.c.l.b16 %v1850
        %v1884 = vunpack.c.l.b16 %v1851
        %v1885 = vunpack.c.l.b16 %v1852
        %v1886 = vunpack.c.l.b16 %v1853
        %v1887 = vunpack.c.l.b16 %v1854
        %v1888 = vpack.c.b16 %v1881, %v1880
        %v1889 = vpack.c.b16 %v1883, %v1882
        %v1890 = vpack.c.b16 %v1885, %v1884
        %v1891 = vpack.c.b16 %v1887, %v1886
        %v1912 = vunpack.c.l.b16 %v1856
        %v1913 = vunpack.c.l.b16 %v1857
        %v1914 = vunpack.c.l.b16 %v1858
        %v1915 = vunpack.c.l.b16 %v1859
        %v1916 = vunpack.c.l.b16 %v1860
        %v1917 = vunpack.c.l.b16 %v1861
        %v1918 = vunpack.c.l.b16 %v1862
        %v1919 = vunpack.c.l.b16 %v1863
        %v1920 = vunpack.c.l.b16 %v1864
        %v1921 = vunpack.c.l.b16 %v1865
        %v1922 = vunpack.c.l.b16 %v1866
        %v1923 = vunpack.c.l.b16 %v1867
        %v1924 = vunpack.c.l.b16 %v1868
        %v1925 = vunpack.c.l.b16 %v1869
        %v1926 = vunpack.c.l.b16 %v1870
        %v1927 = vunpack.c.l.b16 %v1871
        %v1928 = vpack.c.b16 %v1913, %v1912
        %v1929 = vpack.c.b16 %v1915, %v1914
        %v1930 = vpack.c.b16 %v1917, %v1916
        %v1931 = vpack.c.b16 %v1919, %v1918
        %v1932 = vpack.c.b16 %v1921, %v1920
        %v1933 = vpack.c.b16 %v1923, %v1922
        %v1934 = vpack.c.b16 %v1925, %v1924
        %v1935 = vpack.c.b16 %v1927, %v1926
        %1944 = vmatprep.subr.bf16.mxu0 0
        %1945 = vmatpush1.bf16.msra.mxu0 %v1928
        %1946 = vmatprep.subr.bf16.mxu0 0
        %1947 = vmatpush1.bf16.msra.mxu0 %v1929
        %1948 = vmatprep.subr.bf16.mxu0 0
        %1949 = vmatpush1.bf16.msra.mxu0 %v1930
        %1950 = vmatprep.subr.bf16.mxu0 0
        %1951 = vmatpush1.bf16.msra.mxu0 %v1931
        %1952 = vmatprep.subr.bf16.mxu0 0
        %1953 = vmatpush1.bf16.msra.mxu0 %v1932
        %1954 = vmatprep.subr.bf16.mxu0 0
        %1955 = vmatpush1.bf16.msra.mxu0 %v1933
        %1956 = vmatprep.subr.bf16.mxu0 0
        %1957 = vmatpush1.bf16.msra.mxu0 %v1934
        %1958 = vmatprep.subr.bf16.mxu0 0
        %1959 = vmatpush1.bf16.msra.mxu0 %v1935
        %1960 = vmatprep.subr.bf16.mxu0 0
        %1961 = vmatpush1.bf16.msra.mxu0 0
        %1962 = vmatprep.subr.bf16.mxu0 0
        %1963 = vmatpush1.bf16.msra.mxu0 0
        %1964 = vmatprep.subr.bf16.mxu0 0
        %1965 = vmatpush1.bf16.msra.mxu0 0
        %1966 = vmatprep.subr.bf16.mxu0 0
        %1967 = vmatpush1.bf16.msra.mxu0 0
        %1968 = vmatprep.subr.bf16.mxu0 0
        %1969 = vmatpush1.bf16.msra.mxu0 0
        %1970 = vmatprep.subr.bf16.mxu0 0
        %1971 = vmatpush1.bf16.msra.mxu0 0
        %1972 = vmatprep.subr.bf16.mxu0 0
        %1973 = vmatpush1.bf16.msra.mxu0 0
        %1974 = vmatprep.subr.bf16.mxu0 0
        %1975 = vmatpush1.bf16.msra.mxu0 0
        %1976 = vmatprep.mubr.bf16.mxu0 0
        %1977 = vmatmul.mubr.bf16.gmra.mrb[0].mxu0 %v1888
        %v1978 = vpop.f32.mrb[0].mxu0
        %v1979 = vadd.f32 0.0, %v1978
        %v1980 = vpop.f32.mrb[0].mxu0
        %v1981 = vpop.f32.mrb[0].mxu0
        %v1982 = vadd.f32 0.0, %v1981
        %v1983 = vpop.f32.mrb[0].mxu0
        %1984 = vmatprep.mubr.bf16.mxu0 0
        %1985 = vmatmul.mubr.bf16.gmra.mrb[0].mxu0 %v1889
        %v1986 = vpop.f32.mrb[0].mxu0
        %v1987 = vadd.f32 0.0, %v1986
        %v1988 = vpop.f32.mrb[0].mxu0
        %v1989 = vpop.f32.mrb[0].mxu0
        %v1990 = vadd.f32 0.0, %v1989
        %v1991 = vpop.f32.mrb[0].mxu0
        %1992 = vmatprep.mubr.bf16.mxu0 0
        %1993 = vmatmul.mubr.bf16.gmra.mrb[0].mxu0 %v1890
        %v1994 = vpop.f32.mrb[0].mxu0
        %v1995 = vadd.f32 0.0, %v1994
        %v1996 = vpop.f32.mrb[0].mxu0
        %v1997 = vpop.f32.mrb[0].mxu0
        %v1998 = vadd.f32 0.0, %v1997
        %v1999 = vpop.f32.mrb[0].mxu0
        %2000 = vmatprep.mubr.bf16.mxu0 0
        %2001 = vmatmul.mubr.bf16.gmra.mrb[0].mxu0 %v1891
        %v2002 = vpop.f32.mrb[0].mxu0
        %v2003 = vadd.f32 0.0, %v2002
        %v2004 = vpop.f32.mrb[0].mxu0
        %v2005 = vpop.f32.mrb[0].mxu0
        %v2006 = vadd.f32 0.0, %v2005
        %v2007 = vpop.f32.mrb[0].mxu0
        %2008 = vdwg.mxu0
        %v2009 = vadd.f32 %v1839, %v1979
        %v2010 = vadd.f32 %v1840, %v1982
        %v2011 = vadd.f32 %v1841, %v1987
        %v2012 = vadd.f32 %v1842, %v1990
        %v2013 = vadd.f32 %v1843, %v1995
        %v2014 = vadd.f32 %v1844, %v1998
        %v2015 = vadd.f32 %v1845, %v2003
        %v2016 = vadd.f32 %v1846, %v2006
        %v2017 = vld [vmem:[%s1676] sm:$0xf]
        %v2018 = vld [vmem:[%s1676 + $0x8] sm:$0x1]
        %v2019 = vld [vmem:[%s1676 + $0x10] sm:$0xf]
        %v2020 = vld [vmem:[%s1676 + $0x18] sm:$0x1]
        %v2021 = vld [vmem:[%s1676 + $0x20] sm:$0xf]
        %v2022 = vld [vmem:[%s1676 + $0x28] sm:$0x1]
        %v2023 = vld [vmem:[%s1676 + $0x30] sm:$0xf]
        %v2024 = vld [vmem:[%s1676 + $0x38] sm:$0x1]
        %v2025 = vld [vmem:[%s1676 + $0x40] sm:$0xf]
        %v2026 = vld [vmem:[%s1676 + $0x48] sm:$0x1]
        %v2027 = vld [vmem:[%s1676 + $0x50] sm:$0xf]
        %v2028 = vld [vmem:[%s1676 + $0x58] sm:$0x1]
        %v2029 = vld [vmem:[%s1676 + $0x60] sm:$0xf]
        %v2030 = vld [vmem:[%s1676 + $0x68] sm:$0x1]
        %v2031 = vld [vmem:[%s1676 + $0x70] sm:$0xf]
        %v2032 = vld [vmem:[%s1676 + $0x78] sm:$0x1]
        %v2034 = vshrl.u32 %v2017, 16
        %v2036 = vrot.slane %v2034, 4
        %v2037 = vshll.u32 %v2017, 16
        %v2039 = vrot.slane %v2037, 5
        %v2040 = vor.u32 %v2036, %v2039
        %v2041 = vrot.slane %v2040, 4
        %v2043 = vshll.u32 %v2018, 16
        %v2045 = vrot.slane %v2043, 5
        %v2046 = vsel %vm782, %v2041, %v2045
        %v2048 = vshrl.u32 %v2019, 16
        %v2050 = vrot.slane %v2048, 4
        %v2051 = vshll.u32 %v2019, 16
        %v2053 = vrot.slane %v2051, 5
        %v2054 = vor.u32 %v2050, %v2053
        %v2055 = vrot.slane %v2054, 4
        %v2057 = vshll.u32 %v2020, 16
        %v2059 = vrot.slane %v2057, 5
        %v2060 = vsel %vm782, %v2055, %v2059
        %v2062 = vshrl.u32 %v2021, 16
        %v2064 = vrot.slane %v2062, 4
        %v2065 = vshll.u32 %v2021, 16
        %v2067 = vrot.slane %v2065, 5
        %v2068 = vor.u32 %v2064, %v2067
        %v2069 = vrot.slane %v2068, 4
        %v2071 = vshll.u32 %v2022, 16
        %v2073 = vrot.slane %v2071, 5
        %v2074 = vsel %vm782, %v2069, %v2073
        %v2076 = vshrl.u32 %v2023, 16
        %v2078 = vrot.slane %v2076, 4
        %v2079 = vshll.u32 %v2023, 16
        %v2081 = vrot.slane %v2079, 5
        %v2082 = vor.u32 %v2078, %v2081
        %v2083 = vrot.slane %v2082, 4
        %v2085 = vshll.u32 %v2024, 16
        %v2087 = vrot.slane %v2085, 5
        %v2088 = vsel %vm782, %v2083, %v2087
        %v2090 = vshrl.u32 %v2025, 16
        %v2092 = vrot.slane %v2090, 4
        %v2093 = vshll.u32 %v2025, 16
        %v2095 = vrot.slane %v2093, 5
        %v2096 = vor.u32 %v2092, %v2095
        %v2097 = vrot.slane %v2096, 4
        %v2099 = vshll.u32 %v2026, 16
        %v2101 = vrot.slane %v2099, 5
        %v2102 = vsel %vm782, %v2097, %v2101
        %v2104 = vshrl.u32 %v2027, 16
        %v2106 = vrot.slane %v2104, 4
        %v2107 = vshll.u32 %v2027, 16
        %v2109 = vrot.slane %v2107, 5
        %v2110 = vor.u32 %v2106, %v2109
        %v2111 = vrot.slane %v2110, 4
        %v2113 = vshll.u32 %v2028, 16
        %v2115 = vrot.slane %v2113, 5
        %v2116 = vsel %vm782, %v2111, %v2115
        %v2118 = vshrl.u32 %v2029, 16
        %v2120 = vrot.slane %v2118, 4
        %v2121 = vshll.u32 %v2029, 16
        %v2123 = vrot.slane %v2121, 5
        %v2124 = vor.u32 %v2120, %v2123
        %v2125 = vrot.slane %v2124, 4
        %v2127 = vshll.u32 %v2030, 16
        %v2129 = vrot.slane %v2127, 5
        %v2130 = vsel %vm782, %v2125, %v2129
        %v2132 = vshrl.u32 %v2031, 16
        %v2134 = vrot.slane %v2132, 4
        %v2135 = vshll.u32 %v2031, 16
        %v2137 = vrot.slane %v2135, 5
        %v2138 = vor.u32 %v2134, %v2137
        %v2139 = vrot.slane %v2138, 4
        %v2141 = vshll.u32 %v2032, 16
        %v2143 = vrot.slane %v2141, 5
        %v2144 = vsel %vm782, %v2139, %v2143
        %s2145 = scalar_lea.vmem %s2, 512
        %v2146 = vld [vmem:[%s2145] sm:$0xf]
        %v2147 = vld [vmem:[%s2145 + $0x4] sm:$0xf]
        %v2148 = vld [vmem:[%s2145 + $0x8] sm:$0xf]
        %v2149 = vld [vmem:[%s2145 + $0xc] sm:$0xf]
        %v2150 = vld [vmem:[%s2145 + $0x10] sm:$0xf]
        %v2151 = vld [vmem:[%s2145 + $0x14] sm:$0xf]
        %v2152 = vld [vmem:[%s2145 + $0x18] sm:$0xf]
        %v2153 = vld [vmem:[%s2145 + $0x1c] sm:$0xf]
        %v2154 = vld [vmem:[%s2145 + $0x20] sm:$0xf]
        %v2155 = vld [vmem:[%s2145 + $0x24] sm:$0xf]
        %v2156 = vld [vmem:[%s2145 + $0x28] sm:$0xf]
        %v2157 = vld [vmem:[%s2145 + $0x2c] sm:$0xf]
        %v2158 = vld [vmem:[%s2145 + $0x30] sm:$0xf]
        %v2159 = vld [vmem:[%s2145 + $0x34] sm:$0xf]
        %v2160 = vld [vmem:[%s2145 + $0x38] sm:$0xf]
        %v2161 = vld [vmem:[%s2145 + $0x3c] sm:$0xf]
        %v2162 = vunpack.c.l.b16 %v2046
        %v2163 = vunpack.c.l.b16 %v2060
        %v2164 = vunpack.c.l.b16 %v2074
        %v2165 = vunpack.c.l.b16 %v2088
        %v2166 = vunpack.c.l.b16 %v2102
        %v2167 = vunpack.c.l.b16 %v2116
        %v2168 = vunpack.c.l.b16 %v2130
        %v2169 = vunpack.c.l.b16 %v2144
        %v2170 = vpack.c.b16 %v2163, %v2162
        %v2171 = vpack.c.b16 %v2165, %v2164
        %v2172 = vpack.c.b16 %v2167, %v2166
        %v2173 = vpack.c.b16 %v2169, %v2168
        %v2194 = vunpack.c.l.b16 %v2146
        %v2195 = vunpack.c.l.b16 %v2147
        %v2196 = vunpack.c.l.b16 %v2148
        %v2197 = vunpack.c.l.b16 %v2149
        %v2198 = vunpack.c.l.b16 %v2150
        %v2199 = vunpack.c.l.b16 %v2151
        %v2200 = vunpack.c.l.b16 %v2152
        %v2201 = vunpack.c.l.b16 %v2153
        %v2202 = vunpack.c.l.b16 %v2154
        %v2203 = vunpack.c.l.b16 %v2155
        %v2204 = vunpack.c.l.b16 %v2156
        %v2205 = vunpack.c.l.b16 %v2157
        %v2206 = vunpack.c.l.b16 %v2158
        %v2207 = vunpack.c.l.b16 %v2159
        %v2208 = vunpack.c.l.b16 %v2160
        %v2209 = vunpack.c.l.b16 %v2161
        %v2210 = vpack.c.b16 %v2195, %v2194
        %v2211 = vpack.c.b16 %v2197, %v2196
        %v2212 = vpack.c.b16 %v2199, %v2198
        %v2213 = vpack.c.b16 %v2201, %v2200
        %v2214 = vpack.c.b16 %v2203, %v2202
        %v2215 = vpack.c.b16 %v2205, %v2204
        %v2216 = vpack.c.b16 %v2207, %v2206
        %v2217 = vpack.c.b16 %v2209, %v2208
        %2226 = vmatprep.subr.bf16.mxu0 0
        %2227 = vmatpush1.bf16.msra.mxu0 %v2210
        %2228 = vmatprep.subr.bf16.mxu0 0
        %2229 = vmatpush1.bf16.msra.mxu0 %v2211
        %2230 = vmatprep.subr.bf16.mxu0 0
        %2231 = vmatpush1.bf16.msra.mxu0 %v2212
        %2232 = vmatprep.subr.bf16.mxu0 0
        %2233 = vmatpush1.bf16.msra.mxu0 %v2213
        %2234 = vmatprep.subr.bf16.mxu0 0
        %2235 = vmatpush1.bf16.msra.mxu0 %v2214
        %2236 = vmatprep.subr.bf16.mxu0 0
        %2237 = vmatpush1.bf16.msra.mxu0 %v2215
        %2238 = vmatprep.subr.bf16.mxu0 0
        %2239 = vmatpush1.bf16.msra.mxu0 %v2216
        %2240 = vmatprep.subr.bf16.mxu0 0
        %2241 = vmatpush1.bf16.msra.mxu0 %v2217
        %2242 = vmatprep.subr.bf16.mxu0 0
        %2243 = vmatpush1.bf16.msra.mxu0 0
        %2244 = vmatprep.subr.bf16.mxu0 0
        %2245 = vmatpush1.bf16.msra.mxu0 0
        %2246 = vmatprep.subr.bf16.mxu0 0
        %2247 = vmatpush1.bf16.msra.mxu0 0
        %2248 = vmatprep.subr.bf16.mxu0 0
        %2249 = vmatpush1.bf16.msra.mxu0 0
        %2250 = vmatprep.subr.bf16.mxu0 0
        %2251 = vmatpush1.bf16.msra.mxu0 0
        %2252 = vmatprep.subr.bf16.mxu0 0
        %2253 = vmatpush1.bf16.msra.mxu0 0
        %2254 = vmatprep.subr.bf16.mxu0 0
        %2255 = vmatpush1.bf16.msra.mxu0 0
        %2256 = vmatprep.subr.bf16.mxu0 0
        %2257 = vmatpush1.bf16.msra.mxu0 0
        %2258 = vmatprep.mubr.bf16.mxu0 0
        %2259 = vmatmul.mubr.bf16.gmra.mrb[0].mxu0 %v2170
        %v2260 = vpop.f32.mrb[0].mxu0
        %v2261 = vadd.f32 0.0, %v2260
        %v2262 = vpop.f32.mrb[0].mxu0
        %v2263 = vpop.f32.mrb[0].mxu0
        %v2264 = vadd.f32 0.0, %v2263
        %v2265 = vpop.f32.mrb[0].mxu0
        %2266 = vmatprep.mubr.bf16.mxu0 0
        %2267 = vmatmul.mubr.bf16.gmra.mrb[0].mxu0 %v2171
        %v2268 = vpop.f32.mrb[0].mxu0
        %v2269 = vadd.f32 0.0, %v2268
        %v2270 = vpop.f32.mrb[0].mxu0
        %v2271 = vpop.f32.mrb[0].mxu0
        %v2272 = vadd.f32 0.0, %v2271
        %v2273 = vpop.f32.mrb[0].mxu0
        %2274 = vmatprep.mubr.bf16.mxu0 0
        %2275 = vmatmul.mubr.bf16.gmra.mrb[0].mxu0 %v2172
        %v2276 = vpop.f32.mrb[0].mxu0
        %v2277 = vadd.f32 0.0, %v2276
        %v2278 = vpop.f32.mrb[0].mxu0
        %v2279 = vpop.f32.mrb[0].mxu0
        %v2280 = vadd.f32 0.0, %v2279
        %v2281 = vpop.f32.mrb[0].mxu0
        %2282 = vmatprep.mubr.bf16.mxu0 0
        %2283 = vmatmul.mubr.bf16.gmra.mrb[0].mxu0 %v2173
        %v2284 = vpop.f32.mrb[0].mxu0
        %v2285 = vadd.f32 0.0, %v2284
        %v2286 = vpop.f32.mrb[0].mxu0
        %v2287 = vpop.f32.mrb[0].mxu0
        %v2288 = vadd.f32 0.0, %v2287
        %v2289 = vpop.f32.mrb[0].mxu0
        %2290 = vdwg.mxu0
        %v2291 = vadd.f32 %v2009, %v2261
        %v2292 = vadd.f32 %v2010, %v2264
        %v2293 = vadd.f32 %v2011, %v2269
        %v2294 = vadd.f32 %v2012, %v2272
        %v2295 = vadd.f32 %v2013, %v2277
        %v2296 = vadd.f32 %v2014, %v2280
        %v2297 = vadd.f32 %v2015, %v2285
        %v2298 = vadd.f32 %v2016, %v2288
        %v2300 = vlaneseq
        %v2301 = vshrl.u32 %v2300, 7
        %v2302 = vsub.s32 0, %v2301
        %v2303 = vrot.slane %v356, %v2302
        %v2305 = vadd.f32 %v2291, %v2303
        %v2306 = vadd.f32 %v2292, %v2303
        %v2307 = vadd.f32 %v2293, %v2303
        %v2308 = vadd.f32 %v2294, %v2303
        %v2309 = vadd.f32 %v2295, %v2303
        %v2310 = vadd.f32 %v2296, %v2303
        %v2311 = vadd.f32 %v2297, %v2303
        %v2312 = vadd.f32 %v2298, %v2303
        %v2313 = vmax.f32 %v2305, 0.0
        %v2314 = vmax.f32 %v2306, 0.0
        %v2315 = vmax.f32 %v2307, 0.0
        %v2316 = vmax.f32 %v2308, 0.0
        %v2317 = vmax.f32 %v2309, 0.0
        %v2318 = vmax.f32 %v2310, 0.0
        %v2319 = vmax.f32 %v2311, 0.0
        %v2320 = vmax.f32 %v2312, 0.0
        %v2321 = vpack.c.bf16 %v2314, %v2313
        %v2322 = vpack.c.bf16 %v2316, %v2315
        %v2323 = vpack.c.bf16 %v2318, %v2317
        %v2324 = vpack.c.bf16 %v2320, %v2319
        %v2329 = vunpack.c.l.b16 %v2321
        %v2330 = vunpack.c.h.b16 %v2321
        %v2331 = vunpack.c.l.b16 %v2322
        %v2332 = vunpack.c.h.b16 %v2322
        %v2333 = vunpack.c.l.b16 %v2323
        %v2334 = vunpack.c.h.b16 %v2323
        %v2335 = vunpack.c.l.b16 %v2324
        %v2336 = vunpack.c.h.b16 %v2324
        %v2337 = vpack.c.b16 %v2329, %v2329
        %v2338 = vpack.c.b16 %v2330, %v2330
        %v2339 = vpack.c.b16 %v2331, %v2331
        %v2340 = vpack.c.b16 %v2332, %v2332
        %v2341 = vpack.c.b16 %v2333, %v2333
        %v2342 = vpack.c.b16 %v2334, %v2334
        %v2343 = vpack.c.b16 %v2335, %v2335
        %v2344 = vpack.c.b16 %v2336, %v2336
        %v2346 = vshrl.u32 %v2337, 16
        %v2348 = vrot.slane %v2346, 7
        %v2349 = vshll.u32 %v2337, 16
        %v2351 = vor.u32 %v2348, %v2349
        %v2352 = vrot.slane %v2348, 4
        %v2354 = vshrl.u32 %v2338, 16
        %v2356 = vrot.slane %v2354, 7
        %v2357 = vshll.u32 %v2338, 16
        %v2359 = vor.u32 %v2356, %v2357
        %v2360 = vrot.slane %v2356, 4
        %v2362 = vshrl.u32 %v2339, 16
        %v2364 = vrot.slane %v2362, 7
        %v2365 = vshll.u32 %v2339, 16
        %v2367 = vor.u32 %v2364, %v2365
        %v2368 = vrot.slane %v2364, 4
        %v2370 = vshrl.u32 %v2340, 16
        %v2372 = vrot.slane %v2370, 7
        %v2373 = vshll.u32 %v2340, 16
        %v2375 = vor.u32 %v2372, %v2373
        %v2376 = vrot.slane %v2372, 4
        %v2378 = vshrl.u32 %v2341, 16
        %v2380 = vrot.slane %v2378, 7
        %v2381 = vshll.u32 %v2341, 16
        %v2383 = vor.u32 %v2380, %v2381
        %v2384 = vrot.slane %v2380, 4
        %v2386 = vshrl.u32 %v2342, 16
        %v2388 = vrot.slane %v2386, 7
        %v2389 = vshll.u32 %v2342, 16
        %v2391 = vor.u32 %v2388, %v2389
        %v2392 = vrot.slane %v2388, 4
        %v2394 = vshrl.u32 %v2343, 16
        %v2396 = vrot.slane %v2394, 7
        %v2397 = vshll.u32 %v2343, 16
        %v2399 = vor.u32 %v2396, %v2397
        %v2400 = vrot.slane %v2396, 4
        %v2402 = vshrl.u32 %v2344, 16
        %v2404 = vrot.slane %v2402, 7
        %v2405 = vshll.u32 %v2344, 16
        %v2407 = vor.u32 %v2404, %v2405
        %v2408 = vrot.slane %v2404, 4
        %s2425 = scalar_lea.vmem [#allocation2], 8
        %v2426 = vld [vmem:[%s2425] sm:$0xf]
        %v2427 = vsel %vm424, %v2351, %v2426
        %2428 = vst [vmem:[%s2425] sm:$0xf] %v2427
        %v2429 = vld [vmem:[%s2425 + $0x4] sm:$0x1]
        %v2430 = vsel %vm360, %v2352, %v2429
        %2431 = vst [vmem:[%s2425 + $0x4] sm:$0x1] %v2430
        %v2432 = vld [vmem:[%s2425 + $0x8] sm:$0xf]
        %v2433 = vsel %vm424, %v2359, %v2432
        %2434 = vst [vmem:[%s2425 + $0x8] sm:$0xf] %v2433
        %v2435 = vld [vmem:[%s2425 + $0xc] sm:$0x1]
        %v2436 = vsel %vm360, %v2360, %v2435
        %2437 = vst [vmem:[%s2425 + $0xc] sm:$0x1] %v2436
        %v2438 = vld [vmem:[%s2425 + $0x10] sm:$0xf]
        %v2439 = vsel %vm424, %v2367, %v2438
        %2440 = vst [vmem:[%s2425 + $0x10] sm:$0xf] %v2439
        %v2441 = vld [vmem:[%s2425 + $0x14] sm:$0x1]
        %v2442 = vsel %vm360, %v2368, %v2441
        %2443 = vst [vmem:[%s2425 + $0x14] sm:$0x1] %v2442
        %v2444 = vld [vmem:[%s2425 + $0x18] sm:$0xf]
        %v2445 = vsel %vm424, %v2375, %v2444
        %2446 = vst [vmem:[%s2425 + $0x18] sm:$0xf] %v2445
        %v2447 = vld [vmem:[%s2425 + $0x1c] sm:$0x1]
        %v2448 = vsel %vm360, %v2376, %v2447
        %2449 = vst [vmem:[%s2425 + $0x1c] sm:$0x1] %v2448
        %v2450 = vld [vmem:[%s2425 + $0x20] sm:$0xf]
        %v2451 = vsel %vm424, %v2383, %v2450
        %2452 = vst [vmem:[%s2425 + $0x20] sm:$0xf] %v2451
        %v2453 = vld [vmem:[%s2425 + $0x24] sm:$0x1]
        %v2454 = vsel %vm360, %v2384, %v2453
        %2455 = vst [vmem:[%s2425 + $0x24] sm:$0x1] %v2454
        %v2456 = vld [vmem:[%s2425 + $0x28] sm:$0xf]
        %v2457 = vsel %vm424, %v2391, %v2456
        %2458 = vst [vmem:[%s2425 + $0x28] sm:$0xf] %v2457
        %v2459 = vld [vmem:[%s2425 + $0x2c] sm:$0x1]
        %v2460 = vsel %vm360, %v2392, %v2459
        %2461 = vst [vmem:[%s2425 + $0x2c] sm:$0x1] %v2460
        %v2462 = vld [vmem:[%s2425 + $0x30] sm:$0xf]
        %v2463 = vsel %vm424, %v2399, %v2462
        %2464 = vst [vmem:[%s2425 + $0x30] sm:$0xf] %v2463
        %v2465 = vld [vmem:[%s2425 + $0x34] sm:$0x1]
        %v2466 = vsel %vm360, %v2400, %v2465
        %2467 = vst [vmem:[%s2425 + $0x34] sm:$0x1] %v2466
        %v2468 = vld [vmem:[%s2425 + $0x38] sm:$0xf]
        %v2469 = vsel %vm424, %v2407, %v2468
        %2470 = vst [vmem:[%s2425 + $0x38] sm:$0xf] %v2469
        %v2471 = vld [vmem:[%s2425 + $0x3c] sm:$0x1]
        %v2472 = vsel %vm360, %v2408, %v2471
        %2473 = vst [vmem:[%s2425 + $0x3c] sm:$0x1] %v2472
        %v2474 = vld [vmem:[#allocation2] sm:$0xf]
        %v2475 = vld [vmem:[#allocation2 + $0x8] sm:$0xf]
        %v2476 = vld [vmem:[#allocation2 + $0x10] sm:$0xf]
        %v2477 = vld [vmem:[#allocation2 + $0x18] sm:$0xf]
        %v2478 = vld [vmem:[#allocation2 + $0x20] sm:$0xf]
        %v2479 = vld [vmem:[#allocation2 + $0x28] sm:$0xf]
        %v2480 = vld [vmem:[#allocation2 + $0x30] sm:$0xf]
        %v2481 = vld [vmem:[#allocation2 + $0x38] sm:$0xf]
        %v2482 = vld [vmem:[#allocation3] sm:$0xf]
        %v2483 = vld [vmem:[#allocation3 + $0x4] sm:$0xf]
        %v2484 = vld [vmem:[#allocation3 + $0x8] sm:$0xf]
        %v2485 = vld [vmem:[#allocation3 + $0xc] sm:$0xf]
        %v2486 = vld [vmem:[#allocation3 + $0x10] sm:$0xf]
        %v2487 = vld [vmem:[#allocation3 + $0x14] sm:$0xf]
        %v2488 = vld [vmem:[#allocation3 + $0x18] sm:$0xf]
        %v2489 = vld [vmem:[#allocation3 + $0x1c] sm:$0xf]
        %v2490 = vld [vmem:[#allocation3 + $0x20] sm:$0xf]
        %v2491 = vld [vmem:[#allocation3 + $0x24] sm:$0xf]
        %v2492 = vld [vmem:[#allocation3 + $0x28] sm:$0xf]
        %v2493 = vld [vmem:[#allocation3 + $0x2c] sm:$0xf]
        %v2494 = vld [vmem:[#allocation3 + $0x30] sm:$0xf]
        %v2495 = vld [vmem:[#allocation3 + $0x34] sm:$0xf]
        %v2496 = vld [vmem:[#allocation3 + $0x38] sm:$0xf]
        %v2497 = vld [vmem:[#allocation3 + $0x3c] sm:$0xf]
        %v2498 = vld [vmem:[#allocation2 + $0x4] sm:$0x1]
        %v2499 = vld [vmem:[#allocation2 + $0xc] sm:$0x1]
        %v2500 = vld [vmem:[#allocation2 + $0x14] sm:$0x1]
        %v2501 = vld [vmem:[#allocation2 + $0x1c] sm:$0x1]
        %v2502 = vld [vmem:[#allocation2 + $0x24] sm:$0x1]
        %v2503 = vld [vmem:[#allocation2 + $0x2c] sm:$0x1]
        %v2504 = vld [vmem:[#allocation2 + $0x34] sm:$0x1]
        %v2505 = vld [vmem:[#allocation2 + $0x3c] sm:$0x1]
        %v2507 = vshrl.u32 %v2474, 16
        %v2509 = vrot.slane %v2507, 4
        %v2510 = vshll.u32 %v2474, 16
        %v2512 = vrot.slane %v2510, 5
        %v2513 = vor.u32 %v2509, %v2512
        %v2514 = vrot.slane %v2513, 4
        %v2516 = vshll.u32 %v2498, 16
        %v2518 = vrot.slane %v2516, 5
        %v2519 = vsel %vm782, %v2514, %v2518
        %v2521 = vshrl.u32 %v2475, 16
        %v2523 = vrot.slane %v2521, 4
        %v2524 = vshll.u32 %v2475, 16
        %v2526 = vrot.slane %v2524, 5
        %v2527 = vor.u32 %v2523, %v2526
        %v2528 = vrot.slane %v2527, 4
        %v2530 = vshll.u32 %v2499, 16
        %v2532 = vrot.slane %v2530, 5
        %v2533 = vsel %vm782, %v2528, %v2532
        %v2535 = vshrl.u32 %v2476, 16
        %v2537 = vrot.slane %v2535, 4
        %v2538 = vshll.u32 %v2476, 16
        %v2540 = vrot.slane %v2538, 5
        %v2541 = vor.u32 %v2537, %v2540
        %v2542 = vrot.slane %v2541, 4
        %v2544 = vshll.u32 %v2500, 16
        %v2546 = vrot.slane %v2544, 5
        %v2547 = vsel %vm782, %v2542, %v2546
        %v2549 = vshrl.u32 %v2477, 16
        %v2551 = vrot.slane %v2549, 4
        %v2552 = vshll.u32 %v2477, 16
        %v2554 = vrot.slane %v2552, 5
        %v2555 = vor.u32 %v2551, %v2554
        %v2556 = vrot.slane %v2555, 4
        %v2558 = vshll.u32 %v2501, 16
        %v2560 = vrot.slane %v2558, 5
        %v2561 = vsel %vm782, %v2556, %v2560
        %v2563 = vshrl.u32 %v2478, 16
        %v2565 = vrot.slane %v2563, 4
        %v2566 = vshll.u32 %v2478, 16
        %v2568 = vrot.slane %v2566, 5
        %v2569 = vor.u32 %v2565, %v2568
        %v2570 = vrot.slane %v2569, 4
        %v2572 = vshll.u32 %v2502, 16
        %v2574 = vrot.slane %v2572, 5
        %v2575 = vsel %vm782, %v2570, %v2574
        %v2577 = vshrl.u32 %v2479, 16
        %v2579 = vrot.slane %v2577, 4
        %v2580 = vshll.u32 %v2479, 16
        %v2582 = vrot.slane %v2580, 5
        %v2583 = vor.u32 %v2579, %v2582
        %v2584 = vrot.slane %v2583, 4
        %v2586 = vshll.u32 %v2503, 16
        %v2588 = vrot.slane %v2586, 5
        %v2589 = vsel %vm782, %v2584, %v2588
        %v2591 = vshrl.u32 %v2480, 16
        %v2593 = vrot.slane %v2591, 4
        %v2594 = vshll.u32 %v2480, 16
        %v2596 = vrot.slane %v2594, 5
        %v2597 = vor.u32 %v2593, %v2596
        %v2598 = vrot.slane %v2597, 4
        %v2600 = vshll.u32 %v2504, 16
        %v2602 = vrot.slane %v2600, 5
        %v2603 = vsel %vm782, %v2598, %v2602
        %v2605 = vshrl.u32 %v2481, 16
        %v2607 = vrot.slane %v2605, 4
        %v2608 = vshll.u32 %v2481, 16
        %v2610 = vrot.slane %v2608, 5
        %v2611 = vor.u32 %v2607, %v2610
        %v2612 = vrot.slane %v2611, 4
        %v2614 = vshll.u32 %v2505, 16
        %v2616 = vrot.slane %v2614, 5
        %v2617 = vsel %vm782, %v2612, %v2616
        %s2618 = scalar_lea.vmem [#allocation3], 64
        %v2619 = vld [vmem:[%s2618] sm:$0xf]
        %v2620 = vld [vmem:[%s2618 + $0x4] sm:$0xf]
        %v2621 = vld [vmem:[%s2618 + $0x8] sm:$0xf]
        %v2622 = vld [vmem:[%s2618 + $0xc] sm:$0xf]
        %v2623 = vld [vmem:[%s2618 + $0x10] sm:$0xf]
        %v2624 = vld [vmem:[%s2618 + $0x14] sm:$0xf]
        %v2625 = vld [vmem:[%s2618 + $0x18] sm:$0xf]
        %v2626 = vld [vmem:[%s2618 + $0x1c] sm:$0xf]
        %v2627 = vld [vmem:[%s2618 + $0x20] sm:$0xf]
        %v2628 = vld [vmem:[%s2618 + $0x24] sm:$0xf]
        %v2629 = vld [vmem:[%s2618 + $0x28] sm:$0xf]
        %v2630 = vld [vmem:[%s2618 + $0x2c] sm:$0xf]
        %v2631 = vld [vmem:[%s2618 + $0x30] sm:$0xf]
        %v2632 = vld [vmem:[%s2618 + $0x34] sm:$0xf]
        %v2633 = vld [vmem:[%s2618 + $0x38] sm:$0xf]
        %v2634 = vld [vmem:[%s2618 + $0x3c] sm:$0xf]
        %v2635 = vunpack.c.l.b16 %v2519
        %v2636 = vunpack.c.l.b16 %v2533
        %v2637 = vunpack.c.l.b16 %v2547
        %v2638 = vunpack.c.l.b16 %v2561
        %v2639 = vunpack.c.l.b16 %v2575
        %v2640 = vunpack.c.l.b16 %v2589
        %v2641 = vunpack.c.l.b16 %v2603
        %v2642 = vunpack.c.l.b16 %v2617
        %v2643 = vpack.c.b16 %v2636, %v2635
        %v2644 = vpack.c.b16 %v2638, %v2637
        %v2645 = vpack.c.b16 %v2640, %v2639
        %v2646 = vpack.c.b16 %v2642, %v2641
        %v2667 = vunpack.c.l.b16 %v2619
        %v2668 = vunpack.c.l.b16 %v2620
        %v2669 = vunpack.c.l.b16 %v2621
        %v2670 = vunpack.c.l.b16 %v2622
        %v2671 = vunpack.c.l.b16 %v2623
        %v2672 = vunpack.c.l.b16 %v2624
        %v2673 = vunpack.c.l.b16 %v2625
        %v2674 = vunpack.c.l.b16 %v2626
        %v2675 = vunpack.c.l.b16 %v2627
        %v2676 = vunpack.c.l.b16 %v2628
        %v2677 = vunpack.c.l.b16 %v2629
        %v2678 = vunpack.c.l.b16 %v2630
        %v2679 = vunpack.c.l.b16 %v2631
        %v2680 = vunpack.c.l.b16 %v2632
        %v2681 = vunpack.c.l.b16 %v2633
        %v2682 = vunpack.c.l.b16 %v2634
        %v2683 = vpack.c.b16 %v2668, %v2667
        %v2684 = vpack.c.b16 %v2670, %v2669
        %v2685 = vpack.c.b16 %v2672, %v2671
        %v2686 = vpack.c.b16 %v2674, %v2673
        %v2687 = vpack.c.b16 %v2676, %v2675
        %v2688 = vpack.c.b16 %v2678, %v2677
        %v2689 = vpack.c.b16 %v2680, %v2679
        %v2690 = vpack.c.b16 %v2682, %v2681
        %2699 = vmatprep.subr.bf16.mxu0 0
        %2700 = vmatpush1.bf16.msra.mxu0 %v2683
        %2701 = vmatprep.subr.bf16.mxu0 0
        %2702 = vmatpush1.bf16.msra.mxu0 %v2684
        %2703 = vmatprep.subr.bf16.mxu0 0
        %2704 = vmatpush1.bf16.msra.mxu0 %v2685
        %2705 = vmatprep.subr.bf16.mxu0 0
        %2706 = vmatpush1.bf16.msra.mxu0 %v2686
        %2707 = vmatprep.subr.bf16.mxu0 0
        %2708 = vmatpush1.bf16.msra.mxu0 %v2687
        %2709 = vmatprep.subr.bf16.mxu0 0
        %2710 = vmatpush1.bf16.msra.mxu0 %v2688
        %2711 = vmatprep.subr.bf16.mxu0 0
        %2712 = vmatpush1.bf16.msra.mxu0 %v2689
        %2713 = vmatprep.subr.bf16.mxu0 0
        %2714 = vmatpush1.bf16.msra.mxu0 %v2690
        %2715 = vmatprep.subr.bf16.mxu0 0
        %2716 = vmatpush1.bf16.msra.mxu0 0
        %2717 = vmatprep.subr.bf16.mxu0 0
        %2718 = vmatpush1.bf16.msra.mxu0 0
        %2719 = vmatprep.subr.bf16.mxu0 0
        %2720 = vmatpush1.bf16.msra.mxu0 0
        %2721 = vmatprep.subr.bf16.mxu0 0
        %2722 = vmatpush1.bf16.msra.mxu0 0
        %2723 = vmatprep.subr.bf16.mxu0 0
        %2724 = vmatpush1.bf16.msra.mxu0 0
        %2725 = vmatprep.subr.bf16.mxu0 0
        %2726 = vmatpush1.bf16.msra.mxu0 0
        %2727 = vmatprep.subr.bf16.mxu0 0
        %2728 = vmatpush1.bf16.msra.mxu0 0
        %2729 = vmatprep.subr.bf16.mxu0 0
        %2730 = vmatpush1.bf16.msra.mxu0 0
        %2731 = vmatprep.mubr.bf16.mxu0 0
        %2732 = vmatmul.mubr.bf16.gmra.mrb[0].mxu0 %v2643
        %v2733 = vpop.f32.mrb[0].mxu0
        %v2734 = vadd.f32 0.0, %v2733
        %v2735 = vpop.f32.mrb[0].mxu0
        %v2736 = vpop.f32.mrb[0].mxu0
        %v2737 = vadd.f32 0.0, %v2736
        %v2738 = vpop.f32.mrb[0].mxu0
        %2739 = vmatprep.mubr.bf16.mxu0 0
        %2740 = vmatmul.mubr.bf16.gmra.mrb[0].mxu0 %v2644
        %v2741 = vpop.f32.mrb[0].mxu0
        %v2742 = vadd.f32 0.0, %v2741
        %v2743 = vpop.f32.mrb[0].mxu0
        %v2744 = vpop.f32.mrb[0].mxu0
        %v2745 = vadd.f32 0.0, %v2744
        %v2746 = vpop.f32.mrb[0].mxu0
        %2747 = vmatprep.mubr.bf16.mxu0 0
        %2748 = vmatmul.mubr.bf16.gmra.mrb[0].mxu0 %v2645
        %v2749 = vpop.f32.mrb[0].mxu0
        %v2750 = vadd.f32 0.0, %v2749
        %v2751 = vpop.f32.mrb[0].mxu0
        %v2752 = vpop.f32.mrb[0].mxu0
        %v2753 = vadd.f32 0.0, %v2752
        %v2754 = vpop.f32.mrb[0].mxu0
        %2755 = vmatprep.mubr.bf16.mxu0 0
        %2756 = vmatmul.mubr.bf16.gmra.mrb[0].mxu0 %v2646
        %v2757 = vpop.f32.mrb[0].mxu0
        %v2758 = vadd.f32 0.0, %v2757
        %v2759 = vpop.f32.mrb[0].mxu0
        %v2760 = vpop.f32.mrb[0].mxu0
        %v2761 = vadd.f32 0.0, %v2760
        %v2762 = vpop.f32.mrb[0].mxu0
        %2763 = vdwg.mxu0
        %v2772 = vunpack.c.l.b16 %v2474
        %v2773 = vunpack.c.l.b16 %v2475
        %v2774 = vunpack.c.l.b16 %v2476
        %v2775 = vunpack.c.l.b16 %v2477
        %v2776 = vunpack.c.l.b16 %v2478
        %v2777 = vunpack.c.l.b16 %v2479
        %v2778 = vunpack.c.l.b16 %v2480
        %v2779 = vunpack.c.l.b16 %v2481
        %v2780 = vpack.c.b16 %v2773, %v2772
        %v2781 = vpack.c.b16 %v2775, %v2774
        %v2782 = vpack.c.b16 %v2777, %v2776
        %v2783 = vpack.c.b16 %v2779, %v2778
        %v2804 = vunpack.c.l.b16 %v2482
        %v2805 = vunpack.c.l.b16 %v2483
        %v2806 = vunpack.c.l.b16 %v2484
        %v2807 = vunpack.c.l.b16 %v2485
        %v2808 = vunpack.c.l.b16 %v2486
        %v2809 = vunpack.c.l.b16 %v2487
        %v2810 = vunpack.c.l.b16 %v2488
        %v2811 = vunpack.c.l.b16 %v2489
        %v2812 = vunpack.c.l.b16 %v2490
        %v2813 = vunpack.c.l.b16 %v2491
        %v2814 = vunpack.c.l.b16 %v2492
        %v2815 = vunpack.c.l.b16 %v2493
        %v2816 = vunpack.c.l.b16 %v2494
        %v2817 = vunpack.c.l.b16 %v2495
        %v2818 = vunpack.c.l.b16 %v2496
        %v2819 = vunpack.c.l.b16 %v2497
        %v2820 = vpack.c.b16 %v2805, %v2804
        %v2821 = vpack.c.b16 %v2807, %v2806
        %v2822 = vpack.c.b16 %v2809, %v2808
        %v2823 = vpack.c.b16 %v2811, %v2810
        %v2824 = vpack.c.b16 %v2813, %v2812
        %v2825 = vpack.c.b16 %v2815, %v2814
        %v2826 = vpack.c.b16 %v2817, %v2816
        %v2827 = vpack.c.b16 %v2819, %v2818
        %2836 = vmatprep.subr.bf16.mxu0 0
        %2837 = vmatpush1.bf16.msra.mxu0 %v2820
        %2838 = vmatprep.subr.bf16.mxu0 0
        %2839 = vmatpush1.bf16.msra.mxu0 %v2821
        %2840 = vmatprep.subr.bf16.mxu0 0
        %2841 = vmatpush1.bf16.msra.mxu0 %v2822
        %2842 = vmatprep.subr.bf16.mxu0 0
        %2843 = vmatpush1.bf16.msra.mxu0 %v2823
        %2844 = vmatprep.subr.bf16.mxu0 0
        %2845 = vmatpush1.bf16.msra.mxu0 %v2824
        %2846 = vmatprep.subr.bf16.mxu0 0
        %2847 = vmatpush1.bf16.msra.mxu0 %v2825
        %2848 = vmatprep.subr.bf16.mxu0 0
        %2849 = vmatpush1.bf16.msra.mxu0 %v2826
        %2850 = vmatprep.subr.bf16.mxu0 0
        %2851 = vmatpush1.bf16.msra.mxu0 %v2827
        %2852 = vmatprep.subr.bf16.mxu0 0
        %2853 = vmatpush1.bf16.msra.mxu0 0
        %2854 = vmatprep.subr.bf16.mxu0 0
        %2855 = vmatpush1.bf16.msra.mxu0 0
        %2856 = vmatprep.subr.bf16.mxu0 0
        %2857 = vmatpush1.bf16.msra.mxu0 0
        %2858 = vmatprep.subr.bf16.mxu0 0
        %2859 = vmatpush1.bf16.msra.mxu0 0
        %2860 = vmatprep.subr.bf16.mxu0 0
        %2861 = vmatpush1.bf16.msra.mxu0 0
        %2862 = vmatprep.subr.bf16.mxu0 0
        %2863 = vmatpush1.bf16.msra.mxu0 0
        %2864 = vmatprep.subr.bf16.mxu0 0
        %2865 = vmatpush1.bf16.msra.mxu0 0
        %2866 = vmatprep.subr.bf16.mxu0 0
        %2867 = vmatpush1.bf16.msra.mxu0 0
        %2868 = vmatprep.mubr.bf16.mxu0 0
        %2869 = vmatmul.mubr.bf16.gmra.mrb[0].mxu0 %v2780
        %v2870 = vpop.f32.mrb[0].mxu0
        %v2871 = vadd.f32 %v2734, %v2870
        %v2872 = vpop.f32.mrb[0].mxu0
        %v2873 = vpop.f32.mrb[0].mxu0
        %v2874 = vadd.f32 %v2737, %v2873
        %v2875 = vpop.f32.mrb[0].mxu0
        %2876 = vmatprep.mubr.bf16.mxu0 0
        %2877 = vmatmul.mubr.bf16.gmra.mrb[0].mxu0 %v2781
        %v2878 = vpop.f32.mrb[0].mxu0
        %v2879 = vadd.f32 %v2742, %v2878
        %v2880 = vpop.f32.mrb[0].mxu0
        %v2881 = vpop.f32.mrb[0].mxu0
        %v2882 = vadd.f32 %v2745, %v2881
        %v2883 = vpop.f32.mrb[0].mxu0
        %2884 = vmatprep.mubr.bf16.mxu0 0
        %2885 = vmatmul.mubr.bf16.gmra.mrb[0].mxu0 %v2782
        %v2886 = vpop.f32.mrb[0].mxu0
        %v2887 = vadd.f32 %v2750, %v2886
        %v2888 = vpop.f32.mrb[0].mxu0
        %v2889 = vpop.f32.mrb[0].mxu0
        %v2890 = vadd.f32 %v2753, %v2889
        %v2891 = vpop.f32.mrb[0].mxu0
        %2892 = vmatprep.mubr.bf16.mxu0 0
        %2893 = vmatmul.mubr.bf16.gmra.mrb[0].mxu0 %v2783
        %v2894 = vpop.f32.mrb[0].mxu0
        %v2895 = vadd.f32 %v2758, %v2894
        %v2896 = vpop.f32.mrb[0].mxu0
        %v2897 = vpop.f32.mrb[0].mxu0
        %v2898 = vadd.f32 %v2761, %v2897
        %v2899 = vpop.f32.mrb[0].mxu0
        %2900 = vdwg.mxu0
        %v2901 = vld [vmem:[#allocation2] sm:$0xe]
        %v2902 = vld [vmem:[#allocation2 + $0x8] sm:$0xe]
        %v2903 = vld [vmem:[#allocation2 + $0x10] sm:$0xe]
        %v2904 = vld [vmem:[#allocation2 + $0x18] sm:$0xe]
        %v2905 = vld [vmem:[#allocation2 + $0x20] sm:$0xe]
        %v2906 = vld [vmem:[#allocation2 + $0x28] sm:$0xe]
        %v2907 = vld [vmem:[#allocation2 + $0x30] sm:$0xe]
        %v2908 = vld [vmem:[#allocation2 + $0x38] sm:$0xe]
        %vm2925 = vcmask 1042432
        %vm2926 = vcmask 1046532
        %vm2927 = vmor %vm2925, %vm2926
        %v2928 = vrot.slane %v2901, 5
        %v2929 = vrot.slane %v2928, 4
        %v2930 = vrot.slane %v2498, 5
        %v2931 = vsel %vm2927, %v2929, %v2930
        %v2932 = vrot.slane %v2902, 5
        %v2933 = vrot.slane %v2932, 4
        %v2934 = vrot.slane %v2499, 5
        %v2935 = vsel %vm2927, %v2933, %v2934
        %v2936 = vrot.slane %v2903, 5
        %v2937 = vrot.slane %v2936, 4
        %v2938 = vrot.slane %v2500, 5
        %v2939 = vsel %vm2927, %v2937, %v2938
        %v2940 = vrot.slane %v2904, 5
        %v2941 = vrot.slane %v2940, 4
        %v2942 = vrot.slane %v2501, 5
        %v2943 = vsel %vm2927, %v2941, %v2942
        %v2944 = vrot.slane %v2905, 5
        %v2945 = vrot.slane %v2944, 4
        %v2946 = vrot.slane %v2502, 5
        %v2947 = vsel %vm2927, %v2945, %v2946
        %v2948 = vrot.slane %v2906, 5
        %v2949 = vrot.slane %v2948, 4
        %v2950 = vrot.slane %v2503, 5
        %v2951 = vsel %vm2927, %v2949, %v2950
        %v2952 = vrot.slane %v2907, 5
        %v2953 = vrot.slane %v2952, 4
        %v2954 = vrot.slane %v2504, 5
        %v2955 = vsel %vm2927, %v2953, %v2954
        %v2956 = vrot.slane %v2908, 5
        %v2957 = vrot.slane %v2956, 4
        %v2958 = vrot.slane %v2505, 5
        %v2959 = vsel %vm2927, %v2957, %v2958
        %s2960 = scalar_lea.vmem [#allocation3], 128
        %v2961 = vld [vmem:[%s2960] sm:$0xf]
        %v2962 = vld [vmem:[%s2960 + $0x4] sm:$0xf]
        %v2963 = vld [vmem:[%s2960 + $0x8] sm:$0xf]
        %v2964 = vld [vmem:[%s2960 + $0xc] sm:$0xf]
        %v2965 = vld [vmem:[%s2960 + $0x10] sm:$0xf]
        %v2966 = vld [vmem:[%s2960 + $0x14] sm:$0xf]
        %v2967 = vld [vmem:[%s2960 + $0x18] sm:$0xf]
        %v2968 = vld [vmem:[%s2960 + $0x1c] sm:$0xf]
        %v2969 = vld [vmem:[%s2960 + $0x20] sm:$0xf]
        %v2970 = vld [vmem:[%s2960 + $0x24] sm:$0xf]
        %v2971 = vld [vmem:[%s2960 + $0x28] sm:$0xf]
        %v2972 = vld [vmem:[%s2960 + $0x2c] sm:$0xf]
        %v2973 = vld [vmem:[%s2960 + $0x30] sm:$0xf]
        %v2974 = vld [vmem:[%s2960 + $0x34] sm:$0xf]
        %v2975 = vld [vmem:[%s2960 + $0x38] sm:$0xf]
        %v2976 = vld [vmem:[%s2960 + $0x3c] sm:$0xf]
        %v2977 = vunpack.c.l.b16 %v2931
        %v2978 = vunpack.c.l.b16 %v2935
        %v2979 = vunpack.c.l.b16 %v2939
        %v2980 = vunpack.c.l.b16 %v2943
        %v2981 = vunpack.c.l.b16 %v2947
        %v2982 = vunpack.c.l.b16 %v2951
        %v2983 = vunpack.c.l.b16 %v2955
        %v2984 = vunpack.c.l.b16 %v2959
        %v2985 = vpack.c.b16 %v2978, %v2977
        %v2986 = vpack.c.b16 %v2980, %v2979
        %v2987 = vpack.c.b16 %v2982, %v2981
        %v2988 = vpack.c.b16 %v2984, %v2983
        %v3009 = vunpack.c.l.b16 %v2961
        %v3010 = vunpack.c.l.b16 %v2962
        %v3011 = vunpack.c.l.b16 %v2963
        %v3012 = vunpack.c.l.b16 %v2964
        %v3013 = vunpack.c.l.b16 %v2965
        %v3014 = vunpack.c.l.b16 %v2966
        %v3015 = vunpack.c.l.b16 %v2967
        %v3016 = vunpack.c.l.b16 %v2968
        %v3017 = vunpack.c.l.b16 %v2969
        %v3018 = vunpack.c.l.b16 %v2970
        %v3019 = vunpack.c.l.b16 %v2971
        %v3020 = vunpack.c.l.b16 %v2972
        %v3021 = vunpack.c.l.b16 %v2973
        %v3022 = vunpack.c.l.b16 %v2974
        %v3023 = vunpack.c.l.b16 %v2975
        %v3024 = vunpack.c.l.b16 %v2976
        %v3025 = vpack.c.b16 %v3010, %v3009
        %v3026 = vpack.c.b16 %v3012, %v3011
        %v3027 = vpack.c.b16 %v3014, %v3013
        %v3028 = vpack.c.b16 %v3016, %v3015
        %v3029 = vpack.c.b16 %v3018, %v3017
        %v3030 = vpack.c.b16 %v3020, %v3019
        %v3031 = vpack.c.b16 %v3022, %v3021
        %v3032 = vpack.c.b16 %v3024, %v3023
        %3041 = vmatprep.subr.bf16.mxu0 0
        %3042 = vmatpush1.bf16.msra.mxu0 %v3025
        %3043 = vmatprep.subr.bf16.mxu0 0
        %3044 = vmatpush1.bf16.msra.mxu0 %v3026
        %3045 = vmatprep.subr.bf16.mxu0 0
        %3046 = vmatpush1.bf16.msra.mxu0 %v3027
        %3047 = vmatprep.subr.bf16.mxu0 0
        %3048 = vmatpush1.bf16.msra.mxu0 %v3028
        %3049 = vmatprep.subr.bf16.mxu0 0
        %3050 = vmatpush1.bf16.msra.mxu0 %v3029
        %3051 = vmatprep.subr.bf16.mxu0 0
        %3052 = vmatpush1.bf16.msra.mxu0 %v3030
        %3053 = vmatprep.subr.bf16.mxu0 0
        %3054 = vmatpush1.bf16.msra.mxu0 %v3031
        %3055 = vmatprep.subr.bf16.mxu0 0
        %3056 = vmatpush1.bf16.msra.mxu0 %v3032
        %3057 = vmatprep.subr.bf16.mxu0 0
        %3058 = vmatpush1.bf16.msra.mxu0 0
        %3059 = vmatprep.subr.bf16.mxu0 0
        %3060 = vmatpush1.bf16.msra.mxu0 0
        %3061 = vmatprep.subr.bf16.mxu0 0
        %3062 = vmatpush1.bf16.msra.mxu0 0
        %3063 = vmatprep.subr.bf16.mxu0 0
        %3064 = vmatpush1.bf16.msra.mxu0 0
        %3065 = vmatprep.subr.bf16.mxu0 0
        %3066 = vmatpush1.bf16.msra.mxu0 0
        %3067 = vmatprep.subr.bf16.mxu0 0
        %3068 = vmatpush1.bf16.msra.mxu0 0
        %3069 = vmatprep.subr.bf16.mxu0 0
        %3070 = vmatpush1.bf16.msra.mxu0 0
        %3071 = vmatprep.subr.bf16.mxu0 0
        %3072 = vmatpush1.bf16.msra.mxu0 0
        %3073 = vmatprep.mubr.bf16.mxu0 0
        %3074 = vmatmul.mubr.bf16.gmra.mrb[0].mxu0 %v2985
        %v3075 = vpop.f32.mrb[0].mxu0
        %v3076 = vadd.f32 0.0, %v3075
        %v3077 = vpop.f32.mrb[0].mxu0
        %v3078 = vpop.f32.mrb[0].mxu0
        %v3079 = vadd.f32 0.0, %v3078
        %v3080 = vpop.f32.mrb[0].mxu0
        %3081 = vmatprep.mubr.bf16.mxu0 0
        %3082 = vmatmul.mubr.bf16.gmra.mrb[0].mxu0 %v2986
        %v3083 = vpop.f32.mrb[0].mxu0
        %v3084 = vadd.f32 0.0, %v3083
        %v3085 = vpop.f32.mrb[0].mxu0
        %v3086 = vpop.f32.mrb[0].mxu0
        %v3087 = vadd.f32 0.0, %v3086
        %v3088 = vpop.f32.mrb[0].mxu0
        %3089 = vmatprep.mubr.bf16.mxu0 0
        %3090 = vmatmul.mubr.bf16.gmra.mrb[0].mxu0 %v2987
        %v3091 = vpop.f32.mrb[0].mxu0
        %v3092 = vadd.f32 0.0, %v3091
        %v3093 = vpop.f32.mrb[0].mxu0
        %v3094 = vpop.f32.mrb[0].mxu0
        %v3095 = vadd.f32 0.0, %v3094
        %v3096 = vpop.f32.mrb[0].mxu0
        %3097 = vmatprep.mubr.bf16.mxu0 0
        %3098 = vmatmul.mubr.bf16.gmra.mrb[0].mxu0 %v2988
        %v3099 = vpop.f32.mrb[0].mxu0
        %v3100 = vadd.f32 0.0, %v3099
        %v3101 = vpop.f32.mrb[0].mxu0
        %v3102 = vpop.f32.mrb[0].mxu0
        %v3103 = vadd.f32 0.0, %v3102
        %v3104 = vpop.f32.mrb[0].mxu0
        %3105 = vdwg.mxu0
        %v3106 = vadd.f32 %v2871, %v3076
        %v3107 = vadd.f32 %v2874, %v3079
        %v3108 = vadd.f32 %v2879, %v3084
        %v3109 = vadd.f32 %v2882, %v3087
        %v3110 = vadd.f32 %v2887, %v3092
        %v3111 = vadd.f32 %v2890, %v3095
        %v3112 = vadd.f32 %v2895, %v3100
        %v3113 = vadd.f32 %v2898, %v3103
        %v3114 = vld [vmem:[%s2425] sm:$0xf]
        %v3115 = vld [vmem:[%s2425 + $0x8] sm:$0xf]
        %v3116 = vld [vmem:[%s2425 + $0x10] sm:$0xf]
        %v3117 = vld [vmem:[%s2425 + $0x18] sm:$0xf]
        %v3118 = vld [vmem:[%s2425 + $0x20] sm:$0xf]
        %v3119 = vld [vmem:[%s2425 + $0x28] sm:$0xf]
        %v3120 = vld [vmem:[%s2425 + $0x30] sm:$0xf]
        %v3121 = vld [vmem:[%s2425 + $0x38] sm:$0xf]
        %s3122 = scalar_lea.vmem [#allocation3], 192
        %v3123 = vld [vmem:[%s3122] sm:$0xf]
        %v3124 = vld [vmem:[%s3122 + $0x4] sm:$0xf]
        %v3125 = vld [vmem:[%s3122 + $0x8] sm:$0xf]
        %v3126 = vld [vmem:[%s3122 + $0xc] sm:$0xf]
        %v3127 = vld [vmem:[%s3122 + $0x10] sm:$0xf]
        %v3128 = vld [vmem:[%s3122 + $0x14] sm:$0xf]
        %v3129 = vld [vmem:[%s3122 + $0x18] sm:$0xf]
        %v3130 = vld [vmem:[%s3122 + $0x1c] sm:$0xf]
        %v3131 = vld [vmem:[%s3122 + $0x20] sm:$0xf]
        %v3132 = vld [vmem:[%s3122 + $0x24] sm:$0xf]
        %v3133 = vld [vmem:[%s3122 + $0x28] sm:$0xf]
        %v3134 = vld [vmem:[%s3122 + $0x2c] sm:$0xf]
        %v3135 = vld [vmem:[%s3122 + $0x30] sm:$0xf]
        %v3136 = vld [vmem:[%s3122 + $0x34] sm:$0xf]
        %v3137 = vld [vmem:[%s3122 + $0x38] sm:$0xf]
        %v3138 = vld [vmem:[%s3122 + $0x3c] sm:$0xf]
        %v3147 = vunpack.c.l.b16 %v3114
        %v3148 = vunpack.c.l.b16 %v3115
        %v3149 = vunpack.c.l.b16 %v3116
        %v3150 = vunpack.c.l.b16 %v3117
        %v3151 = vunpack.c.l.b16 %v3118
        %v3152 = vunpack.c.l.b16 %v3119
        %v3153 = vunpack.c.l.b16 %v3120
        %v3154 = vunpack.c.l.b16 %v3121
        %v3155 = vpack.c.b16 %v3148, %v3147
        %v3156 = vpack.c.b16 %v3150, %v3149
        %v3157 = vpack.c.b16 %v3152, %v3151
        %v3158 = vpack.c.b16 %v3154, %v3153
        %v3179 = vunpack.c.l.b16 %v3123
        %v3180 = vunpack.c.l.b16 %v3124
        %v3181 = vunpack.c.l.b16 %v3125
        %v3182 = vunpack.c.l.b16 %v3126
        %v3183 = vunpack.c.l.b16 %v3127
        %v3184 = vunpack.c.l.b16 %v3128
        %v3185 = vunpack.c.l.b16 %v3129
        %v3186 = vunpack.c.l.b16 %v3130
        %v3187 = vunpack.c.l.b16 %v3131
        %v3188 = vunpack.c.l.b16 %v3132
        %v3189 = vunpack.c.l.b16 %v3133
        %v3190 = vunpack.c.l.b16 %v3134
        %v3191 = vunpack.c.l.b16 %v3135
        %v3192 = vunpack.c.l.b16 %v3136
        %v3193 = vunpack.c.l.b16 %v3137
        %v3194 = vunpack.c.l.b16 %v3138
        %v3195 = vpack.c.b16 %v3180, %v3179
        %v3196 = vpack.c.b16 %v3182, %v3181
        %v3197 = vpack.c.b16 %v3184, %v3183
        %v3198 = vpack.c.b16 %v3186, %v3185
        %v3199 = vpack.c.b16 %v3188, %v3187
        %v3200 = vpack.c.b16 %v3190, %v3189
        %v3201 = vpack.c.b16 %v3192, %v3191
        %v3202 = vpack.c.b16 %v3194, %v3193
        %3211 = vmatprep.subr.bf16.mxu0 0
        %3212 = vmatpush1.bf16.msra.mxu0 %v3195
        %3213 = vmatprep.subr.bf16.mxu0 0
        %3214 = vmatpush1.bf16.msra.mxu0 %v3196
        %3215 = vmatprep.subr.bf16.mxu0 0
        %3216 = vmatpush1.bf16.msra.mxu0 %v3197
        %3217 = vmatprep.subr.bf16.mxu0 0
        %3218 = vmatpush1.bf16.msra.mxu0 %v3198
        %3219 = vmatprep.subr.bf16.mxu0 0
        %3220 = vmatpush1.bf16.msra.mxu0 %v3199
        %3221 = vmatprep.subr.bf16.mxu0 0
        %3222 = vmatpush1.bf16.msra.mxu0 %v3200
        %3223 = vmatprep.subr.bf16.mxu0 0
        %3224 = vmatpush1.bf16.msra.mxu0 %v3201
        %3225 = vmatprep.subr.bf16.mxu0 0
        %3226 = vmatpush1.bf16.msra.mxu0 %v3202
        %3227 = vmatprep.subr.bf16.mxu0 0
        %3228 = vmatpush1.bf16.msra.mxu0 0
        %3229 = vmatprep.subr.bf16.mxu0 0
        %3230 = vmatpush1.bf16.msra.mxu0 0
        %3231 = vmatprep.subr.bf16.mxu0 0
        %3232 = vmatpush1.bf16.msra.mxu0 0
        %3233 = vmatprep.subr.bf16.mxu0 0
        %3234 = vmatpush1.bf16.msra.mxu0 0
        %3235 = vmatprep.subr.bf16.mxu0 0
        %3236 = vmatpush1.bf16.msra.mxu0 0
        %3237 = vmatprep.subr.bf16.mxu0 0
        %3238 = vmatpush1.bf16.msra.mxu0 0
        %3239 = vmatprep.subr.bf16.mxu0 0
        %3240 = vmatpush1.bf16.msra.mxu0 0
        %3241 = vmatprep.subr.bf16.mxu0 0
        %3242 = vmatpush1.bf16.msra.mxu0 0
        %3243 = vmatprep.mubr.bf16.mxu0 0
        %3244 = vmatmul.mubr.bf16.gmra.mrb[0].mxu0 %v3155
        %v3245 = vpop.f32.mrb[0].mxu0
        %v3246 = vadd.f32 0.0, %v3245
        %v3247 = vpop.f32.mrb[0].mxu0
        %v3248 = vpop.f32.mrb[0].mxu0
        %v3249 = vadd.f32 0.0, %v3248
        %v3250 = vpop.f32.mrb[0].mxu0
        %3251 = vmatprep.mubr.bf16.mxu0 0
        %3252 = vmatmul.mubr.bf16.gmra.mrb[0].mxu0 %v3156
        %v3253 = vpop.f32.mrb[0].mxu0
        %v3254 = vadd.f32 0.0, %v3253
        %v3255 = vpop.f32.mrb[0].mxu0
        %v3256 = vpop.f32.mrb[0].mxu0
        %v3257 = vadd.f32 0.0, %v3256
        %v3258 = vpop.f32.mrb[0].mxu0
        %3259 = vmatprep.mubr.bf16.mxu0 0
        %3260 = vmatmul.mubr.bf16.gmra.mrb[0].mxu0 %v3157
        %v3261 = vpop.f32.mrb[0].mxu0
        %v3262 = vadd.f32 0.0, %v3261
        %v3263 = vpop.f32.mrb[0].mxu0
        %v3264 = vpop.f32.mrb[0].mxu0
        %v3265 = vadd.f32 0.0, %v3264
        %v3266 = vpop.f32.mrb[0].mxu0
        %3267 = vmatprep.mubr.bf16.mxu0 0
        %3268 = vmatmul.mubr.bf16.gmra.mrb[0].mxu0 %v3158
        %v3269 = vpop.f32.mrb[0].mxu0
        %v3270 = vadd.f32 0.0, %v3269
        %v3271 = vpop.f32.mrb[0].mxu0
        %v3272 = vpop.f32.mrb[0].mxu0
        %v3273 = vadd.f32 0.0, %v3272
        %v3274 = vpop.f32.mrb[0].mxu0
        %3275 = vdwg.mxu0
        %v3276 = vadd.f32 %v3106, %v3246
        %v3277 = vadd.f32 %v3107, %v3249
        %v3278 = vadd.f32 %v3108, %v3254
        %v3279 = vadd.f32 %v3109, %v3257
        %v3280 = vadd.f32 %v3110, %v3262
        %v3281 = vadd.f32 %v3111, %v3265
        %v3282 = vadd.f32 %v3112, %v3270
        %v3283 = vadd.f32 %v3113, %v3273
        %v3284 = vld [vmem:[%s2425] sm:$0xf]
        %v3285 = vld [vmem:[%s2425 + $0x4] sm:$0x1]
        %v3286 = vld [vmem:[%s2425 + $0x8] sm:$0xf]
        %v3287 = vld [vmem:[%s2425 + $0xc] sm:$0x1]
        %v3288 = vld [vmem:[%s2425 + $0x10] sm:$0xf]
        %v3289 = vld [vmem:[%s2425 + $0x14] sm:$0x1]
        %v3290 = vld [vmem:[%s2425 + $0x18] sm:$0xf]
        %v3291 = vld [vmem:[%s2425 + $0x1c] sm:$0x1]
        %v3292 = vld [vmem:[%s2425 + $0x20] sm:$0xf]
        %v3293 = vld [vmem:[%s2425 + $0x24] sm:$0x1]
        %v3294 = vld [vmem:[%s2425 + $0x28] sm:$0xf]
        %v3295 = vld [vmem:[%s2425 + $0x2c] sm:$0x1]
        %v3296 = vld [vmem:[%s2425 + $0x30] sm:$0xf]
        %v3297 = vld [vmem:[%s2425 + $0x34] sm:$0x1]
        %v3298 = vld [vmem:[%s2425 + $0x38] sm:$0xf]
        %v3299 = vld [vmem:[%s2425 + $0x3c] sm:$0x1]
        %v3301 = vshrl.u32 %v3284, 16
        %v3303 = vrot.slane %v3301, 4
        %v3304 = vshll.u32 %v3284, 16
        %v3306 = vrot.slane %v3304, 5
        %v3307 = vor.u32 %v3303, %v3306
        %v3308 = vrot.slane %v3307, 4
        %v3310 = vshll.u32 %v3285, 16
        %v3312 = vrot.slane %v3310, 5
        %v3313 = vsel %vm782, %v3308, %v3312
        %v3315 = vshrl.u32 %v3286, 16
        %v3317 = vrot.slane %v3315, 4
        %v3318 = vshll.u32 %v3286, 16
        %v3320 = vrot.slane %v3318, 5
        %v3321 = vor.u32 %v3317, %v3320
        %v3322 = vrot.slane %v3321, 4
        %v3324 = vshll.u32 %v3287, 16
        %v3326 = vrot.slane %v3324, 5
        %v3327 = vsel %vm782, %v3322, %v3326
        %v3329 = vshrl.u32 %v3288, 16
        %v3331 = vrot.slane %v3329, 4
        %v3332 = vshll.u32 %v3288, 16
        %v3334 = vrot.slane %v3332, 5
        %v3335 = vor.u32 %v3331, %v3334
        %v3336 = vrot.slane %v3335, 4
        %v3338 = vshll.u32 %v3289, 16
        %v3340 = vrot.slane %v3338, 5
        %v3341 = vsel %vm782, %v3336, %v3340
        %v3343 = vshrl.u32 %v3290, 16
        %v3345 = vrot.slane %v3343, 4
        %v3346 = vshll.u32 %v3290, 16
        %v3348 = vrot.slane %v3346, 5
        %v3349 = vor.u32 %v3345, %v3348
        %v3350 = vrot.slane %v3349, 4
        %v3352 = vshll.u32 %v3291, 16
        %v3354 = vrot.slane %v3352, 5
        %v3355 = vsel %vm782, %v3350, %v3354
        %v3357 = vshrl.u32 %v3292, 16
        %v3359 = vrot.slane %v3357, 4
        %v3360 = vshll.u32 %v3292, 16
        %v3362 = vrot.slane %v3360, 5
        %v3363 = vor.u32 %v3359, %v3362
        %v3364 = vrot.slane %v3363, 4
        %v3366 = vshll.u32 %v3293, 16
        %v3368 = vrot.slane %v3366, 5
        %v3369 = vsel %vm782, %v3364, %v3368
        %v3371 = vshrl.u32 %v3294, 16
        %v3373 = vrot.slane %v3371, 4
        %v3374 = vshll.u32 %v3294, 16
        %v3376 = vrot.slane %v3374, 5
        %v3377 = vor.u32 %v3373, %v3376
        %v3378 = vrot.slane %v3377, 4
        %v3380 = vshll.u32 %v3295, 16
        %v3382 = vrot.slane %v3380, 5
        %v3383 = vsel %vm782, %v3378, %v3382
        %v3385 = vshrl.u32 %v3296, 16
        %v3387 = vrot.slane %v3385, 4
        %v3388 = vshll.u32 %v3296, 16
        %v3390 = vrot.slane %v3388, 5
        %v3391 = vor.u32 %v3387, %v3390
        %v3392 = vrot.slane %v3391, 4
        %v3394 = vshll.u32 %v3297, 16
        %v3396 = vrot.slane %v3394, 5
        %v3397 = vsel %vm782, %v3392, %v3396
        %v3399 = vshrl.u32 %v3298, 16
        %v3401 = vrot.slane %v3399, 4
        %v3402 = vshll.u32 %v3298, 16
        %v3404 = vrot.slane %v3402, 5
        %v3405 = vor.u32 %v3401, %v3404
        %v3406 = vrot.slane %v3405, 4
        %v3408 = vshll.u32 %v3299, 16
        %v3410 = vrot.slane %v3408, 5
        %v3411 = vsel %vm782, %v3406, %v3410
        %s3412 = scalar_lea.vmem [#allocation3], 256
        %v3413 = vld [vmem:[%s3412] sm:$0xf]
        %v3414 = vld [vmem:[%s3412 + $0x4] sm:$0xf]
        %v3415 = vld [vmem:[%s3412 + $0x8] sm:$0xf]
        %v3416 = vld [vmem:[%s3412 + $0xc] sm:$0xf]
        %v3417 = vld [vmem:[%s3412 + $0x10] sm:$0xf]
        %v3418 = vld [vmem:[%s3412 + $0x14] sm:$0xf]
        %v3419 = vld [vmem:[%s3412 + $0x18] sm:$0xf]
        %v3420 = vld [vmem:[%s3412 + $0x1c] sm:$0xf]
        %v3421 = vld [vmem:[%s3412 + $0x20] sm:$0xf]
        %v3422 = vld [vmem:[%s3412 + $0x24] sm:$0xf]
        %v3423 = vld [vmem:[%s3412 + $0x28] sm:$0xf]
        %v3424 = vld [vmem:[%s3412 + $0x2c] sm:$0xf]
        %v3425 = vld [vmem:[%s3412 + $0x30] sm:$0xf]
        %v3426 = vld [vmem:[%s3412 + $0x34] sm:$0xf]
        %v3427 = vld [vmem:[%s3412 + $0x38] sm:$0xf]
        %v3428 = vld [vmem:[%s3412 + $0x3c] sm:$0xf]
        %v3429 = vunpack.c.l.b16 %v3313
        %v3430 = vunpack.c.l.b16 %v3327
        %v3431 = vunpack.c.l.b16 %v3341
        %v3432 = vunpack.c.l.b16 %v3355
        %v3433 = vunpack.c.l.b16 %v3369
        %v3434 = vunpack.c.l.b16 %v3383
        %v3435 = vunpack.c.l.b16 %v3397
        %v3436 = vunpack.c.l.b16 %v3411
        %v3437 = vpack.c.b16 %v3430, %v3429
        %v3438 = vpack.c.b16 %v3432, %v3431
        %v3439 = vpack.c.b16 %v3434, %v3433
        %v3440 = vpack.c.b16 %v3436, %v3435
        %v3461 = vunpack.c.l.b16 %v3413
        %v3462 = vunpack.c.l.b16 %v3414
        %v3463 = vunpack.c.l.b16 %v3415
        %v3464 = vunpack.c.l.b16 %v3416
        %v3465 = vunpack.c.l.b16 %v3417
        %v3466 = vunpack.c.l.b16 %v3418
        %v3467 = vunpack.c.l.b16 %v3419
        %v3468 = vunpack.c.l.b16 %v3420
        %v3469 = vunpack.c.l.b16 %v3421
        %v3470 = vunpack.c.l.b16 %v3422
        %v3471 = vunpack.c.l.b16 %v3423
        %v3472 = vunpack.c.l.b16 %v3424
        %v3473 = vunpack.c.l.b16 %v3425
        %v3474 = vunpack.c.l.b16 %v3426
        %v3475 = vunpack.c.l.b16 %v3427
        %v3476 = vunpack.c.l.b16 %v3428
        %v3477 = vpack.c.b16 %v3462, %v3461
        %v3478 = vpack.c.b16 %v3464, %v3463
        %v3479 = vpack.c.b16 %v3466, %v3465
        %v3480 = vpack.c.b16 %v3468, %v3467
        %v3481 = vpack.c.b16 %v3470, %v3469
        %v3482 = vpack.c.b16 %v3472, %v3471
        %v3483 = vpack.c.b16 %v3474, %v3473
        %v3484 = vpack.c.b16 %v3476, %v3475
        %3493 = vmatprep.subr.bf16.mxu0 0
        %3494 = vmatpush1.bf16.msra.mxu0 %v3477
        %3495 = vmatprep.subr.bf16.mxu0 0
        %3496 = vmatpush1.bf16.msra.mxu0 %v3478
        %3497 = vmatprep.subr.bf16.mxu0 0
        %3498 = vmatpush1.bf16.msra.mxu0 %v3479
        %3499 = vmatprep.subr.bf16.mxu0 0
        %3500 = vmatpush1.bf16.msra.mxu0 %v3480
        %3501 = vmatprep.subr.bf16.mxu0 0
        %3502 = vmatpush1.bf16.msra.mxu0 %v3481
        %3503 = vmatprep.subr.bf16.mxu0 0
        %3504 = vmatpush1.bf16.msra.mxu0 %v3482
        %3505 = vmatprep.subr.bf16.mxu0 0
        %3506 = vmatpush1.bf16.msra.mxu0 %v3483
        %3507 = vmatprep.subr.bf16.mxu0 0
        %3508 = vmatpush1.bf16.msra.mxu0 %v3484
        %3509 = vmatprep.subr.bf16.mxu0 0
        %3510 = vmatpush1.bf16.msra.mxu0 0
        %3511 = vmatprep.subr.bf16.mxu0 0
        %3512 = vmatpush1.bf16.msra.mxu0 0
        %3513 = vmatprep.subr.bf16.mxu0 0
        %3514 = vmatpush1.bf16.msra.mxu0 0
        %3515 = vmatprep.subr.bf16.mxu0 0
        %3516 = vmatpush1.bf16.msra.mxu0 0
        %3517 = vmatprep.subr.bf16.mxu0 0
        %3518 = vmatpush1.bf16.msra.mxu0 0
        %3519 = vmatprep.subr.bf16.mxu0 0
        %3520 = vmatpush1.bf16.msra.mxu0 0
        %3521 = vmatprep.subr.bf16.mxu0 0
        %3522 = vmatpush1.bf16.msra.mxu0 0
        %3523 = vmatprep.subr.bf16.mxu0 0
        %3524 = vmatpush1.bf16.msra.mxu0 0
        %3525 = vmatprep.mubr.bf16.mxu0 0
        %3526 = vmatmul.mubr.bf16.gmra.mrb[0].mxu0 %v3437
        %v3527 = vpop.f32.mrb[0].mxu0
        %v3528 = vadd.f32 0.0, %v3527
        %v3529 = vpop.f32.mrb[0].mxu0
        %v3530 = vpop.f32.mrb[0].mxu0
        %v3531 = vadd.f32 0.0, %v3530
        %v3532 = vpop.f32.mrb[0].mxu0
        %3533 = vmatprep.mubr.bf16.mxu0 0
        %3534 = vmatmul.mubr.bf16.gmra.mrb[0].mxu0 %v3438
        %v3535 = vpop.f32.mrb[0].mxu0
        %v3536 = vadd.f32 0.0, %v3535
        %v3537 = vpop.f32.mrb[0].mxu0
        %v3538 = vpop.f32.mrb[0].mxu0
        %v3539 = vadd.f32 0.0, %v3538
        %v3540 = vpop.f32.mrb[0].mxu0
        %3541 = vmatprep.mubr.bf16.mxu0 0
        %3542 = vmatmul.mubr.bf16.gmra.mrb[0].mxu0 %v3439
        %v3543 = vpop.f32.mrb[0].mxu0
        %v3544 = vadd.f32 0.0, %v3543
        %v3545 = vpop.f32.mrb[0].mxu0
        %v3546 = vpop.f32.mrb[0].mxu0
        %v3547 = vadd.f32 0.0, %v3546
        %v3548 = vpop.f32.mrb[0].mxu0
        %3549 = vmatprep.mubr.bf16.mxu0 0
        %3550 = vmatmul.mubr.bf16.gmra.mrb[0].mxu0 %v3440
        %v3551 = vpop.f32.mrb[0].mxu0
        %v3552 = vadd.f32 0.0, %v3551
        %v3553 = vpop.f32.mrb[0].mxu0
        %v3554 = vpop.f32.mrb[0].mxu0
        %v3555 = vadd.f32 0.0, %v3554
        %v3556 = vpop.f32.mrb[0].mxu0
        %3557 = vdwg.mxu0
        %v3558 = vadd.f32 %v3276, %v3528
        %v3559 = vadd.f32 %v3277, %v3531
        %v3560 = vadd.f32 %v3278, %v3536
        %v3561 = vadd.f32 %v3279, %v3539
        %v3562 = vadd.f32 %v3280, %v3544
        %v3563 = vadd.f32 %v3281, %v3547
        %v3564 = vadd.f32 %v3282, %v3552
        %v3565 = vadd.f32 %v3283, %v3555
        %v3566 = vld [vmem:[%s2425] sm:$0xe]
        %v3567 = vld [vmem:[%s2425 + $0x8] sm:$0xe]
        %v3568 = vld [vmem:[%s2425 + $0x10] sm:$0xe]
        %v3569 = vld [vmem:[%s2425 + $0x18] sm:$0xe]
        %v3570 = vld [vmem:[%s2425 + $0x20] sm:$0xe]
        %v3571 = vld [vmem:[%s2425 + $0x28] sm:$0xe]
        %v3572 = vld [vmem:[%s2425 + $0x30] sm:$0xe]
        %v3573 = vld [vmem:[%s2425 + $0x38] sm:$0xe]
        %v3590 = vrot.slane %v3566, 5
        %v3591 = vrot.slane %v3590, 4
        %v3592 = vrot.slane %v3285, 5
        %v3593 = vsel %vm2927, %v3591, %v3592
        %v3594 = vrot.slane %v3567, 5
        %v3595 = vrot.slane %v3594, 4
        %v3596 = vrot.slane %v3287, 5
        %v3597 = vsel %vm2927, %v3595, %v3596
        %v3598 = vrot.slane %v3568, 5
        %v3599 = vrot.slane %v3598, 4
        %v3600 = vrot.slane %v3289, 5
        %v3601 = vsel %vm2927, %v3599, %v3600
        %v3602 = vrot.slane %v3569, 5
        %v3603 = vrot.slane %v3602, 4
        %v3604 = vrot.slane %v3291, 5
        %v3605 = vsel %vm2927, %v3603, %v3604
        %v3606 = vrot.slane %v3570, 5
        %v3607 = vrot.slane %v3606, 4
        %v3608 = vrot.slane %v3293, 5
        %v3609 = vsel %vm2927, %v3607, %v3608
        %v3610 = vrot.slane %v3571, 5
        %v3611 = vrot.slane %v3610, 4
        %v3612 = vrot.slane %v3295, 5
        %v3613 = vsel %vm2927, %v3611, %v3612
        %v3614 = vrot.slane %v3572, 5
        %v3615 = vrot.slane %v3614, 4
        %v3616 = vrot.slane %v3297, 5
        %v3617 = vsel %vm2927, %v3615, %v3616
        %v3618 = vrot.slane %v3573, 5
        %v3619 = vrot.slane %v3618, 4
        %v3620 = vrot.slane %v3299, 5
        %v3621 = vsel %vm2927, %v3619, %v3620
        %s3622 = scalar_lea.vmem [#allocation3], 320
        %v3623 = vld [vmem:[%s3622] sm:$0xf]
        %v3624 = vld [vmem:[%s3622 + $0x4] sm:$0xf]
        %v3625 = vld [vmem:[%s3622 + $0x8] sm:$0xf]
        %v3626 = vld [vmem:[%s3622 + $0xc] sm:$0xf]
        %v3627 = vld [vmem:[%s3622 + $0x10] sm:$0xf]
        %v3628 = vld [vmem:[%s3622 + $0x14] sm:$0xf]
        %v3629 = vld [vmem:[%s3622 + $0x18] sm:$0xf]
        %v3630 = vld [vmem:[%s3622 + $0x1c] sm:$0xf]
        %v3631 = vld [vmem:[%s3622 + $0x20] sm:$0xf]
        %v3632 = vld [vmem:[%s3622 + $0x24] sm:$0xf]
        %v3633 = vld [vmem:[%s3622 + $0x28] sm:$0xf]
        %v3634 = vld [vmem:[%s3622 + $0x2c] sm:$0xf]
        %v3635 = vld [vmem:[%s3622 + $0x30] sm:$0xf]
        %v3636 = vld [vmem:[%s3622 + $0x34] sm:$0xf]
        %v3637 = vld [vmem:[%s3622 + $0x38] sm:$0xf]
        %v3638 = vld [vmem:[%s3622 + $0x3c] sm:$0xf]
        %v3639 = vunpack.c.l.b16 %v3593
        %v3640 = vunpack.c.l.b16 %v3597
        %v3641 = vunpack.c.l.b16 %v3601
        %v3642 = vunpack.c.l.b16 %v3605
        %v3643 = vunpack.c.l.b16 %v3609
        %v3644 = vunpack.c.l.b16 %v3613
        %v3645 = vunpack.c.l.b16 %v3617
        %v3646 = vunpack.c.l.b16 %v3621
        %v3647 = vpack.c.b16 %v3640, %v3639
        %v3648 = vpack.c.b16 %v3642, %v3641
        %v3649 = vpack.c.b16 %v3644, %v3643
        %v3650 = vpack.c.b16 %v3646, %v3645
        %v3671 = vunpack.c.l.b16 %v3623
        %v3672 = vunpack.c.l.b16 %v3624
        %v3673 = vunpack.c.l.b16 %v3625
        %v3674 = vunpack.c.l.b16 %v3626
        %v3675 = vunpack.c.l.b16 %v3627
        %v3676 = vunpack.c.l.b16 %v3628
        %v3677 = vunpack.c.l.b16 %v3629
        %v3678 = vunpack.c.l.b16 %v3630
        %v3679 = vunpack.c.l.b16 %v3631
        %v3680 = vunpack.c.l.b16 %v3632
        %v3681 = vunpack.c.l.b16 %v3633
        %v3682 = vunpack.c.l.b16 %v3634
        %v3683 = vunpack.c.l.b16 %v3635
        %v3684 = vunpack.c.l.b16 %v3636
        %v3685 = vunpack.c.l.b16 %v3637
        %v3686 = vunpack.c.l.b16 %v3638
        %v3687 = vpack.c.b16 %v3672, %v3671
        %v3688 = vpack.c.b16 %v3674, %v3673
        %v3689 = vpack.c.b16 %v3676, %v3675
        %v3690 = vpack.c.b16 %v3678, %v3677
        %v3691 = vpack.c.b16 %v3680, %v3679
        %v3692 = vpack.c.b16 %v3682, %v3681
        %v3693 = vpack.c.b16 %v3684, %v3683
        %v3694 = vpack.c.b16 %v3686, %v3685
        %3703 = vmatprep.subr.bf16.mxu0 0
        %3704 = vmatpush1.bf16.msra.mxu0 %v3687
        %3705 = vmatprep.subr.bf16.mxu0 0
        %3706 = vmatpush1.bf16.msra.mxu0 %v3688
        %3707 = vmatprep.subr.bf16.mxu0 0
        %3708 = vmatpush1.bf16.msra.mxu0 %v3689
        %3709 = vmatprep.subr.bf16.mxu0 0
        %3710 = vmatpush1.bf16.msra.mxu0 %v3690
        %3711 = vmatprep.subr.bf16.mxu0 0
        %3712 = vmatpush1.bf16.msra.mxu0 %v3691
        %3713 = vmatprep.subr.bf16.mxu0 0
        %3714 = vmatpush1.bf16.msra.mxu0 %v3692
        %3715 = vmatprep.subr.bf16.mxu0 0
        %3716 = vmatpush1.bf16.msra.mxu0 %v3693
        %3717 = vmatprep.subr.bf16.mxu0 0
        %3718 = vmatpush1.bf16.msra.mxu0 %v3694
        %3719 = vmatprep.subr.bf16.mxu0 0
        %3720 = vmatpush1.bf16.msra.mxu0 0
        %3721 = vmatprep.subr.bf16.mxu0 0
        %3722 = vmatpush1.bf16.msra.mxu0 0
        %3723 = vmatprep.subr.bf16.mxu0 0
        %3724 = vmatpush1.bf16.msra.mxu0 0
        %3725 = vmatprep.subr.bf16.mxu0 0
        %3726 = vmatpush1.bf16.msra.mxu0 0
        %3727 = vmatprep.subr.bf16.mxu0 0
        %3728 = vmatpush1.bf16.msra.mxu0 0
        %3729 = vmatprep.subr.bf16.mxu0 0
        %3730 = vmatpush1.bf16.msra.mxu0 0
        %3731 = vmatprep.subr.bf16.mxu0 0
        %3732 = vmatpush1.bf16.msra.mxu0 0
        %3733 = vmatprep.subr.bf16.mxu0 0
        %3734 = vmatpush1.bf16.msra.mxu0 0
        %3735 = vmatprep.mubr.bf16.mxu0 0
        %3736 = vmatmul.mubr.bf16.gmra.mrb[0].mxu0 %v3647
        %v3737 = vpop.f32.mrb[0].mxu0
        %v3738 = vadd.f32 0.0, %v3737
        %v3739 = vpop.f32.mrb[0].mxu0
        %v3740 = vpop.f32.mrb[0].mxu0
        %v3741 = vadd.f32 0.0, %v3740
        %v3742 = vpop.f32.mrb[0].mxu0
        %3743 = vmatprep.mubr.bf16.mxu0 0
        %3744 = vmatmul.mubr.bf16.gmra.mrb[0].mxu0 %v3648
        %v3745 = vpop.f32.mrb[0].mxu0
        %v3746 = vadd.f32 0.0, %v3745
        %v3747 = vpop.f32.mrb[0].mxu0
        %v3748 = vpop.f32.mrb[0].mxu0
        %v3749 = vadd.f32 0.0, %v3748
        %v3750 = vpop.f32.mrb[0].mxu0
        %3751 = vmatprep.mubr.bf16.mxu0 0
        %3752 = vmatmul.mubr.bf16.gmra.mrb[0].mxu0 %v3649
        %v3753 = vpop.f32.mrb[0].mxu0
        %v3754 = vadd.f32 0.0, %v3753
        %v3755 = vpop.f32.mrb[0].mxu0
        %v3756 = vpop.f32.mrb[0].mxu0
        %v3757 = vadd.f32 0.0, %v3756
        %v3758 = vpop.f32.mrb[0].mxu0
        %3759 = vmatprep.mubr.bf16.mxu0 0
        %3760 = vmatmul.mubr.bf16.gmra.mrb[0].mxu0 %v3650
        %v3761 = vpop.f32.mrb[0].mxu0
        %v3762 = vadd.f32 0.0, %v3761
        %v3763 = vpop.f32.mrb[0].mxu0
        %v3764 = vpop.f32.mrb[0].mxu0
        %v3765 = vadd.f32 0.0, %v3764
        %v3766 = vpop.f32.mrb[0].mxu0
        %3767 = vdwg.mxu0
        %v3768 = vadd.f32 %v3558, %v3738
        %v3769 = vadd.f32 %v3559, %v3741
        %v3770 = vadd.f32 %v3560, %v3746
        %v3771 = vadd.f32 %v3561, %v3749
        %v3772 = vadd.f32 %v3562, %v3754
        %v3773 = vadd.f32 %v3563, %v3757
        %v3774 = vadd.f32 %v3564, %v3762
        %v3775 = vadd.f32 %v3565, %v3765
        %s3776 = scalar_lea.vmem [#allocation2], 16
        %v3777 = vld [vmem:[%s3776] sm:$0xf]
        %v3778 = vld [vmem:[%s3776 + $0x8] sm:$0xf]
        %v3779 = vld [vmem:[%s3776 + $0x10] sm:$0xf]
        %v3780 = vld [vmem:[%s3776 + $0x18] sm:$0xf]
        %v3781 = vld [vmem:[%s3776 + $0x20] sm:$0xf]
        %v3782 = vld [vmem:[%s3776 + $0x28] sm:$0xf]
        %v3783 = vld [vmem:[%s3776 + $0x30] sm:$0xf]
        %v3784 = vld [vmem:[%s3776 + $0x38] sm:$0xf]
        %s3785 = scalar_lea.vmem [#allocation3], 384
        %v3786 = vld [vmem:[%s3785] sm:$0xf]
        %v3787 = vld [vmem:[%s3785 + $0x4] sm:$0xf]
        %v3788 = vld [vmem:[%s3785 + $0x8] sm:$0xf]
        %v3789 = vld [vmem:[%s3785 + $0xc] sm:$0xf]
        %v3790 = vld [vmem:[%s3785 + $0x10] sm:$0xf]
        %v3791 = vld [vmem:[%s3785 + $0x14] sm:$0xf]
        %v3792 = vld [vmem:[%s3785 + $0x18] sm:$0xf]
        %v3793 = vld [vmem:[%s3785 + $0x1c] sm:$0xf]
        %v3794 = vld [vmem:[%s3785 + $0x20] sm:$0xf]
        %v3795 = vld [vmem:[%s3785 + $0x24] sm:$0xf]
        %v3796 = vld [vmem:[%s3785 + $0x28] sm:$0xf]
        %v3797 = vld [vmem:[%s3785 + $0x2c] sm:$0xf]
        %v3798 = vld [vmem:[%s3785 + $0x30] sm:$0xf]
        %v3799 = vld [vmem:[%s3785 + $0x34] sm:$0xf]
        %v3800 = vld [vmem:[%s3785 + $0x38] sm:$0xf]
        %v3801 = vld [vmem:[%s3785 + $0x3c] sm:$0xf]
        %v3810 = vunpack.c.l.b16 %v3777
        %v3811 = vunpack.c.l.b16 %v3778
        %v3812 = vunpack.c.l.b16 %v3779
        %v3813 = vunpack.c.l.b16 %v3780
        %v3814 = vunpack.c.l.b16 %v3781
        %v3815 = vunpack.c.l.b16 %v3782
        %v3816 = vunpack.c.l.b16 %v3783
        %v3817 = vunpack.c.l.b16 %v3784
        %v3818 = vpack.c.b16 %v3811, %v3810
        %v3819 = vpack.c.b16 %v3813, %v3812
        %v3820 = vpack.c.b16 %v3815, %v3814
        %v3821 = vpack.c.b16 %v3817, %v3816
        %v3842 = vunpack.c.l.b16 %v3786
        %v3843 = vunpack.c.l.b16 %v3787
        %v3844 = vunpack.c.l.b16 %v3788
        %v3845 = vunpack.c.l.b16 %v3789
        %v3846 = vunpack.c.l.b16 %v3790
        %v3847 = vunpack.c.l.b16 %v3791
        %v3848 = vunpack.c.l.b16 %v3792
        %v3849 = vunpack.c.l.b16 %v3793
        %v3850 = vunpack.c.l.b16 %v3794
        %v3851 = vunpack.c.l.b16 %v3795
        %v3852 = vunpack.c.l.b16 %v3796
        %v3853 = vunpack.c.l.b16 %v3797
        %v3854 = vunpack.c.l.b16 %v3798
        %v3855 = vunpack.c.l.b16 %v3799
        %v3856 = vunpack.c.l.b16 %v3800
        %v3857 = vunpack.c.l.b16 %v3801
        %v3858 = vpack.c.b16 %v3843, %v3842
        %v3859 = vpack.c.b16 %v3845, %v3844
        %v3860 = vpack.c.b16 %v3847, %v3846
        %v3861 = vpack.c.b16 %v3849, %v3848
        %v3862 = vpack.c.b16 %v3851, %v3850
        %v3863 = vpack.c.b16 %v3853, %v3852
        %v3864 = vpack.c.b16 %v3855, %v3854
        %v3865 = vpack.c.b16 %v3857, %v3856
        %3874 = vmatprep.subr.bf16.mxu0 0
        %3875 = vmatpush1.bf16.msra.mxu0 %v3858
        %3876 = vmatprep.subr.bf16.mxu0 0
        %3877 = vmatpush1.bf16.msra.mxu0 %v3859
        %3878 = vmatprep.subr.bf16.mxu0 0
        %3879 = vmatpush1.bf16.msra.mxu0 %v3860
        %3880 = vmatprep.subr.bf16.mxu0 0
        %3881 = vmatpush1.bf16.msra.mxu0 %v3861
        %3882 = vmatprep.subr.bf16.mxu0 0
        %3883 = vmatpush1.bf16.msra.mxu0 %v3862
        %3884 = vmatprep.subr.bf16.mxu0 0
        %3885 = vmatpush1.bf16.msra.mxu0 %v3863
        %3886 = vmatprep.subr.bf16.mxu0 0
        %3887 = vmatpush1.bf16.msra.mxu0 %v3864
        %3888 = vmatprep.subr.bf16.mxu0 0
        %3889 = vmatpush1.bf16.msra.mxu0 %v3865
        %3890 = vmatprep.subr.bf16.mxu0 0
        %3891 = vmatpush1.bf16.msra.mxu0 0
        %3892 = vmatprep.subr.bf16.mxu0 0
        %3893 = vmatpush1.bf16.msra.mxu0 0
        %3894 = vmatprep.subr.bf16.mxu0 0
        %3895 = vmatpush1.bf16.msra.mxu0 0
        %3896 = vmatprep.subr.bf16.mxu0 0
        %3897 = vmatpush1.bf16.msra.mxu0 0
        %3898 = vmatprep.subr.bf16.mxu0 0
        %3899 = vmatpush1.bf16.msra.mxu0 0
        %3900 = vmatprep.subr.bf16.mxu0 0
        %3901 = vmatpush1.bf16.msra.mxu0 0
        %3902 = vmatprep.subr.bf16.mxu0 0
        %3903 = vmatpush1.bf16.msra.mxu0 0
        %3904 = vmatprep.subr.bf16.mxu0 0
        %3905 = vmatpush1.bf16.msra.mxu0 0
        %3906 = vmatprep.mubr.bf16.mxu0 0
        %3907 = vmatmul.mubr.bf16.gmra.mrb[0].mxu0 %v3818
        %v3908 = vpop.f32.mrb[0].mxu0
        %v3909 = vadd.f32 0.0, %v3908
        %v3910 = vpop.f32.mrb[0].mxu0
        %v3911 = vpop.f32.mrb[0].mxu0
        %v3912 = vadd.f32 0.0, %v3911
        %v3913 = vpop.f32.mrb[0].mxu0
        %3914 = vmatprep.mubr.bf16.mxu0 0
        %3915 = vmatmul.mubr.bf16.gmra.mrb[0].mxu0 %v3819
        %v3916 = vpop.f32.mrb[0].mxu0
        %v3917 = vadd.f32 0.0, %v3916
        %v3918 = vpop.f32.mrb[0].mxu0
        %v3919 = vpop.f32.mrb[0].mxu0
        %v3920 = vadd.f32 0.0, %v3919
        %v3921 = vpop.f32.mrb[0].mxu0
        %3922 = vmatprep.mubr.bf16.mxu0 0
        %3923 = vmatmul.mubr.bf16.gmra.mrb[0].mxu0 %v3820
        %v3924 = vpop.f32.mrb[0].mxu0
        %v3925 = vadd.f32 0.0, %v3924
        %v3926 = vpop.f32.mrb[0].mxu0
        %v3927 = vpop.f32.mrb[0].mxu0
        %v3928 = vadd.f32 0.0, %v3927
        %v3929 = vpop.f32.mrb[0].mxu0
        %3930 = vmatprep.mubr.bf16.mxu0 0
        %3931 = vmatmul.mubr.bf16.gmra.mrb[0].mxu0 %v3821
        %v3932 = vpop.f32.mrb[0].mxu0
        %v3933 = vadd.f32 0.0, %v3932
        %v3934 = vpop.f32.mrb[0].mxu0
        %v3935 = vpop.f32.mrb[0].mxu0
        %v3936 = vadd.f32 0.0, %v3935
        %v3937 = vpop.f32.mrb[0].mxu0
        %3938 = vdwg.mxu0
        %v3939 = vadd.f32 %v3768, %v3909
        %v3940 = vadd.f32 %v3769, %v3912
        %v3941 = vadd.f32 %v3770, %v3917
        %v3942 = vadd.f32 %v3771, %v3920
        %v3943 = vadd.f32 %v3772, %v3925
        %v3944 = vadd.f32 %v3773, %v3928
        %v3945 = vadd.f32 %v3774, %v3933
        %v3946 = vadd.f32 %v3775, %v3936
        %v3947 = vld [vmem:[%s3776] sm:$0xf]
        %v3948 = vld [vmem:[%s3776 + $0x4] sm:$0x1]
        %v3949 = vld [vmem:[%s3776 + $0x8] sm:$0xf]
        %v3950 = vld [vmem:[%s3776 + $0xc] sm:$0x1]
        %v3951 = vld [vmem:[%s3776 + $0x10] sm:$0xf]
        %v3952 = vld [vmem:[%s3776 + $0x14] sm:$0x1]
        %v3953 = vld [vmem:[%s3776 + $0x18] sm:$0xf]
        %v3954 = vld [vmem:[%s3776 + $0x1c] sm:$0x1]
        %v3955 = vld [vmem:[%s3776 + $0x20] sm:$0xf]
        %v3956 = vld [vmem:[%s3776 + $0x24] sm:$0x1]
        %v3957 = vld [vmem:[%s3776 + $0x28] sm:$0xf]
        %v3958 = vld [vmem:[%s3776 + $0x2c] sm:$0x1]
        %v3959 = vld [vmem:[%s3776 + $0x30] sm:$0xf]
        %v3960 = vld [vmem:[%s3776 + $0x34] sm:$0x1]
        %v3961 = vld [vmem:[%s3776 + $0x38] sm:$0xf]
        %v3962 = vld [vmem:[%s3776 + $0x3c] sm:$0x1]
        %v3964 = vshrl.u32 %v3947, 16
        %v3966 = vrot.slane %v3964, 4
        %v3967 = vshll.u32 %v3947, 16
        %v3969 = vrot.slane %v3967, 5
        %v3970 = vor.u32 %v3966, %v3969
        %v3971 = vrot.slane %v3970, 4
        %v3973 = vshll.u32 %v3948, 16
        %v3975 = vrot.slane %v3973, 5
        %v3976 = vsel %vm782, %v3971, %v3975
        %v3978 = vshrl.u32 %v3949, 16
        %v3980 = vrot.slane %v3978, 4
        %v3981 = vshll.u32 %v3949, 16
        %v3983 = vrot.slane %v3981, 5
        %v3984 = vor.u32 %v3980, %v3983
        %v3985 = vrot.slane %v3984, 4
        %v3987 = vshll.u32 %v3950, 16
        %v3989 = vrot.slane %v3987, 5
        %v3990 = vsel %vm782, %v3985, %v3989
        %v3992 = vshrl.u32 %v3951, 16
        %v3994 = vrot.slane %v3992, 4
        %v3995 = vshll.u32 %v3951, 16
        %v3997 = vrot.slane %v3995, 5
        %v3998 = vor.u32 %v3994, %v3997
        %v3999 = vrot.slane %v3998, 4
        %v4001 = vshll.u32 %v3952, 16
        %v4003 = vrot.slane %v4001, 5
        %v4004 = vsel %vm782, %v3999, %v4003
        %v4006 = vshrl.u32 %v3953, 16
        %v4008 = vrot.slane %v4006, 4
        %v4009 = vshll.u32 %v3953, 16
        %v4011 = vrot.slane %v4009, 5
        %v4012 = vor.u32 %v4008, %v4011
        %v4013 = vrot.slane %v4012, 4
        %v4015 = vshll.u32 %v3954, 16
        %v4017 = vrot.slane %v4015, 5
        %v4018 = vsel %vm782, %v4013, %v4017
        %v4020 = vshrl.u32 %v3955, 16
        %v4022 = vrot.slane %v4020, 4
        %v4023 = vshll.u32 %v3955, 16
        %v4025 = vrot.slane %v4023, 5
        %v4026 = vor.u32 %v4022, %v4025
        %v4027 = vrot.slane %v4026, 4
        %v4029 = vshll.u32 %v3956, 16
        %v4031 = vrot.slane %v4029, 5
        %v4032 = vsel %vm782, %v4027, %v4031
        %v4034 = vshrl.u32 %v3957, 16
        %v4036 = vrot.slane %v4034, 4
        %v4037 = vshll.u32 %v3957, 16
        %v4039 = vrot.slane %v4037, 5
        %v4040 = vor.u32 %v4036, %v4039
        %v4041 = vrot.slane %v4040, 4
        %v4043 = vshll.u32 %v3958, 16
        %v4045 = vrot.slane %v4043, 5
        %v4046 = vsel %vm782, %v4041, %v4045
        %v4048 = vshrl.u32 %v3959, 16
        %v4050 = vrot.slane %v4048, 4
        %v4051 = vshll.u32 %v3959, 16
        %v4053 = vrot.slane %v4051, 5
        %v4054 = vor.u32 %v4050, %v4053
        %v4055 = vrot.slane %v4054, 4
        %v4057 = vshll.u32 %v3960, 16
        %v4059 = vrot.slane %v4057, 5
        %v4060 = vsel %vm782, %v4055, %v4059
        %v4062 = vshrl.u32 %v3961, 16
        %v4064 = vrot.slane %v4062, 4
        %v4065 = vshll.u32 %v3961, 16
        %v4067 = vrot.slane %v4065, 5
        %v4068 = vor.u32 %v4064, %v4067
        %v4069 = vrot.slane %v4068, 4
        %v4071 = vshll.u32 %v3962, 16
        %v4073 = vrot.slane %v4071, 5
        %v4074 = vsel %vm782, %v4069, %v4073
        %s4075 = scalar_lea.vmem [#allocation3], 448
        %v4076 = vld [vmem:[%s4075] sm:$0xf]
        %v4077 = vld [vmem:[%s4075 + $0x4] sm:$0xf]
        %v4078 = vld [vmem:[%s4075 + $0x8] sm:$0xf]
        %v4079 = vld [vmem:[%s4075 + $0xc] sm:$0xf]
        %v4080 = vld [vmem:[%s4075 + $0x10] sm:$0xf]
        %v4081 = vld [vmem:[%s4075 + $0x14] sm:$0xf]
        %v4082 = vld [vmem:[%s4075 + $0x18] sm:$0xf]
        %v4083 = vld [vmem:[%s4075 + $0x1c] sm:$0xf]
        %v4084 = vld [vmem:[%s4075 + $0x20] sm:$0xf]
        %v4085 = vld [vmem:[%s4075 + $0x24] sm:$0xf]
        %v4086 = vld [vmem:[%s4075 + $0x28] sm:$0xf]
        %v4087 = vld [vmem:[%s4075 + $0x2c] sm:$0xf]
        %v4088 = vld [vmem:[%s4075 + $0x30] sm:$0xf]
        %v4089 = vld [vmem:[%s4075 + $0x34] sm:$0xf]
        %v4090 = vld [vmem:[%s4075 + $0x38] sm:$0xf]
        %v4091 = vld [vmem:[%s4075 + $0x3c] sm:$0xf]
        %v4092 = vunpack.c.l.b16 %v3976
        %v4093 = vunpack.c.l.b16 %v3990
        %v4094 = vunpack.c.l.b16 %v4004
        %v4095 = vunpack.c.l.b16 %v4018
        %v4096 = vunpack.c.l.b16 %v4032
        %v4097 = vunpack.c.l.b16 %v4046
        %v4098 = vunpack.c.l.b16 %v4060
        %v4099 = vunpack.c.l.b16 %v4074
        %v4100 = vpack.c.b16 %v4093, %v4092
        %v4101 = vpack.c.b16 %v4095, %v4094
        %v4102 = vpack.c.b16 %v4097, %v4096
        %v4103 = vpack.c.b16 %v4099, %v4098
        %v4124 = vunpack.c.l.b16 %v4076
        %v4125 = vunpack.c.l.b16 %v4077
        %v4126 = vunpack.c.l.b16 %v4078
        %v4127 = vunpack.c.l.b16 %v4079
        %v4128 = vunpack.c.l.b16 %v4080
        %v4129 = vunpack.c.l.b16 %v4081
        %v4130 = vunpack.c.l.b16 %v4082
        %v4131 = vunpack.c.l.b16 %v4083
        %v4132 = vunpack.c.l.b16 %v4084
        %v4133 = vunpack.c.l.b16 %v4085
        %v4134 = vunpack.c.l.b16 %v4086
        %v4135 = vunpack.c.l.b16 %v4087
        %v4136 = vunpack.c.l.b16 %v4088
        %v4137 = vunpack.c.l.b16 %v4089
        %v4138 = vunpack.c.l.b16 %v4090
        %v4139 = vunpack.c.l.b16 %v4091
        %v4140 = vpack.c.b16 %v4125, %v4124
        %v4141 = vpack.c.b16 %v4127, %v4126
        %v4142 = vpack.c.b16 %v4129, %v4128
        %v4143 = vpack.c.b16 %v4131, %v4130
        %v4144 = vpack.c.b16 %v4133, %v4132
        %v4145 = vpack.c.b16 %v4135, %v4134
        %v4146 = vpack.c.b16 %v4137, %v4136
        %v4147 = vpack.c.b16 %v4139, %v4138
        %4156 = vmatprep.subr.bf16.mxu0 0
        %4157 = vmatpush1.bf16.msra.mxu0 %v4140
        %4158 = vmatprep.subr.bf16.mxu0 0
        %4159 = vmatpush1.bf16.msra.mxu0 %v4141
        %4160 = vmatprep.subr.bf16.mxu0 0
        %4161 = vmatpush1.bf16.msra.mxu0 %v4142
        %4162 = vmatprep.subr.bf16.mxu0 0
        %4163 = vmatpush1.bf16.msra.mxu0 %v4143
        %4164 = vmatprep.subr.bf16.mxu0 0
        %4165 = vmatpush1.bf16.msra.mxu0 %v4144
        %4166 = vmatprep.subr.bf16.mxu0 0
        %4167 = vmatpush1.bf16.msra.mxu0 %v4145
        %4168 = vmatprep.subr.bf16.mxu0 0
        %4169 = vmatpush1.bf16.msra.mxu0 %v4146
        %4170 = vmatprep.subr.bf16.mxu0 0
        %4171 = vmatpush1.bf16.msra.mxu0 %v4147
        %4172 = vmatprep.subr.bf16.mxu0 0
        %4173 = vmatpush1.bf16.msra.mxu0 0
        %4174 = vmatprep.subr.bf16.mxu0 0
        %4175 = vmatpush1.bf16.msra.mxu0 0
        %4176 = vmatprep.subr.bf16.mxu0 0
        %4177 = vmatpush1.bf16.msra.mxu0 0
        %4178 = vmatprep.subr.bf16.mxu0 0
        %4179 = vmatpush1.bf16.msra.mxu0 0
        %4180 = vmatprep.subr.bf16.mxu0 0
        %4181 = vmatpush1.bf16.msra.mxu0 0
        %4182 = vmatprep.subr.bf16.mxu0 0
        %4183 = vmatpush1.bf16.msra.mxu0 0
        %4184 = vmatprep.subr.bf16.mxu0 0
        %4185 = vmatpush1.bf16.msra.mxu0 0
        %4186 = vmatprep.subr.bf16.mxu0 0
        %4187 = vmatpush1.bf16.msra.mxu0 0
        %4188 = vmatprep.mubr.bf16.mxu0 0
        %4189 = vmatmul.mubr.bf16.gmra.mrb[0].mxu0 %v4100
        %v4190 = vpop.f32.mrb[0].mxu0
        %v4191 = vadd.f32 0.0, %v4190
        %v4192 = vpop.f32.mrb[0].mxu0
        %v4193 = vpop.f32.mrb[0].mxu0
        %v4194 = vadd.f32 0.0, %v4193
        %v4195 = vpop.f32.mrb[0].mxu0
        %4196 = vmatprep.mubr.bf16.mxu0 0
        %4197 = vmatmul.mubr.bf16.gmra.mrb[0].mxu0 %v4101
        %v4198 = vpop.f32.mrb[0].mxu0
        %v4199 = vadd.f32 0.0, %v4198
        %v4200 = vpop.f32.mrb[0].mxu0
        %v4201 = vpop.f32.mrb[0].mxu0
        %v4202 = vadd.f32 0.0, %v4201
        %v4203 = vpop.f32.mrb[0].mxu0
        %4204 = vmatprep.mubr.bf16.mxu0 0
        %4205 = vmatmul.mubr.bf16.gmra.mrb[0].mxu0 %v4102
        %v4206 = vpop.f32.mrb[0].mxu0
        %v4207 = vadd.f32 0.0, %v4206
        %v4208 = vpop.f32.mrb[0].mxu0
        %v4209 = vpop.f32.mrb[0].mxu0
        %v4210 = vadd.f32 0.0, %v4209
        %v4211 = vpop.f32.mrb[0].mxu0
        %4212 = vmatprep.mubr.bf16.mxu0 0
        %4213 = vmatmul.mubr.bf16.gmra.mrb[0].mxu0 %v4103
        %v4214 = vpop.f32.mrb[0].mxu0
        %v4215 = vadd.f32 0.0, %v4214
        %v4216 = vpop.f32.mrb[0].mxu0
        %v4217 = vpop.f32.mrb[0].mxu0
        %v4218 = vadd.f32 0.0, %v4217
        %v4219 = vpop.f32.mrb[0].mxu0
        %4220 = vdwg.mxu0
        %v4221 = vadd.f32 %v3939, %v4191
        %v4222 = vadd.f32 %v3940, %v4194
        %v4223 = vadd.f32 %v3941, %v4199
        %v4224 = vadd.f32 %v3942, %v4202
        %v4225 = vadd.f32 %v3943, %v4207
        %v4226 = vadd.f32 %v3944, %v4210
        %v4227 = vadd.f32 %v3945, %v4215
        %v4228 = vadd.f32 %v3946, %v4218
        %v4229 = vld [vmem:[%s3776] sm:$0xe]
        %v4230 = vld [vmem:[%s3776 + $0x8] sm:$0xe]
        %v4231 = vld [vmem:[%s3776 + $0x10] sm:$0xe]
        %v4232 = vld [vmem:[%s3776 + $0x18] sm:$0xe]
        %v4233 = vld [vmem:[%s3776 + $0x20] sm:$0xe]
        %v4234 = vld [vmem:[%s3776 + $0x28] sm:$0xe]
        %v4235 = vld [vmem:[%s3776 + $0x30] sm:$0xe]
        %v4236 = vld [vmem:[%s3776 + $0x38] sm:$0xe]
        %v4253 = vrot.slane %v4229, 5
        %v4254 = vrot.slane %v4253, 4
        %v4255 = vrot.slane %v3948, 5
        %v4256 = vsel %vm2927, %v4254, %v4255
        %v4257 = vrot.slane %v4230, 5
        %v4258 = vrot.slane %v4257, 4
        %v4259 = vrot.slane %v3950, 5
        %v4260 = vsel %vm2927, %v4258, %v4259
        %v4261 = vrot.slane %v4231, 5
        %v4262 = vrot.slane %v4261, 4
        %v4263 = vrot.slane %v3952, 5
        %v4264 = vsel %vm2927, %v4262, %v4263
        %v4265 = vrot.slane %v4232, 5
        %v4266 = vrot.slane %v4265, 4
        %v4267 = vrot.slane %v3954, 5
        %v4268 = vsel %vm2927, %v4266, %v4267
        %v4269 = vrot.slane %v4233, 5
        %v4270 = vrot.slane %v4269, 4
        %v4271 = vrot.slane %v3956, 5
        %v4272 = vsel %vm2927, %v4270, %v4271
        %v4273 = vrot.slane %v4234, 5
        %v4274 = vrot.slane %v4273, 4
        %v4275 = vrot.slane %v3958, 5
        %v4276 = vsel %vm2927, %v4274, %v4275
        %v4277 = vrot.slane %v4235, 5
        %v4278 = vrot.slane %v4277, 4
        %v4279 = vrot.slane %v3960, 5
        %v4280 = vsel %vm2927, %v4278, %v4279
        %v4281 = vrot.slane %v4236, 5
        %v4282 = vrot.slane %v4281, 4
        %v4283 = vrot.slane %v3962, 5
        %v4284 = vsel %vm2927, %v4282, %v4283
        %s4285 = scalar_lea.vmem [#allocation3], 512
        %v4286 = vld [vmem:[%s4285] sm:$0xf]
        %v4287 = vld [vmem:[%s4285 + $0x4] sm:$0xf]
        %v4288 = vld [vmem:[%s4285 + $0x8] sm:$0xf]
        %v4289 = vld [vmem:[%s4285 + $0xc] sm:$0xf]
        %v4290 = vld [vmem:[%s4285 + $0x10] sm:$0xf]
        %v4291 = vld [vmem:[%s4285 + $0x14] sm:$0xf]
        %v4292 = vld [vmem:[%s4285 + $0x18] sm:$0xf]
        %v4293 = vld [vmem:[%s4285 + $0x1c] sm:$0xf]
        %v4294 = vld [vmem:[%s4285 + $0x20] sm:$0xf]
        %v4295 = vld [vmem:[%s4285 + $0x24] sm:$0xf]
        %v4296 = vld [vmem:[%s4285 + $0x28] sm:$0xf]
        %v4297 = vld [vmem:[%s4285 + $0x2c] sm:$0xf]
        %v4298 = vld [vmem:[%s4285 + $0x30] sm:$0xf]
        %v4299 = vld [vmem:[%s4285 + $0x34] sm:$0xf]
        %v4300 = vld [vmem:[%s4285 + $0x38] sm:$0xf]
        %v4301 = vld [vmem:[%s4285 + $0x3c] sm:$0xf]
        %v4302 = vunpack.c.l.b16 %v4256
        %v4303 = vunpack.c.l.b16 %v4260
        %v4304 = vunpack.c.l.b16 %v4264
        %v4305 = vunpack.c.l.b16 %v4268
        %v4306 = vunpack.c.l.b16 %v4272
        %v4307 = vunpack.c.l.b16 %v4276
        %v4308 = vunpack.c.l.b16 %v4280
        %v4309 = vunpack.c.l.b16 %v4284
        %v4310 = vpack.c.b16 %v4303, %v4302
        %v4311 = vpack.c.b16 %v4305, %v4304
        %v4312 = vpack.c.b16 %v4307, %v4306
        %v4313 = vpack.c.b16 %v4309, %v4308
        %v4334 = vunpack.c.l.b16 %v4286
        %v4335 = vunpack.c.l.b16 %v4287
        %v4336 = vunpack.c.l.b16 %v4288
        %v4337 = vunpack.c.l.b16 %v4289
        %v4338 = vunpack.c.l.b16 %v4290
        %v4339 = vunpack.c.l.b16 %v4291
        %v4340 = vunpack.c.l.b16 %v4292
        %v4341 = vunpack.c.l.b16 %v4293
        %v4342 = vunpack.c.l.b16 %v4294
        %v4343 = vunpack.c.l.b16 %v4295
        %v4344 = vunpack.c.l.b16 %v4296
        %v4345 = vunpack.c.l.b16 %v4297
        %v4346 = vunpack.c.l.b16 %v4298
        %v4347 = vunpack.c.l.b16 %v4299
        %v4348 = vunpack.c.l.b16 %v4300
        %v4349 = vunpack.c.l.b16 %v4301
        %v4350 = vpack.c.b16 %v4335, %v4334
        %v4351 = vpack.c.b16 %v4337, %v4336
        %v4352 = vpack.c.b16 %v4339, %v4338
        %v4353 = vpack.c.b16 %v4341, %v4340
        %v4354 = vpack.c.b16 %v4343, %v4342
        %v4355 = vpack.c.b16 %v4345, %v4344
        %v4356 = vpack.c.b16 %v4347, %v4346
        %v4357 = vpack.c.b16 %v4349, %v4348
        %4366 = vmatprep.subr.bf16.mxu0 0
        %4367 = vmatpush1.bf16.msra.mxu0 %v4350
        %4368 = vmatprep.subr.bf16.mxu0 0
        %4369 = vmatpush1.bf16.msra.mxu0 %v4351
        %4370 = vmatprep.subr.bf16.mxu0 0
        %4371 = vmatpush1.bf16.msra.mxu0 %v4352
        %4372 = vmatprep.subr.bf16.mxu0 0
        %4373 = vmatpush1.bf16.msra.mxu0 %v4353
        %4374 = vmatprep.subr.bf16.mxu0 0
        %4375 = vmatpush1.bf16.msra.mxu0 %v4354
        %4376 = vmatprep.subr.bf16.mxu0 0
        %4377 = vmatpush1.bf16.msra.mxu0 %v4355
        %4378 = vmatprep.subr.bf16.mxu0 0
        %4379 = vmatpush1.bf16.msra.mxu0 %v4356
        %4380 = vmatprep.subr.bf16.mxu0 0
        %4381 = vmatpush1.bf16.msra.mxu0 %v4357
        %4382 = vmatprep.subr.bf16.mxu0 0
        %4383 = vmatpush1.bf16.msra.mxu0 0
        %4384 = vmatprep.subr.bf16.mxu0 0
        %4385 = vmatpush1.bf16.msra.mxu0 0
        %4386 = vmatprep.subr.bf16.mxu0 0
        %4387 = vmatpush1.bf16.msra.mxu0 0
        %4388 = vmatprep.subr.bf16.mxu0 0
        %4389 = vmatpush1.bf16.msra.mxu0 0
        %4390 = vmatprep.subr.bf16.mxu0 0
        %4391 = vmatpush1.bf16.msra.mxu0 0
        %4392 = vmatprep.subr.bf16.mxu0 0
        %4393 = vmatpush1.bf16.msra.mxu0 0
        %4394 = vmatprep.subr.bf16.mxu0 0
        %4395 = vmatpush1.bf16.msra.mxu0 0
        %4396 = vmatprep.subr.bf16.mxu0 0
        %4397 = vmatpush1.bf16.msra.mxu0 0
        %4398 = vmatprep.mubr.bf16.mxu0 0
        %4399 = vmatmul.mubr.bf16.gmra.mrb[0].mxu0 %v4310
        %v4400 = vpop.f32.mrb[0].mxu0
        %v4401 = vadd.f32 0.0, %v4400
        %v4402 = vpop.f32.mrb[0].mxu0
        %v4403 = vpop.f32.mrb[0].mxu0
        %v4404 = vadd.f32 0.0, %v4403
        %v4405 = vpop.f32.mrb[0].mxu0
        %4406 = vmatprep.mubr.bf16.mxu0 0
        %4407 = vmatmul.mubr.bf16.gmra.mrb[0].mxu0 %v4311
        %v4408 = vpop.f32.mrb[0].mxu0
        %v4409 = vadd.f32 0.0, %v4408
        %v4410 = vpop.f32.mrb[0].mxu0
        %v4411 = vpop.f32.mrb[0].mxu0
        %v4412 = vadd.f32 0.0, %v4411
        %v4413 = vpop.f32.mrb[0].mxu0
        %4414 = vmatprep.mubr.bf16.mxu0 0
        %4415 = vmatmul.mubr.bf16.gmra.mrb[0].mxu0 %v4312
        %v4416 = vpop.f32.mrb[0].mxu0
        %v4417 = vadd.f32 0.0, %v4416
        %v4418 = vpop.f32.mrb[0].mxu0
        %v4419 = vpop.f32.mrb[0].mxu0
        %v4420 = vadd.f32 0.0, %v4419
        %v4421 = vpop.f32.mrb[0].mxu0
        %4422 = vmatprep.mubr.bf16.mxu0 0
        %4423 = vmatmul.mubr.bf16.gmra.mrb[0].mxu0 %v4313
        %v4424 = vpop.f32.mrb[0].mxu0
        %v4425 = vadd.f32 0.0, %v4424
        %v4426 = vpop.f32.mrb[0].mxu0
        %v4427 = vpop.f32.mrb[0].mxu0
        %v4428 = vadd.f32 0.0, %v4427
        %v4429 = vpop.f32.mrb[0].mxu0
        %4430 = vdwg.mxu0
        %v4431 = vadd.f32 %v4221, %v4401
        %v4432 = vadd.f32 %v4222, %v4404
        %v4433 = vadd.f32 %v4223, %v4409
        %v4434 = vadd.f32 %v4224, %v4412
        %v4435 = vadd.f32 %v4225, %v4417
        %v4436 = vadd.f32 %v4226, %v4420
        %v4437 = vadd.f32 %v4227, %v4425
        %v4438 = vadd.f32 %v4228, %v4428
        %v4440 = vlaneseq
        %v4441 = vshrl.u32 %v4440, 7
        %v4442 = vsub.s32 0, %v4441
        %v4443 = vrot.slane %v357, %v4442
        %v4445 = vadd.f32 %v4431, %v4443
        %v4446 = vadd.f32 %v4432, %v4443
        %v4447 = vadd.f32 %v4433, %v4443
        %v4448 = vadd.f32 %v4434, %v4443
        %v4449 = vadd.f32 %v4435, %v4443
        %v4450 = vadd.f32 %v4436, %v4443
        %v4451 = vadd.f32 %v4437, %v4443
        %v4452 = vadd.f32 %v4438, %v4443
        %v4453 = vld [vmem:[%s1050 + $0x4] sm:$0xf]
        %v4454 = vld [vmem:[%s1050 + $0x14] sm:$0xf]
        %v4455 = vld [vmem:[%s1050 + $0x24] sm:$0xf]
        %v4456 = vld [vmem:[%s1050 + $0x34] sm:$0xf]
        %v4457 = vld [vmem:[%s1050 + $0x44] sm:$0xf]
        %v4458 = vld [vmem:[%s1050 + $0x54] sm:$0xf]
        %v4459 = vld [vmem:[%s1050 + $0x64] sm:$0xf]
        %v4460 = vld [vmem:[%s1050 + $0x74] sm:$0xf]
        %v4461 = vld [vmem:[%s6] sm:$0xf]
        %v4462 = vld [vmem:[%s6 + $0x4] sm:$0xf]
        %v4463 = vld [vmem:[%s6 + $0x8] sm:$0xf]
        %v4464 = vld [vmem:[%s6 + $0xc] sm:$0xf]
        %v4465 = vld [vmem:[%s6 + $0x10] sm:$0xf]
        %v4466 = vld [vmem:[%s6 + $0x14] sm:$0xf]
        %v4467 = vld [vmem:[%s6 + $0x18] sm:$0xf]
        %v4468 = vld [vmem:[%s6 + $0x1c] sm:$0xf]
        %v4469 = vld [vmem:[%s6 + $0x20] sm:$0xf]
        %v4470 = vld [vmem:[%s6 + $0x24] sm:$0xf]
        %v4471 = vld [vmem:[%s6 + $0x28] sm:$0xf]
        %v4472 = vld [vmem:[%s6 + $0x2c] sm:$0xf]
        %v4473 = vld [vmem:[%s6 + $0x30] sm:$0xf]
        %v4474 = vld [vmem:[%s6 + $0x34] sm:$0xf]
        %v4475 = vld [vmem:[%s6 + $0x38] sm:$0xf]
        %v4476 = vld [vmem:[%s6 + $0x3c] sm:$0xf]
        %v4485 = vunpack.c.l.b16 %v4453
        %v4486 = vunpack.c.l.b16 %v4454
        %v4487 = vunpack.c.l.b16 %v4455
        %v4488 = vunpack.c.l.b16 %v4456
        %v4489 = vunpack.c.l.b16 %v4457
        %v4490 = vunpack.c.l.b16 %v4458
        %v4491 = vunpack.c.l.b16 %v4459
        %v4492 = vunpack.c.l.b16 %v4460
        %v4493 = vpack.c.b16 %v4486, %v4485
        %v4494 = vpack.c.b16 %v4488, %v4487
        %v4495 = vpack.c.b16 %v4490, %v4489
        %v4496 = vpack.c.b16 %v4492, %v4491
        %v4517 = vunpack.c.l.b16 %v4461
        %v4518 = vunpack.c.l.b16 %v4462
        %v4519 = vunpack.c.l.b16 %v4463
        %v4520 = vunpack.c.l.b16 %v4464
        %v4521 = vunpack.c.l.b16 %v4465
        %v4522 = vunpack.c.l.b16 %v4466
        %v4523 = vunpack.c.l.b16 %v4467
        %v4524 = vunpack.c.l.b16 %v4468
        %v4525 = vunpack.c.l.b16 %v4469
        %v4526 = vunpack.c.l.b16 %v4470
        %v4527 = vunpack.c.l.b16 %v4471
        %v4528 = vunpack.c.l.b16 %v4472
        %v4529 = vunpack.c.l.b16 %v4473
        %v4530 = vunpack.c.l.b16 %v4474
        %v4531 = vunpack.c.l.b16 %v4475
        %v4532 = vunpack.c.l.b16 %v4476
        %v4533 = vpack.c.b16 %v4518, %v4517
        %v4534 = vpack.c.b16 %v4520, %v4519
        %v4535 = vpack.c.b16 %v4522, %v4521
        %v4536 = vpack.c.b16 %v4524, %v4523
        %v4537 = vpack.c.b16 %v4526, %v4525
        %v4538 = vpack.c.b16 %v4528, %v4527
        %v4539 = vpack.c.b16 %v4530, %v4529
        %v4540 = vpack.c.b16 %v4532, %v4531
        %4549 = vmatprep.subr.bf16.mxu0 0
        %4550 = vmatpush1.bf16.msra.mxu0 %v4533
        %4551 = vmatprep.subr.bf16.mxu0 0
        %4552 = vmatpush1.bf16.msra.mxu0 %v4534
        %4553 = vmatprep.subr.bf16.mxu0 0
        %4554 = vmatpush1.bf16.msra.mxu0 %v4535
        %4555 = vmatprep.subr.bf16.mxu0 0
        %4556 = vmatpush1.bf16.msra.mxu0 %v4536
        %4557 = vmatprep.subr.bf16.mxu0 0
        %4558 = vmatpush1.bf16.msra.mxu0 %v4537
        %4559 = vmatprep.subr.bf16.mxu0 0
        %4560 = vmatpush1.bf16.msra.mxu0 %v4538
        %4561 = vmatprep.subr.bf16.mxu0 0
        %4562 = vmatpush1.bf16.msra.mxu0 %v4539
        %4563 = vmatprep.subr.bf16.mxu0 0
        %4564 = vmatpush1.bf16.msra.mxu0 %v4540
        %4565 = vmatprep.subr.bf16.mxu0 0
        %4566 = vmatpush1.bf16.msra.mxu0 0
        %4567 = vmatprep.subr.bf16.mxu0 0
        %4568 = vmatpush1.bf16.msra.mxu0 0
        %4569 = vmatprep.subr.bf16.mxu0 0
        %4570 = vmatpush1.bf16.msra.mxu0 0
        %4571 = vmatprep.subr.bf16.mxu0 0
        %4572 = vmatpush1.bf16.msra.mxu0 0
        %4573 = vmatprep.subr.bf16.mxu0 0
        %4574 = vmatpush1.bf16.msra.mxu0 0
        %4575 = vmatprep.subr.bf16.mxu0 0
        %4576 = vmatpush1.bf16.msra.mxu0 0
        %4577 = vmatprep.subr.bf16.mxu0 0
        %4578 = vmatpush1.bf16.msra.mxu0 0
        %4579 = vmatprep.subr.bf16.mxu0 0
        %4580 = vmatpush1.bf16.msra.mxu0 0
        %4581 = vmatprep.mubr.bf16.mxu0 0
        %4582 = vmatmul.mubr.bf16.gmra.mrb[0].mxu0 %v4493
        %v4583 = vpop.f32.mrb[0].mxu0
        %v4584 = vadd.f32 0.0, %v4583
        %v4585 = vpop.f32.mrb[0].mxu0
        %v4586 = vpop.f32.mrb[0].mxu0
        %v4587 = vadd.f32 0.0, %v4586
        %v4588 = vpop.f32.mrb[0].mxu0
        %4589 = vmatprep.mubr.bf16.mxu0 0
        %4590 = vmatmul.mubr.bf16.gmra.mrb[0].mxu0 %v4494
        %v4591 = vpop.f32.mrb[0].mxu0
        %v4592 = vadd.f32 0.0, %v4591
        %v4593 = vpop.f32.mrb[0].mxu0
        %v4594 = vpop.f32.mrb[0].mxu0
        %v4595 = vadd.f32 0.0, %v4594
        %v4596 = vpop.f32.mrb[0].mxu0
        %4597 = vmatprep.mubr.bf16.mxu0 0
        %4598 = vmatmul.mubr.bf16.gmra.mrb[0].mxu0 %v4495
        %v4599 = vpop.f32.mrb[0].mxu0
        %v4600 = vadd.f32 0.0, %v4599
        %v4601 = vpop.f32.mrb[0].mxu0
        %v4602 = vpop.f32.mrb[0].mxu0
        %v4603 = vadd.f32 0.0, %v4602
        %v4604 = vpop.f32.mrb[0].mxu0
        %4605 = vmatprep.mubr.bf16.mxu0 0
        %4606 = vmatmul.mubr.bf16.gmra.mrb[0].mxu0 %v4496
        %v4607 = vpop.f32.mrb[0].mxu0
        %v4608 = vadd.f32 0.0, %v4607
        %v4609 = vpop.f32.mrb[0].mxu0
        %v4610 = vpop.f32.mrb[0].mxu0
        %v4611 = vadd.f32 0.0, %v4610
        %v4612 = vpop.f32.mrb[0].mxu0
        %4613 = vdwg.mxu0
        %v4614 = vadd.f32 %v4445, %v4584
        %v4615 = vadd.f32 %v4446, %v4587
        %v4616 = vadd.f32 %v4447, %v4592
        %v4617 = vadd.f32 %v4448, %v4595
        %v4618 = vadd.f32 %v4449, %v4600
        %v4619 = vadd.f32 %v4450, %v4603
        %v4620 = vadd.f32 %v4451, %v4608
        %v4621 = vadd.f32 %v4452, %v4611
        %v4622 = vld [vmem:[%s7] sm:$0x1]
        %v4624 = vlaneseq
        %v4625 = vshrl.u32 %v4624, 7
        %v4626 = vsub.s32 0, %v4625
        %v4627 = vrot.slane %v4622, %v4626
        %v4629 = vadd.f32 %v4614, %v4627
        %v4630 = vadd.f32 %v4615, %v4627
        %v4631 = vadd.f32 %v4616, %v4627
        %v4632 = vadd.f32 %v4617, %v4627
        %v4633 = vadd.f32 %v4618, %v4627
        %v4634 = vadd.f32 %v4619, %v4627
        %v4635 = vadd.f32 %v4620, %v4627
        %v4636 = vadd.f32 %v4621, %v4627
        %v4637 = vmax.f32 %v4629, 0.0
        %v4638 = vmax.f32 %v4630, 0.0
        %v4639 = vmax.f32 %v4631, 0.0
        %v4640 = vmax.f32 %v4632, 0.0
        %v4641 = vmax.f32 %v4633, 0.0
        %v4642 = vmax.f32 %v4634, 0.0
        %v4643 = vmax.f32 %v4635, 0.0
        %v4644 = vmax.f32 %v4636, 0.0
        %v4645 = vpack.c.bf16 %v4637, %v4637
        %v4646 = vpack.c.bf16 %v4638, %v4638
        %v4647 = vpack.c.bf16 %v4639, %v4639
        %v4648 = vpack.c.bf16 %v4640, %v4640
        %v4649 = vpack.c.bf16 %v4641, %v4641
        %v4650 = vpack.c.bf16 %v4642, %v4642
        %v4651 = vpack.c.bf16 %v4643, %v4643
        %v4652 = vpack.c.bf16 %v4644, %v4644
        %4653 = vst [vmem:[%s342] sm:$0xf] %v4645
        %4654 = vst [vmem:[%s342 + $0x4] sm:$0xf] %v4646
        %4655 = vst [vmem:[%s342 + $0x8] sm:$0xf] %v4647
        %4656 = vst [vmem:[%s342 + $0xc] sm:$0xf] %v4648
        %4657 = vst [vmem:[%s342 + $0x10] sm:$0xf] %v4649
        %4658 = vst [vmem:[%s342 + $0x14] sm:$0xf] %v4650
        %4659 = vst [vmem:[%s342 + $0x18] sm:$0xf] %v4651
        %4660 = vst [vmem:[%s342 + $0x1c] sm:$0xf] %v4652
        %s4661 = sand.u32 %s223, 1
        %s4662 = scalar_lea.sflag [#allocation5], %s4661
        %s4663 = sand.u32 %s223, 1
        %s4664 = smul.addr %s4663, 32
        %s4665 = scalar_lea.vmem [#allocation6], %s4664
        // Predicated region
        $region57: #{tpu_custom_call.1} parent=51 // pred_check
          %p4666 = pneg %p233
        $region58: #{tpu_custom_call.1} parent=51 // pred_check_branch
          %4668 = sbr.rel (%p4666) target = $region60
        $region59: #{tpu_custom_call.1} parent=51 // pred_region
          %s4669 = smul.u32 8, %s28
          %s4671 = ssub.s32 512, 512
          %4672 = vsyncadd %s4662, %s4671
          %s4673 = smul.addr %s27, 8
          %s4674 = sadd.s32 %s4669, %s4673
          %s4675 = smul.addr %s4674, 64
          %s4676 = scalar_lea.hbm %s8, %s4675
          %s4677 = sshll.u32 %s4665, 4
          %s4678 = int_to_ptr.vmem [resolvable:$true] %s4677
          %4683 = dma.vmem_to_hbm [thread:$0]  %s4678, 512, %s4676, %s4662, 64, 64, 4
        $region60: #{tpu_custom_call.1} parent=51 // pred_fallthru
          _
      $region52: #{tpu_custom_call.1} parent=5 // pred_fallthru
        _
      %p4684 = scmp.le.s32.totalorder 2, %s18
      // Predicated region
      $region61: #{tpu_custom_call.1} parent=5 // pred_check
        %p4685 = pneg %p4684
      $region62: #{tpu_custom_call.1} parent=5 // pred_check_branch
        %4687 = sbr.rel (%p4685) target = $region64
      $region63: #{tpu_custom_call.1} parent=5 // pred_region
        %s4688 = ssub.s32 %s18, 2
        // Predicated region
        $region65: #{tpu_custom_call.1} parent=63 // pred_check
          %p4689 = pneg %p239
        $region66: #{tpu_custom_call.1} parent=63 // pred_check_branch
          %4691 = sbr.rel (%p4689) target = $region68
        $region67: #{tpu_custom_call.1} parent=63 // pred_region
          %s4692 = sand.u32 %s224, 1
          %s4693 = scalar_lea.sflag [#allocation5], %s4692
          %s4694 = sand.u32 %s224, 1
          %s4695 = smul.addr %s4694, 32
          %s4696 = scalar_lea.vmem [#allocation6], %s4695
          %4697 = dma.done %s4693, 512
        $region68: #{tpu_custom_call.1} parent=63 // pred_fallthru
          _
      $region64: #{tpu_custom_call.1} parent=5 // pred_fallthru
        _
    $region6: #{tpu_custom_call.1} parent=1 // loop_footer
      %s22 = sadd.s32 1, %s18
    $region7: #{tpu_custom_call.1} parent=1 // loop_footer_branch
      %17 = sbr.rel target = $region3
    $region8: #{tpu_custom_call.1} parent=1 // loop_exit
      _
    %4698 = vsyncpa [#allocation4], 1
    %s4699 = scalar_lea.sflag [#allocation4], 1
    %4700 = vsyncpa %s4699, 1
    %4701 = vsyncpa [#allocation5], 1
    %s4702 = scalar_lea.sflag [#allocation5], 1
    %4703 = vsyncpa %s4702, 1

</llo_original>
